<compile_context>
chip_gen: v6e
topology: v6e:2x2x1
jax: 0.10.0
libtpu: 0.0.40
codegen_flags: <defaults>
</compile_context>

<pallas_src>
import functools

import jax
import jax.numpy as jnp
from jax import lax
from jax.experimental import pallas as pl
from jax.experimental.pallas import tpu as pltpu


def _silu(v):
    return v * (1.0 / (1.0 + jnp.exp(-v)))


def _softplus(v):
    # matches torch.nn.functional.softplus (beta=1, threshold=20)
    return jnp.where(v > 20.0, v, jnp.log1p(jnp.exp(jnp.minimum(v, 20.0))))


def _mamba_block_kernel(
    # inputs
    x_ref, w_in_ref, w_conv_ref, b_conv_ref, w_xp_ref, w_dt_ref, b_dt_ref,
    A_negT_ref, D_ref, w_out_ref,
    # output
    o_ref,
    # scratch
    u_ref, delta_ref, y_ref, res_ref, bc_ref, dA_ref, state_ref, xe_ref,
    *, Lt, d_inner, dt_rank, d_ff, d_conv, Lc, dit,
):
    assert Lt % Lc == 0 and Lc % 8 == 0 and d_inner % dit == 0
    lt = pl.program_id(1)

    # Reset the sequence-carried state (scan state + conv history) at the
    # first L-tile of every batch element.
    @pl.when(lt == 0)
    def _():
        state_ref[...] = jnp.zeros_like(state_ref)
        xe_ref[...] = jnp.zeros_like(xe_ref)

    # ---- in_proj: one fused bf16 MXU matmul, split into conv/gate branches --
    xb = x_ref[...].astype(jnp.bfloat16)                        # (Lt, d_model)
    xr = jnp.dot(xb, w_in_ref[...], preferred_element_type=jnp.float32)
    xc = xr[:, :d_inner]                                        # (Lt, d_inner)
    res_ref[...] = _silu(xr[:, d_inner:])                       # silu(res)

    # ---- causal depthwise conv1d -------------------------------------------
    # xe_ref = [history (d_conv-1 rows of the previous tile's xc) ; xc]; taps
    # are accumulated value-side and u is stored exactly once.
    xe_ref[d_conv - 1:, :] = xc
    acc = xc * w_conv_ref[d_conv - 1:d_conv, :] + b_conv_ref[...]
    for k in range(d_conv - 1):                                 # static unroll
        acc = acc + xe_ref[k:k + Lt, :] * w_conv_ref[k:k + 1, :]
    u_ref[...] = _silu(acc)                                     # (Lt, d_inner)
    if d_conv > 1:
        xe_ref[:d_conv - 1, :] = xe_ref[Lt:, :]                 # carry history

    # ---- x_proj (fused dt/B/C) + dt_proj + softplus, bf16 on the MXU -------
    x_dbl = jnp.dot(u_ref[...].astype(jnp.bfloat16), w_xp_ref[...],
                    preferred_element_type=jnp.float32)   # (Lt, dt_rank+2*d_ff)
    dt = jnp.dot(x_dbl[:, :dt_rank].astype(jnp.bfloat16), w_dt_ref[...],
                 preferred_element_type=jnp.float32)
    delta_ref[...] = _softplus(dt + b_dt_ref[...])              # (Lt, d_inner)
    bc_ref[...] = x_dbl[:, dt_rank:]                            # (Lt, 2*d_ff)

    # ---- selective scan: d_inner tiles (vreg pressure) x L chunks ----------
    n_chunks = Lt // Lc
    n_di = d_inner // dit

    for di in range(n_di):                                      # static
        lo = di * dit
        hi = lo + dit
        A_t = A_negT_ref[:, lo:hi]                              # (d_ff, dit)

        def chunk_body(ci, state, lo=lo, hi=hi, A_t=A_t):
            off = pl.multiple_of(ci * Lc, Lc)
            delta_c = delta_ref[pl.ds(off, Lc), lo:hi]          # (Lc, dit)
            du_c = delta_c * u_ref[pl.ds(off, Lc), lo:hi]       # delta * u
            # Batched per-chunk exp(delta*A) (EUP) into VMEM scratch.
            dA_ref[...] = jnp.exp(delta_c[:, None, :] * A_t[None, :, :])
            # One small relayout per chunk puts B/C in (d_ff, Lc) column form
            # so the per-step broadcasts are pure lane broadcasts.
            bcT_c = bc_ref[pl.ds(off, Lc), :].T                 # (2*d_ff, Lc)

            rows = []
            for i in range(Lc):                                 # static unroll
                b_col = bcT_c[:d_ff, i:i + 1]                   # (d_ff, 1)
                c_col = bcT_c[d_ff:, i:i + 1]                   # (d_ff, 1)
                # dBu fused into the step: no (Lc, d_ff, dit) store/reload.
                state = dA_ref[i] * state + b_col * du_c[i:i + 1, :]
                rows.append(jnp.sum(state * c_col, axis=0, keepdims=True))
                if len(rows) == 8:                              # grouped store
                    start = pl.multiple_of(off + (i + 1 - 8), 8)
                    y_ref[pl.ds(start, 8), lo:hi] = jnp.concatenate(rows, axis=0)
                    rows = []
            return state

        state = lax.fori_loop(0, n_chunks, chunk_body, state_ref[:, lo:hi])
        state_ref[:, lo:hi] = state                             # carry across tiles

    # ---- D skip, gate with silu(res), out_proj (bf16 MXU) ------------------
    y = y_ref[...] + u_ref[...] * D_ref[...]
    yg = (y * res_ref[...]).astype(jnp.bfloat16)
    o_ref[...] = jnp.dot(yg, w_out_ref[...],
                         preferred_element_type=jnp.float32).astype(o_ref.dtype)


def _round_up(x, m):
    return -(-x // m) * m


def _pick_l_tiles(L, l_chunk, l_tile):
    """Chunk (Lc, multiple of 8) and L-tile (Lt, multiple of Lc) sizes."""
    Lc = max(8, (l_chunk // 8) * 8)
    if L < Lc:
        Lc = _round_up(L, 8)
    Lt = min(max(l_tile, Lc), _round_up(L, Lc))
    Lt = max(Lc, (Lt // Lc) * Lc)
    L_pad = _round_up(L, Lt)
    return Lc, Lt, L_pad


def _pick_inner_tile(d_inner, target):
    """Largest divisor of d_inner <= target, preferring lane-aligned tiles."""
    if d_inner <= target:
        return d_inner
    best = d_inner
    for t in range(min(target, d_inner), 0, -1):
        if d_inner % t == 0:
            if t % 128 == 0:
                return t
            if best == d_inner:
                best = t
    return best


def mamba_block(x, params, *, d_inner, dt_rank, d_ff, d_conv,
                l_chunk=16, l_tile=128, d_inner_tile=512):
    """Pallas TPU forward of MambaSimple.MambaBlock."""
    B, L, d_model = x.shape
    (w_in, w_conv, b_conv, w_xp, w_dt, b_dt, A_log_T, D_vec, w_out) = params

    Lc, Lt, L_pad = _pick_l_tiles(L, l_chunk, l_tile)
    dit = _pick_inner_tile(d_inner, d_inner_tile)
    n_lt = L_pad // Lt

    x = x.astype(jnp.float32)
    if L_pad != L:
        # Zero-pad the tail; the causal scan never feeds padded steps back
        # into the visible outputs, which are sliced off below.
        x = jnp.pad(x, ((0, 0), (0, L_pad - L), (0, 0)))

    # bf16 weights for the MXU (halves weight DMA/VMEM); f32 accumulation.
    w_in16 = w_in.astype(jnp.bfloat16)
    w_xp16 = w_xp.astype(jnp.bfloat16)
    w_dt16 = w_dt.astype(jnp.bfloat16)
    w_out16 = w_out.astype(jnp.bfloat16)
    # A = -exp(A_log) is a pure function of the parameter; fold it once here.
    A_negT = -jnp.exp(A_log_T.astype(jnp.float32))

    kernel = functools.partial(
        _mamba_block_kernel, Lt=Lt, d_inner=d_inner, dt_rank=dt_rank,
        d_ff=d_ff, d_conv=d_conv, Lc=Lc, dit=dit)

    scratch_shapes = [
        pltpu.VMEM((Lt, d_inner), jnp.float32),            # u (post conv+silu)
        pltpu.VMEM((Lt, d_inner), jnp.float32),            # delta
        pltpu.VMEM((Lt, d_inner), jnp.float32),            # y (scan output)
        pltpu.VMEM((Lt, d_inner), jnp.float32),            # silu(res)
        pltpu.VMEM((Lt, 2 * d_ff), jnp.float32),           # [B | C]
        pltpu.VMEM((Lc, d_ff, dit), jnp.float32),          # per-chunk exp(dA)
        pltpu.VMEM((d_ff, d_inner), jnp.float32),          # scan state (carried)
        pltpu.VMEM((max(d_conv - 1, 1) + Lt, d_inner), jnp.float32),  # conv ext
    ]

    # VMEM budget: estimate actual residency and clamp to the chip capacity.
    def _pad2d(r, c, itemsize):
        return _round_up(r, 8) * _round_up(c, 128) * itemsize

    scratch_bytes = (4 * _pad2d(Lt, d_inner, 4) + _pad2d(Lt, 2 * d_ff, 4)
                     + Lc * _pad2d(d_ff, dit, 4) + _pad2d(d_ff, d_inner, 4)
                     + _pad2d(max(d_conv - 1, 1) + Lt, d_inner, 4))
    weight_bytes = (_pad2d(d_model, 2 * d_inner, 2)
                    + _pad2d(d_inner, dt_rank + 2 * d_ff, 2)
                    + _pad2d(dt_rank, d_inner, 2)
                    + _pad2d(d_inner, d_model, 2)
                    + _pad2d(d_conv, d_inner, 4)
                    + 3 * _pad2d(1, d_inner, 4)
                    + _pad2d(d_ff, d_inner, 4))
    io_bytes = 2 * 2 * _pad2d(Lt, d_model, 4)              # x + out, 2 buffers
    est = scratch_bytes + 2 * weight_bytes + io_bytes
    try:
        cap = int(pltpu.get_tpu_info().vmem_capacity_bytes * 0.85)
    except Exception:
        cap = 54 * 1024 * 1024
    vmem_limit = int(min(cap, max(est + (8 << 20), 32 << 20)))

    def build(single_buffer_weights):
        def wspec(shape):
            n = len(shape)
            imap = lambda b, t, n=n: (0,) * n
            if single_buffer_weights:
                # Constant-index weight blocks don't need double buffering.
                return pl.BlockSpec(shape, imap, pipeline_mode=pl.Buffered(1))
            return pl.BlockSpec(shape, imap)

        grid_spec = pltpu.PrefetchScalarGridSpec(
            num_scalar_prefetch=0,
            grid=(B, n_lt),
            in_specs=[
                pl.BlockSpec((None, Lt, d_model), lambda b, t: (b, t, 0)),  # x
                wspec((d_model, 2 * d_inner)),          # in_proj (fused x/res)
                wspec((d_conv, d_inner)),               # depthwise conv weight
                wspec((1, d_inner)),                    # conv bias
                wspec((d_inner, dt_rank + 2 * d_ff)),   # x_proj (fused dt/B/C)
                wspec((dt_rank, d_inner)),              # dt_proj weight
                wspec((1, d_inner)),                    # dt_proj bias
                wspec((d_ff, d_inner)),                 # -exp(A_log), transposed
                wspec((1, d_inner)),                    # D
                wspec((d_inner, d_model)),              # out_proj
            ],
            out_specs=pl.BlockSpec((None, Lt, d_model), lambda b, t: (b, t, 0)),
            scratch_shapes=scratch_shapes,
        )
        return pl.pallas_call(
            kernel,
            out_shape=jax.ShapeDtypeStruct((B, L_pad, d_model), jnp.float32),
            grid_spec=grid_spec,
            compiler_params=pltpu.CompilerParams(
                dimension_semantics=("parallel", "arbitrary"),
                vmem_limit_bytes=vmem_limit,
            ),
        )

    args = (x, w_in16, w_conv.astype(jnp.float32), b_conv.astype(jnp.float32),
            w_xp16, w_dt16, b_dt.astype(jnp.float32), A_negT,
            D_vec.astype(jnp.float32), w_out16)
    try:
        out = build(True)(*args)
    except Exception:
        # Fallback if single-buffered (pl.Buffered(1)) weight specs are rejected.
        out = build(False)(*args)

    if L_pad != L:
        out = out[:, :L, :]
    return out


def mamba_block_ref(x, params, *, d_inner, dt_rank, d_ff, d_conv):
    """Pure-JAX f32 reference mirroring the PyTorch MambaBlock forward."""
    (w_in, w_conv, b_conv, w_xp, w_dt, b_dt, A_log_T, D_vec, w_out) = params
    B, L, d_model = x.shape
    xr = x @ w_in
    xc, res = xr[..., :d_inner], xr[..., d_inner:]
    xpad = jnp.pad(xc, ((0, 0), (d_conv - 1, 0), (0, 0)))
    conv = b_conv[0]
    for k in range(d_conv):
        conv = conv + w_conv[k][None, None, :] * xpad[:, k:k + L, :]
    u = conv * jax.nn.sigmoid(conv)
    x_dbl = u @ w_xp
    delta_r = x_dbl[..., :dt_rank]
    Bm = x_dbl[..., dt_rank:dt_rank + d_ff]
    Cm = x_dbl[..., dt_rank + d_ff:]
    delta = _softplus(delta_r @ w_dt + b_dt[0])
    A = -jnp.exp(A_log_T.T)                                   # (d_inner, d_ff)
    dA = jnp.exp(jnp.einsum('bld,dn->bldn', delta, A))
    dBu = jnp.einsum('bld,bln,bld->bldn', delta, Bm, u)

    def step(s, inp):
        dA_l, dBu_l, C_l = inp
        s = dA_l * s + dBu_l
        y = jnp.einsum('bdn,bn->bd', s, C_l)
        return s, y

    s0 = jnp.zeros((B, d_inner, d_ff), jnp.float32)
    _, ys = lax.scan(step, s0, (dA.transpose(1, 0, 2, 3),
                                dBu.transpose(1, 0, 2, 3),
                                Cm.transpose(1, 0, 2)))
    y = ys.transpose(1, 0, 2) + u * D_vec[0]
    y = y * (res * jax.nn.sigmoid(res))
    return y @ w_out


if __name__ == "__main__":
    d_model, d_inner, dt_rank, d_ff, d_conv = 32, 64, 4, 16, 4

    key = jax.random.PRNGKey(0)
    ks = jax.random.split(key, 8)

    w_in = 0.1 * jax.random.normal(ks[1], (d_model, 2 * d_inner), jnp.float32)
    w_conv = 0.3 * jax.random.normal(ks[2], (d_conv, d_inner), jnp.float32)
    b_conv = 0.1 * jax.random.normal(ks[3], (1, d_inner), jnp.float32)
    w_xp = 0.1 * jax.random.normal(ks[4], (d_inner, dt_rank + 2 * d_ff),
                                   jnp.float32)
    w_dt = 0.1 * jax.random.normal(ks[5], (dt_rank, d_inner), jnp.float32)
    b_dt = 0.1 * jnp.ones((1, d_inner), jnp.float32)
    A_log_T = jnp.log(jnp.broadcast_to(
        jnp.arange(1, d_ff + 1, dtype=jnp.float32)[:, None], (d_ff, d_inner)))
    D_vec = jnp.ones((1, d_inner), jnp.float32)
    w_out = 0.1 * jax.random.normal(ks[6], (d_inner, d_model), jnp.float32)
    params = (w_in, w_conv, b_conv, w_xp, w_dt, b_dt, A_log_T, D_vec, w_out)

    def check(x, **kw):
        out = mamba_block(x, params, d_inner=d_inner, dt_rank=dt_rank,
                          d_ff=d_ff, d_conv=d_conv, **kw)
        out = jax.block_until_ready(out)
        ref = mamba_block_ref(x, params, d_inner=d_inner, dt_rank=dt_rank,
                              d_ff=d_ff, d_conv=d_conv)
        assert out.shape == x.shape[:2] + (d_model,), out.shape
        err = float(jnp.max(jnp.abs(out - ref)))
        # bf16 MXU inputs (f32 accumulation) vs. the all-f32 reference.
        assert jnp.allclose(out, ref, rtol=2e-2, atol=2e-2), err

    # Single L-tile / single d_inner-tile path.
    x1 = jax.random.normal(ks[0], (2, 8, d_model), jnp.float32)
    check(x1)

    # Multi L-tile path (L padded 40 -> 48): exercises the cross-tile
    # scan-state / conv-history carry, multiple chunks and d_inner tiling.
    x2 = jax.random.normal(ks[7], (2, 40, d_model), jnp.float32)
    check(x2, l_chunk=8, l_tile=16, d_inner_tile=32)

    print("KERNEL_OK")
</pallas_src>

<mosaic_0001>
module attributes {stable_mosaic.version = 11 : i64} {
  func.func @_mamba_block_kernel(%arg0: i32, %arg1: i32, %arg2: memref<1x8x32xf32, #tpu.memory_space<vmem>>, %arg3: memref<32x128xbf16, #tpu.memory_space<vmem>>, %arg4: memref<4x64xf32, #tpu.memory_space<vmem>>, %arg5: memref<1x64xf32, #tpu.memory_space<vmem>>, %arg6: memref<64x36xbf16, #tpu.memory_space<vmem>>, %arg7: memref<4x64xbf16, #tpu.memory_space<vmem>>, %arg8: memref<1x64xf32, #tpu.memory_space<vmem>>, %arg9: memref<16x64xf32, #tpu.memory_space<vmem>>, %arg10: memref<1x64xf32, #tpu.memory_space<vmem>>, %arg11: memref<64x32xbf16, #tpu.memory_space<vmem>>, %arg12: memref<1x8x32xf32, #tpu.memory_space<vmem>>, %arg13: memref<8x64xf32, #tpu.memory_space<vmem>>, %arg14: memref<8x64xf32, #tpu.memory_space<vmem>>, %arg15: memref<8x64xf32, #tpu.memory_space<vmem>>, %arg16: memref<8x64xf32, #tpu.memory_space<vmem>>, %arg17: memref<8x32xf32, #tpu.memory_space<vmem>>, %arg18: memref<8x16x64xf32, #tpu.memory_space<vmem>>, %arg19: memref<16x64xf32, #tpu.memory_space<vmem>>, %arg20: memref<11x64xf32, #tpu.memory_space<vmem>>) attributes {dimension_semantics = [#tpu.dimension_semantics<parallel>, #tpu.dimension_semantics<arbitrary>], iteration_bounds = array<i64: 2, 1>, scalar_prefetch = 0 : i64, scratch_operands = 8 : i64, tpu.core_type = #tpu.core_type<tc>, window_params = [{transform_indices = @transform_0, window_bounds = array<i64: 1, 8, 32>}, {pipeline_mode = #tpu.pipeline_mode<synchronous>, transform_indices = @transform_1, window_bounds = array<i64: 32, 128>}, {pipeline_mode = #tpu.pipeline_mode<synchronous>, transform_indices = @transform_2, window_bounds = array<i64: 4, 64>}, {pipeline_mode = #tpu.pipeline_mode<synchronous>, transform_indices = @transform_3, window_bounds = array<i64: 1, 64>}, {pipeline_mode = #tpu.pipeline_mode<synchronous>, transform_indices = @transform_4, window_bounds = array<i64: 64, 36>}, {pipeline_mode = #tpu.pipeline_mode<synchronous>, transform_indices = @transform_5, window_bounds = array<i64: 4, 64>}, {pipeline_mode = #tpu.pipeline_mode<synchronous>, transform_indices = @transform_6, window_bounds = array<i64: 1, 64>}, {pipeline_mode = #tpu.pipeline_mode<synchronous>, transform_indices = @transform_7, window_bounds = array<i64: 16, 64>}, {pipeline_mode = #tpu.pipeline_mode<synchronous>, transform_indices = @transform_8, window_bounds = array<i64: 1, 64>}, {pipeline_mode = #tpu.pipeline_mode<synchronous>, transform_indices = @transform_9, window_bounds = array<i64: 64, 32>}, {transform_indices = @transform_10, window_bounds = array<i64: 1, 8, 32>}]} {
    %c0_i32 = arith.constant 0 : i32
    %0 = arith.cmpi eq, %arg1, %c0_i32 : i32
    %1 = arith.extui %0 : i1 to i32
    %c0_i32_0 = arith.constant 0 : i32
    %2 = arith.cmpi ne, %1, %c0_i32_0 : i32
    scf.if %2 {
      %cst_106 = arith.constant 0.000000e+00 : f32
      %224 = vector.broadcast %cst_106 : f32 to vector<16x64xf32>
      %c0_107 = arith.constant 0 : index
      %c0_108 = arith.constant 0 : index
      %225 = vector.load %arg19[%c0_107, %c0_108] : memref<16x64xf32, #tpu.memory_space<vmem>>, vector<16x64xf32>
      tpu.vector_store %arg19[%c0_107, %c0_108], %224 {strides = array<i32>} : memref<16x64xf32, #tpu.memory_space<vmem>>, vector<16x64xf32>,
      %cst_109 = arith.constant 0.000000e+00 : f32
      %226 = vector.broadcast %cst_109 : f32 to vector<11x64xf32>
      %c0_110 = arith.constant 0 : index
      %c0_111 = arith.constant 0 : index
      %227 = vector.load %arg20[%c0_110, %c0_111] : memref<11x64xf32, #tpu.memory_space<vmem>>, vector<11x64xf32>
      tpu.vector_store %arg20[%c0_110, %c0_111], %226 {strides = array<i32>} : memref<11x64xf32, #tpu.memory_space<vmem>>, vector<11x64xf32>,
    } else {
    }
    %c0 = arith.constant 0 : index
    %c0_1 = arith.constant 0 : index
    %c0_2 = arith.constant 0 : index
    %3 = vector.load %arg2[%c0, %c0_1, %c0_2] : memref<1x8x32xf32, #tpu.memory_space<vmem>>, vector<1x8x32xf32>
    %4 = vector.shape_cast %3 : vector<1x8x32xf32> to vector<8x32xf32>
    %5 = arith.truncf %4 : vector<8x32xf32> to vector<8x32xbf16>
    %c0_3 = arith.constant 0 : index
    %c0_4 = arith.constant 0 : index
    %6 = vector.load %arg3[%c0_3, %c0_4] : memref<32x128xbf16, #tpu.memory_space<vmem>>, vector<32x128xbf16>
    %cst = arith.constant dense<0.000000e+00> : vector<8x128xf32>
    %7 = tpu.matmul %5, %6, %cst {dimension_numbers = #tpu.dot_dimension_numbers<[1], [0], [0], [1], [0, 0, 1, 1], [], []>} : vector<8x32xbf16>, vector<32x128xbf16>, vector<8x128xf32> -> vector<8x128xf32>
    %8 = vector.extract_strided_slice %7 {offsets = [0, 0], sizes = [8, 64], strides = [1, 1]} : vector<8x128xf32> to vector<8x64xf32>
    %9 = vector.extract_strided_slice %7 {offsets = [0, 64], sizes = [8, 64], strides = [1, 1]} : vector<8x128xf32> to vector<8x64xf32>
    %cst_5 = arith.constant 0.000000e+00 : f32
    %10 = vector.broadcast %cst_5 : f32 to vector<8x64xf32>
    %11 = arith.subf %10, %9 : vector<8x64xf32>
    %12 = math.exp %11 : vector<8x64xf32>
    %cst_6 = arith.constant 1.000000e+00 : f32
    %13 = vector.broadcast %cst_6 : f32 to vector<8x64xf32>
    %14 = arith.addf %13, %12 : vector<8x64xf32>
    %cst_7 = arith.constant 1.000000e+00 : f32
    %15 = vector.broadcast %cst_7 : f32 to vector<8x64xf32>
    %16 = arith.divf %15, %14 : vector<8x64xf32>
    %17 = arith.mulf %9, %16 : vector<8x64xf32>
    %c0_8 = arith.constant 0 : index
    %c0_9 = arith.constant 0 : index
    %18 = vector.load %arg16[%c0_8, %c0_9] : memref<8x64xf32, #tpu.memory_space<vmem>>, vector<8x64xf32>
    tpu.vector_store %arg16[%c0_8, %c0_9], %17 {strides = array<i32>} : memref<8x64xf32, #tpu.memory_space<vmem>>, vector<8x64xf32>,
    %c3 = arith.constant 3 : index
    %c0_10 = arith.constant 0 : index
    %19 = vector.load %arg20[%c3, %c0_10] : memref<11x64xf32, #tpu.memory_space<vmem>>, vector<8x64xf32>
    tpu.vector_store %arg20[%c3, %c0_10], %8 {strides = array<i32>} : memref<11x64xf32, #tpu.memory_space<vmem>>, vector<8x64xf32>,
    %c3_11 = arith.constant 3 : index
    %c0_12 = arith.constant 0 : index
    %20 = vector.load %arg4[%c3_11, %c0_12] : memref<4x64xf32, #tpu.memory_space<vmem>>, vector<1x64xf32>
    %21 = vector.broadcast %20 : vector<1x64xf32> to vector<8x64xf32>
    %22 = arith.mulf %8, %21 : vector<8x64xf32>
    %c0_13 = arith.constant 0 : index
    %c0_14 = arith.constant 0 : index
    %23 = vector.load %arg5[%c0_13, %c0_14] : memref<1x64xf32, #tpu.memory_space<vmem>>, vector<1x64xf32>
    %24 = vector.broadcast %23 : vector<1x64xf32> to vector<8x64xf32>
    %25 = arith.addf %22, %24 : vector<8x64xf32>
    %c0_15 = arith.constant 0 : index
    %c0_16 = arith.constant 0 : index
    %26 = vector.load %arg20[%c0_15, %c0_16] : memref<11x64xf32, #tpu.memory_space<vmem>>, vector<8x64xf32>
    %c0_17 = arith.constant 0 : index
    %c0_18 = arith.constant 0 : index
    %27 = vector.load %arg4[%c0_17, %c0_18] : memref<4x64xf32, #tpu.memory_space<vmem>>, vector<1x64xf32>
    %28 = vector.broadcast %27 : vector<1x64xf32> to vector<8x64xf32>
    %29 = arith.mulf %26, %28 : vector<8x64xf32>
    %30 = arith.addf %25, %29 : vector<8x64xf32>
    %c1 = arith.constant 1 : index
    %c0_19 = arith.constant 0 : index
    %31 = vector.load %arg20[%c1, %c0_19] : memref<11x64xf32, #tpu.memory_space<vmem>>, vector<8x64xf32>
    %c1_20 = arith.constant 1 : index
    %c0_21 = arith.constant 0 : index
    %32 = vector.load %arg4[%c1_20, %c0_21] : memref<4x64xf32, #tpu.memory_space<vmem>>, vector<1x64xf32>
    %33 = vector.broadcast %32 : vector<1x64xf32> to vector<8x64xf32>
    %34 = arith.mulf %31, %33 : vector<8x64xf32>
    %35 = arith.addf %30, %34 : vector<8x64xf32>
    %c2 = arith.constant 2 : index
    %c0_22 = arith.constant 0 : index
    %36 = vector.load %arg20[%c2, %c0_22] : memref<11x64xf32, #tpu.memory_space<vmem>>, vector<8x64xf32>
    %c2_23 = arith.constant 2 : index
    %c0_24 = arith.constant 0 : index
    %37 = vector.load %arg4[%c2_23, %c0_24] : memref<4x64xf32, #tpu.memory_space<vmem>>, vector<1x64xf32>
    %38 = vector.broadcast %37 : vector<1x64xf32> to vector<8x64xf32>
    %39 = arith.mulf %36, %38 : vector<8x64xf32>
    %40 = arith.addf %35, %39 : vector<8x64xf32>
    %cst_25 = arith.constant 0.000000e+00 : f32
    %41 = vector.broadcast %cst_25 : f32 to vector<8x64xf32>
    %42 = arith.subf %41, %40 : vector<8x64xf32>
    %43 = math.exp %42 : vector<8x64xf32>
    %cst_26 = arith.constant 1.000000e+00 : f32
    %44 = vector.broadcast %cst_26 : f32 to vector<8x64xf32>
    %45 = arith.addf %44, %43 : vector<8x64xf32>
    %cst_27 = arith.constant 1.000000e+00 : f32
    %46 = vector.broadcast %cst_27 : f32 to vector<8x64xf32>
    %47 = arith.divf %46, %45 : vector<8x64xf32>
    %48 = arith.mulf %40, %47 : vector<8x64xf32>
    %c0_28 = arith.constant 0 : index
    %c0_29 = arith.constant 0 : index
    %49 = vector.load %arg13[%c0_28, %c0_29] : memref<8x64xf32, #tpu.memory_space<vmem>>, vector<8x64xf32>
    tpu.vector_store %arg13[%c0_28, %c0_29], %48 {strides = array<i32>} : memref<8x64xf32, #tpu.memory_space<vmem>>, vector<8x64xf32>,
    %c8 = arith.constant 8 : index
    %c0_30 = arith.constant 0 : index
    %50 = vector.load %arg20[%c8, %c0_30] : memref<11x64xf32, #tpu.memory_space<vmem>>, vector<3x64xf32>
    %c0_31 = arith.constant 0 : index
    %c0_32 = arith.constant 0 : index
    %51 = vector.load %arg20[%c0_31, %c0_32] : memref<11x64xf32, #tpu.memory_space<vmem>>, vector<3x64xf32>
    tpu.vector_store %arg20[%c0_31, %c0_32], %50 {strides = array<i32>} : memref<11x64xf32, #tpu.memory_space<vmem>>, vector<3x64xf32>,
    %c0_33 = arith.constant 0 : index
    %c0_34 = arith.constant 0 : index
    %52 = vector.load %arg13[%c0_33, %c0_34] : memref<8x64xf32, #tpu.memory_space<vmem>>, vector<8x64xf32>
    %53 = arith.truncf %52 : vector<8x64xf32> to vector<8x64xbf16>
    %c0_35 = arith.constant 0 : index
    %c0_36 = arith.constant 0 : index
    %54 = vector.load %arg6[%c0_35, %c0_36] : memref<64x36xbf16, #tpu.memory_space<vmem>>, vector<64x36xbf16>
    %cst_37 = arith.constant dense<0.000000e+00> : vector<8x36xf32>
    %55 = tpu.matmul %53, %54, %cst_37 {dimension_numbers = #tpu.dot_dimension_numbers<[1], [0], [0], [1], [0, 0, 1, 1], [], []>} : vector<8x64xbf16>, vector<64x36xbf16>, vector<8x36xf32> -> vector<8x36xf32>
    %56 = vector.extract_strided_slice %55 {offsets = [0, 0], sizes = [8, 4], strides = [1, 1]} : vector<8x36xf32> to vector<8x4xf32>
    %57 = arith.truncf %56 : vector<8x4xf32> to vector<8x4xbf16>
    %c0_38 = arith.constant 0 : index
    %c0_39 = arith.constant 0 : index
    %58 = vector.load %arg7[%c0_38, %c0_39] : memref<4x64xbf16, #tpu.memory_space<vmem>>, vector<4x64xbf16>
    %cst_40 = arith.constant dense<0.000000e+00> : vector<8x64xf32>
    %59 = tpu.matmul %57, %58, %cst_40 {dimension_numbers = #tpu.dot_dimension_numbers<[1], [0], [0], [1], [0, 0, 1, 1], [], []>} : vector<8x4xbf16>, vector<4x64xbf16>, vector<8x64xf32> -> vector<8x64xf32>
    %c0_41 = arith.constant 0 : index
    %c0_42 = arith.constant 0 : index
    %60 = vector.load %arg8[%c0_41, %c0_42] : memref<1x64xf32, #tpu.memory_space<vmem>>, vector<1x64xf32>
    %61 = vector.broadcast %60 : vector<1x64xf32> to vector<8x64xf32>
    %62 = arith.addf %59, %61 : vector<8x64xf32>
    %cst_43 = arith.constant 2.000000e+01 : f32
    %63 = vector.broadcast %cst_43 : f32 to vector<8x64xf32>
    %64 = arith.cmpf ogt, %62, %63 : vector<8x64xf32>
    %cst_44 = arith.constant 2.000000e+01 : f32
    %65 = vector.broadcast %cst_44 : f32 to vector<8x64xf32>
    %66 = arith.minimumf %62, %65 : vector<8x64xf32>
    %67 = math.exp %66 : vector<8x64xf32>
    %68 = math.log1p %67 : vector<8x64xf32>
    %69 = arith.select %64, %62, %68 : vector<8x64xi1>, vector<8x64xf32>
    %c0_45 = arith.constant 0 : index
    %c0_46 = arith.constant 0 : index
    %70 = vector.load %arg14[%c0_45, %c0_46] : memref<8x64xf32, #tpu.memory_space<vmem>>, vector<8x64xf32>
    tpu.vector_store %arg14[%c0_45, %c0_46], %69 {strides = array<i32>} : memref<8x64xf32, #tpu.memory_space<vmem>>, vector<8x64xf32>,
    %71 = vector.extract_strided_slice %55 {offsets = [0, 4], sizes = [8, 32], strides = [1, 1]} : vector<8x36xf32> to vector<8x32xf32>
    %c0_47 = arith.constant 0 : index
    %c0_48 = arith.constant 0 : index
    %72 = vector.load %arg17[%c0_47, %c0_48] : memref<8x32xf32, #tpu.memory_space<vmem>>, vector<8x32xf32>
    tpu.vector_store %arg17[%c0_47, %c0_48], %71 {strides = array<i32>} : memref<8x32xf32, #tpu.memory_space<vmem>>, vector<8x32xf32>,
    %c0_49 = arith.constant 0 : index
    %c0_50 = arith.constant 0 : index
    %73 = vector.load %arg9[%c0_49, %c0_50] : memref<16x64xf32, #tpu.memory_space<vmem>>, vector<16x64xf32>
    %c0_51 = arith.constant 0 : index
    %c0_52 = arith.constant 0 : index
    %74 = vector.load %arg19[%c0_51, %c0_52] : memref<16x64xf32, #tpu.memory_space<vmem>>, vector<16x64xf32>
    %c0_i32_53 = arith.constant 0 : i32
    %c8_i32 = arith.constant 8 : i32
    %75 = arith.muli %c0_i32_53, %c8_i32 : i32
    %76 = tpu.assume_multiple %75, 8 : i32
    %77 = arith.index_cast %76 : i32 to index
    %c0_54 = arith.constant 0 : index
    %78 = vector.load %arg14[%77, %c0_54] : memref<8x64xf32, #tpu.memory_space<vmem>>, vector<8x64xf32>
    %79 = arith.index_cast %76 : i32 to index
    %c0_55 = arith.constant 0 : index
    %80 = vector.load %arg13[%79, %c0_55] : memref<8x64xf32, #tpu.memory_space<vmem>>, vector<8x64xf32>
    %81 = arith.mulf %78, %80 : vector<8x64xf32>
    %82 = vector.shape_cast %78 : vector<8x64xf32> to vector<8x1x64xf32>
    %83 = vector.shape_cast %73 : vector<16x64xf32> to vector<1x16x64xf32>
    %84 = vector.broadcast %82 : vector<8x1x64xf32> to vector<8x16x64xf32>
    %85 = vector.broadcast %83 : vector<1x16x64xf32> to vector<8x16x64xf32>
    %86 = arith.mulf %84, %85 : vector<8x16x64xf32>
    %87 = math.exp %86 : vector<8x16x64xf32>
    %c0_56 = arith.constant 0 : index
    %c0_57 = arith.constant 0 : index
    %c0_58 = arith.constant 0 : index
    %88 = vector.load %arg18[%c0_56, %c0_57, %c0_58] : memref<8x16x64xf32, #tpu.memory_space<vmem>>, vector<8x16x64xf32>
    tpu.vector_store %arg18[%c0_56, %c0_57, %c0_58], %87 {strides = array<i32>} : memref<8x16x64xf32, #tpu.memory_space<vmem>>, vector<8x16x64xf32>,
    %89 = arith.index_cast %76 : i32 to index
    %c0_59 = arith.constant 0 : index
    %90 = vector.load %arg17[%89, %c0_59] : memref<8x32xf32, #tpu.memory_space<vmem>>, vector<8x32xf32>
    %91 = tpu.transpose %90, [1, 0] : vector<8x32xf32> -> vector<32x8xf32>
    %92 = vector.extract_strided_slice %91 {offsets = [0, 0], sizes = [16, 1], strides = [1, 1]} : vector<32x8xf32> to vector<16x1xf32>
    %93 = vector.extract_strided_slice %91 {offsets = [16, 0], sizes = [16, 1], strides = [1, 1]} : vector<32x8xf32> to vector<16x1xf32>
    %c0_60 = arith.constant 0 : index
    %c0_61 = arith.constant 0 : index
    %c0_62 = arith.constant 0 : index
    %94 = vector.load %arg18[%c0_60, %c0_61, %c0_62] : memref<8x16x64xf32, #tpu.memory_space<vmem>>, vector<1x16x64xf32>
    %95 = vector.shape_cast %94 : vector<1x16x64xf32> to vector<16x64xf32>
    %96 = arith.mulf %95, %74 : vector<16x64xf32>
    %97 = vector.extract_strided_slice %81 {offsets = [0, 0], sizes = [1, 64], strides = [1, 1]} : vector<8x64xf32> to vector<1x64xf32>
    %98 = vector.broadcast %92 : vector<16x1xf32> to vector<16x64xf32>
    %99 = vector.broadcast %97 : vector<1x64xf32> to vector<16x64xf32>
    %100 = arith.mulf %98, %99 : vector<16x64xf32>
    %101 = arith.addf %96, %100 : vector<16x64xf32>
    %102 = vector.broadcast %93 : vector<16x1xf32> to vector<16x64xf32>
    %103 = arith.mulf %101, %102 : vector<16x64xf32>
    %cst_63 = arith.constant dense<0.000000e+00> : vector<64xf32>
    %104 = vector.multi_reduction <add>, %103, %cst_63 [0] : vector<16x64xf32> to vector<64xf32>
    %105 = vector.shape_cast %104 : vector<64xf32> to vector<1x64xf32>
    %106 = vector.extract_strided_slice %91 {offsets = [0, 1], sizes = [16, 1], strides = [1, 1]} : vector<32x8xf32> to vector<16x1xf32>
    %107 = vector.extract_strided_slice %91 {offsets = [16, 1], sizes = [16, 1], strides = [1, 1]} : vector<32x8xf32> to vector<16x1xf32>
    %c1_64 = arith.constant 1 : index
    %c0_65 = arith.constant 0 : index
    %c0_66 = arith.constant 0 : index
    %108 = vector.load %arg18[%c1_64, %c0_65, %c0_66] : memref<8x16x64xf32, #tpu.memory_space<vmem>>, vector<1x16x64xf32>
    %109 = vector.shape_cast %108 : vector<1x16x64xf32> to vector<16x64xf32>
    %110 = arith.mulf %109, %101 : vector<16x64xf32>
    %111 = vector.extract_strided_slice %81 {offsets = [1, 0], sizes = [1, 64], strides = [1, 1]} : vector<8x64xf32> to vector<1x64xf32>
    %112 = vector.broadcast %106 : vector<16x1xf32> to vector<16x64xf32>
    %113 = vector.broadcast %111 : vector<1x64xf32> to vector<16x64xf32>
    %114 = arith.mulf %112, %113 : vector<16x64xf32>
    %115 = arith.addf %110, %114 : vector<16x64xf32>
    %116 = vector.broadcast %107 : vector<16x1xf32> to vector<16x64xf32>
    %117 = arith.mulf %115, %116 : vector<16x64xf32>
    %cst_67 = arith.constant dense<0.000000e+00> : vector<64xf32>
    %118 = vector.multi_reduction <add>, %117, %cst_67 [0] : vector<16x64xf32> to vector<64xf32>
    %119 = vector.shape_cast %118 : vector<64xf32> to vector<1x64xf32>
    %120 = vector.extract_strided_slice %91 {offsets = [0, 2], sizes = [16, 1], strides = [1, 1]} : vector<32x8xf32> to vector<16x1xf32>
    %121 = vector.extract_strided_slice %91 {offsets = [16, 2], sizes = [16, 1], strides = [1, 1]} : vector<32x8xf32> to vector<16x1xf32>
    %c2_68 = arith.constant 2 : index
    %c0_69 = arith.constant 0 : index
    %c0_70 = arith.constant 0 : index
    %122 = vector.load %arg18[%c2_68, %c0_69, %c0_70] : memref<8x16x64xf32, #tpu.memory_space<vmem>>, vector<1x16x64xf32>
    %123 = vector.shape_cast %122 : vector<1x16x64xf32> to vector<16x64xf32>
    %124 = arith.mulf %123, %115 : vector<16x64xf32>
    %125 = vector.extract_strided_slice %81 {offsets = [2, 0], sizes = [1, 64], strides = [1, 1]} : vector<8x64xf32> to vector<1x64xf32>
    %126 = vector.broadcast %120 : vector<16x1xf32> to vector<16x64xf32>
    %127 = vector.broadcast %125 : vector<1x64xf32> to vector<16x64xf32>
    %128 = arith.mulf %126, %127 : vector<16x64xf32>
    %129 = arith.addf %124, %128 : vector<16x64xf32>
    %130 = vector.broadcast %121 : vector<16x1xf32> to vector<16x64xf32>
    %131 = arith.mulf %129, %130 : vector<16x64xf32>
    %cst_71 = arith.constant dense<0.000000e+00> : vector<64xf32>
    %132 = vector.multi_reduction <add>, %131, %cst_71 [0] : vector<16x64xf32> to vector<64xf32>
    %133 = vector.shape_cast %132 : vector<64xf32> to vector<1x64xf32>
    %134 = vector.extract_strided_slice %91 {offsets = [0, 3], sizes = [16, 1], strides = [1, 1]} : vector<32x8xf32> to vector<16x1xf32>
    %135 = vector.extract_strided_slice %91 {offsets = [16, 3], sizes = [16, 1], strides = [1, 1]} : vector<32x8xf32> to vector<16x1xf32>
    %c3_72 = arith.constant 3 : index
    %c0_73 = arith.constant 0 : index
    %c0_74 = arith.constant 0 : index
    %136 = vector.load %arg18[%c3_72, %c0_73, %c0_74] : memref<8x16x64xf32, #tpu.memory_space<vmem>>, vector<1x16x64xf32>
    %137 = vector.shape_cast %136 : vector<1x16x64xf32> to vector<16x64xf32>
    %138 = arith.mulf %137, %129 : vector<16x64xf32>
    %139 = vector.extract_strided_slice %81 {offsets = [3, 0], sizes = [1, 64], strides = [1, 1]} : vector<8x64xf32> to vector<1x64xf32>
    %140 = vector.broadcast %134 : vector<16x1xf32> to vector<16x64xf32>
    %141 = vector.broadcast %139 : vector<1x64xf32> to vector<16x64xf32>
    %142 = arith.mulf %140, %141 : vector<16x64xf32>
    %143 = arith.addf %138, %142 : vector<16x64xf32>
    %144 = vector.broadcast %135 : vector<16x1xf32> to vector<16x64xf32>
    %145 = arith.mulf %143, %144 : vector<16x64xf32>
    %cst_75 = arith.constant dense<0.000000e+00> : vector<64xf32>
    %146 = vector.multi_reduction <add>, %145, %cst_75 [0] : vector<16x64xf32> to vector<64xf32>
    %147 = vector.shape_cast %146 : vector<64xf32> to vector<1x64xf32>
    %148 = vector.extract_strided_slice %91 {offsets = [0, 4], sizes = [16, 1], strides = [1, 1]} : vector<32x8xf32> to vector<16x1xf32>
    %149 = vector.extract_strided_slice %91 {offsets = [16, 4], sizes = [16, 1], strides = [1, 1]} : vector<32x8xf32> to vector<16x1xf32>
    %c4 = arith.constant 4 : index
    %c0_76 = arith.constant 0 : index
    %c0_77 = arith.constant 0 : index
    %150 = vector.load %arg18[%c4, %c0_76, %c0_77] : memref<8x16x64xf32, #tpu.memory_space<vmem>>, vector<1x16x64xf32>
    %151 = vector.shape_cast %150 : vector<1x16x64xf32> to vector<16x64xf32>
    %152 = arith.mulf %151, %143 : vector<16x64xf32>
    %153 = vector.extract_strided_slice %81 {offsets = [4, 0], sizes = [1, 64], strides = [1, 1]} : vector<8x64xf32> to vector<1x64xf32>
    %154 = vector.broadcast %148 : vector<16x1xf32> to vector<16x64xf32>
    %155 = vector.broadcast %153 : vector<1x64xf32> to vector<16x64xf32>
    %156 = arith.mulf %154, %155 : vector<16x64xf32>
    %157 = arith.addf %152, %156 : vector<16x64xf32>
    %158 = vector.broadcast %149 : vector<16x1xf32> to vector<16x64xf32>
    %159 = arith.mulf %157, %158 : vector<16x64xf32>
    %cst_78 = arith.constant dense<0.000000e+00> : vector<64xf32>
    %160 = vector.multi_reduction <add>, %159, %cst_78 [0] : vector<16x64xf32> to vector<64xf32>
    %161 = vector.shape_cast %160 : vector<64xf32> to vector<1x64xf32>
    %162 = vector.extract_strided_slice %91 {offsets = [0, 5], sizes = [16, 1], strides = [1, 1]} : vector<32x8xf32> to vector<16x1xf32>
    %163 = vector.extract_strided_slice %91 {offsets = [16, 5], sizes = [16, 1], strides = [1, 1]} : vector<32x8xf32> to vector<16x1xf32>
    %c5 = arith.constant 5 : index
    %c0_79 = arith.constant 0 : index
    %c0_80 = arith.constant 0 : index
    %164 = vector.load %arg18[%c5, %c0_79, %c0_80] : memref<8x16x64xf32, #tpu.memory_space<vmem>>, vector<1x16x64xf32>
    %165 = vector.shape_cast %164 : vector<1x16x64xf32> to vector<16x64xf32>
    %166 = arith.mulf %165, %157 : vector<16x64xf32>
    %167 = vector.extract_strided_slice %81 {offsets = [5, 0], sizes = [1, 64], strides = [1, 1]} : vector<8x64xf32> to vector<1x64xf32>
    %168 = vector.broadcast %162 : vector<16x1xf32> to vector<16x64xf32>
    %169 = vector.broadcast %167 : vector<1x64xf32> to vector<16x64xf32>
    %170 = arith.mulf %168, %169 : vector<16x64xf32>
    %171 = arith.addf %166, %170 : vector<16x64xf32>
    %172 = vector.broadcast %163 : vector<16x1xf32> to vector<16x64xf32>
    %173 = arith.mulf %171, %172 : vector<16x64xf32>
    %cst_81 = arith.constant dense<0.000000e+00> : vector<64xf32>
    %174 = vector.multi_reduction <add>, %173, %cst_81 [0] : vector<16x64xf32> to vector<64xf32>
    %175 = vector.shape_cast %174 : vector<64xf32> to vector<1x64xf32>
    %176 = vector.extract_strided_slice %91 {offsets = [0, 6], sizes = [16, 1], strides = [1, 1]} : vector<32x8xf32> to vector<16x1xf32>
    %177 = vector.extract_strided_slice %91 {offsets = [16, 6], sizes = [16, 1], strides = [1, 1]} : vector<32x8xf32> to vector<16x1xf32>
    %c6 = arith.constant 6 : index
    %c0_82 = arith.constant 0 : index
    %c0_83 = arith.constant 0 : index
    %178 = vector.load %arg18[%c6, %c0_82, %c0_83] : memref<8x16x64xf32, #tpu.memory_space<vmem>>, vector<1x16x64xf32>
    %179 = vector.shape_cast %178 : vector<1x16x64xf32> to vector<16x64xf32>
    %180 = arith.mulf %179, %171 : vector<16x64xf32>
    %181 = vector.extract_strided_slice %81 {offsets = [6, 0], sizes = [1, 64], strides = [1, 1]} : vector<8x64xf32> to vector<1x64xf32>
    %182 = vector.broadcast %176 : vector<16x1xf32> to vector<16x64xf32>
    %183 = vector.broadcast %181 : vector<1x64xf32> to vector<16x64xf32>
    %184 = arith.mulf %182, %183 : vector<16x64xf32>
    %185 = arith.addf %180, %184 : vector<16x64xf32>
    %186 = vector.broadcast %177 : vector<16x1xf32> to vector<16x64xf32>
    %187 = arith.mulf %185, %186 : vector<16x64xf32>
    %cst_84 = arith.constant dense<0.000000e+00> : vector<64xf32>
    %188 = vector.multi_reduction <add>, %187, %cst_84 [0] : vector<16x64xf32> to vector<64xf32>
    %189 = vector.shape_cast %188 : vector<64xf32> to vector<1x64xf32>
    %190 = vector.extract_strided_slice %91 {offsets = [0, 7], sizes = [16, 1], strides = [1, 1]} : vector<32x8xf32> to vector<16x1xf32>
    %191 = vector.extract_strided_slice %91 {offsets = [16, 7], sizes = [16, 1], strides = [1, 1]} : vector<32x8xf32> to vector<16x1xf32>
    %c7 = arith.constant 7 : index
    %c0_85 = arith.constant 0 : index
    %c0_86 = arith.constant 0 : index
    %192 = vector.load %arg18[%c7, %c0_85, %c0_86] : memref<8x16x64xf32, #tpu.memory_space<vmem>>, vector<1x16x64xf32>
    %193 = vector.shape_cast %192 : vector<1x16x64xf32> to vector<16x64xf32>
    %194 = arith.mulf %193, %185 : vector<16x64xf32>
    %195 = vector.extract_strided_slice %81 {offsets = [7, 0], sizes = [1, 64], strides = [1, 1]} : vector<8x64xf32> to vector<1x64xf32>
    %196 = vector.broadcast %190 : vector<16x1xf32> to vector<16x64xf32>
    %197 = vector.broadcast %195 : vector<1x64xf32> to vector<16x64xf32>
    %198 = arith.mulf %196, %197 : vector<16x64xf32>
    %199 = arith.addf %194, %198 : vector<16x64xf32>
    %200 = vector.broadcast %191 : vector<16x1xf32> to vector<16x64xf32>
    %201 = arith.mulf %199, %200 : vector<16x64xf32>
    %cst_87 = arith.constant dense<0.000000e+00> : vector<64xf32>
    %202 = vector.multi_reduction <add>, %201, %cst_87 [0] : vector<16x64xf32> to vector<64xf32>
    %203 = vector.shape_cast %202 : vector<64xf32> to vector<1x64xf32>
    %c0_i32_88 = arith.constant 0 : i32
    %204 = arith.addi %76, %c0_i32_88 : i32
    %205 = tpu.assume_multiple %204, 8 : i32
    %206 = tpu.concatenate %105, %119, %133, %147, %161, %175, %189, %203 in 0 : vector<1x64xf32>, vector<1x64xf32>, vector<1x64xf32>, vector<1x64xf32>, vector<1x64xf32>, vector<1x64xf32>, vector<1x64xf32>, vector<1x64xf32> -> vector<8x64xf32>
    %207 = arith.index_cast %205 : i32 to index
    %c0_89 = arith.constant 0 : index
    %208 = vector.load %arg15[%207, %c0_89] : memref<8x64xf32, #tpu.memory_space<vmem>>, vector<8x64xf32>
    tpu.vector_store %arg15[%207, %c0_89], %206 {strides = array<i32>} : memref<8x64xf32, #tpu.memory_space<vmem>>, vector<8x64xf32>,
    %c1_i32 = arith.constant 1 : i32
    %c0_90 = arith.constant 0 : index
    %c0_91 = arith.constant 0 : index
    %209 = vector.load %arg19[%c0_90, %c0_91] : memref<16x64xf32, #tpu.memory_space<vmem>>, vector<16x64xf32>
    tpu.vector_store %arg19[%c0_90, %c0_91], %199 {strides = array<i32>} : memref<16x64xf32, #tpu.memory_space<vmem>>, vector<16x64xf32>,
    %c0_92 = arith.constant 0 : index
    %c0_93 = arith.constant 0 : index
    %210 = vector.load %arg15[%c0_92, %c0_93] : memref<8x64xf32, #tpu.memory_space<vmem>>, vector<8x64xf32>
    %c0_94 = arith.constant 0 : index
    %c0_95 = arith.constant 0 : index
    %211 = vector.load %arg13[%c0_94, %c0_95] : memref<8x64xf32, #tpu.memory_space<vmem>>, vector<8x64xf32>
    %c0_96 = arith.constant 0 : index
    %c0_97 = arith.constant 0 : index
    %212 = vector.load %arg10[%c0_96, %c0_97] : memref<1x64xf32, #tpu.memory_space<vmem>>, vector<1x64xf32>
    %213 = vector.broadcast %212 : vector<1x64xf32> to vector<8x64xf32>
    %214 = arith.mulf %211, %213 : vector<8x64xf32>
    %215 = arith.addf %210, %214 : vector<8x64xf32>
    %c0_98 = arith.constant 0 : index
    %c0_99 = arith.constant 0 : index
    %216 = vector.load %arg16[%c0_98, %c0_99] : memref<8x64xf32, #tpu.memory_space<vmem>>, vector<8x64xf32>
    %217 = arith.mulf %215, %216 : vector<8x64xf32>
    %218 = arith.truncf %217 : vector<8x64xf32> to vector<8x64xbf16>
    %c0_100 = arith.constant 0 : index
    %c0_101 = arith.constant 0 : index
    %219 = vector.load %arg11[%c0_100, %c0_101] : memref<64x32xbf16, #tpu.memory_space<vmem>>, vector<64x32xbf16>
    %cst_102 = arith.constant dense<0.000000e+00> : vector<8x32xf32>
    %220 = tpu.matmul %218, %219, %cst_102 {dimension_numbers = #tpu.dot_dimension_numbers<[1], [0], [0], [1], [0, 0, 1, 1], [], []>} : vector<8x64xbf16>, vector<64x32xbf16>, vector<8x32xf32> -> vector<8x32xf32>
    %c0_103 = arith.constant 0 : index
    %c0_104 = arith.constant 0 : index
    %c0_105 = arith.constant 0 : index
    %221 = vector.load %arg12[%c0_103, %c0_104, %c0_105] : memref<1x8x32xf32, #tpu.memory_space<vmem>>, vector<1x8x32xf32>
    %222 = vector.shape_cast %221 : vector<1x8x32xf32> to vector<8x32xf32>
    %223 = vector.shape_cast %220 : vector<8x32xf32> to vector<1x8x32xf32>
    tpu.vector_store %arg12[%c0_103, %c0_104, %c0_105], %223 {strides = array<i32>} : memref<1x8x32xf32, #tpu.memory_space<vmem>>, vector<1x8x32xf32>,
    return
  }
  func.func @transform_0(%arg0: i32, %arg1: i32) -> (i32, i32, i32) {
    %c0_i32 = arith.constant 0 : i32
    %c0_i32_0 = arith.constant 0 : i32
    return %arg0, %arg1, %c0_i32 : i32, i32, i32
  }
  func.func @transform_1(%arg0: i32, %arg1: i32) -> (i32, i32) {
    %c0_i32 = arith.constant 0 : i32
    %c0_i32_0 = arith.constant 0 : i32
    %c0_i32_1 = arith.constant 0 : i32
    return %c0_i32, %c0_i32_0 : i32, i32
  }
  func.func @transform_2(%arg0: i32, %arg1: i32) -> (i32, i32) {
    %c0_i32 = arith.constant 0 : i32
    %c0_i32_0 = arith.constant 0 : i32
    %c0_i32_1 = arith.constant 0 : i32
    return %c0_i32, %c0_i32_0 : i32, i32
  }
  func.func @transform_3(%arg0: i32, %arg1: i32) -> (i32, i32) {
    %c0_i32 = arith.constant 0 : i32
    %c0_i32_0 = arith.constant 0 : i32
    %c0_i32_1 = arith.constant 0 : i32
    return %c0_i32, %c0_i32_0 : i32, i32
  }
  func.func @transform_4(%arg0: i32, %arg1: i32) -> (i32, i32) {
    %c0_i32 = arith.constant 0 : i32
    %c0_i32_0 = arith.constant 0 : i32
    %c0_i32_1 = arith.constant 0 : i32
    return %c0_i32, %c0_i32_0 : i32, i32
  }
  func.func @transform_5(%arg0: i32, %arg1: i32) -> (i32, i32) {
    %c0_i32 = arith.constant 0 : i32
    %c0_i32_0 = arith.constant 0 : i32
    %c0_i32_1 = arith.constant 0 : i32
    return %c0_i32, %c0_i32_0 : i32, i32
  }
  func.func @transform_6(%arg0: i32, %arg1: i32) -> (i32, i32) {
    %c0_i32 = arith.constant 0 : i32
    %c0_i32_0 = arith.constant 0 : i32
    %c0_i32_1 = arith.constant 0 : i32
    return %c0_i32, %c0_i32_0 : i32, i32
  }
  func.func @transform_7(%arg0: i32, %arg1: i32) -> (i32, i32) {
    %c0_i32 = arith.constant 0 : i32
    %c0_i32_0 = arith.constant 0 : i32
    %c0_i32_1 = arith.constant 0 : i32
    return %c0_i32, %c0_i32_0 : i32, i32
  }
  func.func @transform_8(%arg0: i32, %arg1: i32) -> (i32, i32) {
    %c0_i32 = arith.constant 0 : i32
    %c0_i32_0 = arith.constant 0 : i32
    %c0_i32_1 = arith.constant 0 : i32
    return %c0_i32, %c0_i32_0 : i32, i32
  }
  func.func @transform_9(%arg0: i32, %arg1: i32) -> (i32, i32) {
    %c0_i32 = arith.constant 0 : i32
    %c0_i32_0 = arith.constant 0 : i32
    %c0_i32_1 = arith.constant 0 : i32
    return %c0_i32, %c0_i32_0 : i32, i32
  }
  func.func @transform_10(%arg0: i32, %arg1: i32) -> (i32, i32, i32) {
    %c0_i32 = arith.constant 0 : i32
    %c0_i32_0 = arith.constant 0 : i32
    return %arg0, %arg1, %c0_i32 : i32, i32, i32
  }
}

module attributes {stable_mosaic.version = 11 : i64} {
  func.func @_mamba_block_kernel(%arg0: i32, %arg1: i32, %arg2: memref<1x8x32xf32, #tpu.memory_space<vmem>>, %arg3: memref<32x128xbf16, #tpu.memory_space<vmem>>, %arg4: memref<4x64xf32, #tpu.memory_space<vmem>>, %arg5: memref<1x64xf32, #tpu.memory_space<vmem>>, %arg6: memref<64x36xbf16, #tpu.memory_space<vmem>>, %arg7: memref<4x64xbf16, #tpu.memory_space<vmem>>, %arg8: memref<1x64xf32, #tpu.memory_space<vmem>>, %arg9: memref<16x64xf32, #tpu.memory_space<vmem>>, %arg10: memref<1x64xf32, #tpu.memory_space<vmem>>, %arg11: memref<64x32xbf16, #tpu.memory_space<vmem>>, %arg12: memref<1x8x32xf32, #tpu.memory_space<vmem>>, %arg13: memref<8x64xf32, #tpu.memory_space<vmem>>, %arg14: memref<8x64xf32, #tpu.memory_space<vmem>>, %arg15: memref<8x64xf32, #tpu.memory_space<vmem>>, %arg16: memref<8x64xf32, #tpu.memory_space<vmem>>, %arg17: memref<8x32xf32, #tpu.memory_space<vmem>>, %arg18: memref<8x16x64xf32, #tpu.memory_space<vmem>>, %arg19: memref<16x64xf32, #tpu.memory_space<vmem>>, %arg20: memref<11x64xf32, #tpu.memory_space<vmem>>) attributes {dimension_semantics = [#tpu.dimension_semantics<parallel>, #tpu.dimension_semantics<arbitrary>], iteration_bounds = array<i64: 2, 1>, scalar_prefetch = 0 : i64, scratch_operands = 8 : i64, tpu.core_type = #tpu.core_type<tc>, window_params = [{transform_indices = @transform_0, window_bounds = array<i64: 1, 8, 32>}, {pipeline_mode = #tpu.pipeline_mode<synchronous>, transform_indices = @transform_1, window_bounds = array<i64: 32, 128>}, {pipeline_mode = #tpu.pipeline_mode<synchronous>, transform_indices = @transform_2, window_bounds = array<i64: 4, 64>}, {pipeline_mode = #tpu.pipeline_mode<synchronous>, transform_indices = @transform_3, window_bounds = array<i64: 1, 64>}, {pipeline_mode = #tpu.pipeline_mode<synchronous>, transform_indices = @transform_4, window_bounds = array<i64: 64, 36>}, {pipeline_mode = #tpu.pipeline_mode<synchronous>, transform_indices = @transform_5, window_bounds = array<i64: 4, 64>}, {pipeline_mode = #tpu.pipeline_mode<synchronous>, transform_indices = @transform_6, window_bounds = array<i64: 1, 64>}, {pipeline_mode = #tpu.pipeline_mode<synchronous>, transform_indices = @transform_7, window_bounds = array<i64: 16, 64>}, {pipeline_mode = #tpu.pipeline_mode<synchronous>, transform_indices = @transform_8, window_bounds = array<i64: 1, 64>}, {pipeline_mode = #tpu.pipeline_mode<synchronous>, transform_indices = @transform_9, window_bounds = array<i64: 64, 32>}, {transform_indices = @transform_10, window_bounds = array<i64: 1, 8, 32>}]} {
    %c0_i32 = arith.constant 0 : i32
    %0 = arith.cmpi eq, %arg1, %c0_i32 : i32
    %1 = arith.extui %0 : i1 to i32
    %c0_i32_0 = arith.constant 0 : i32
    %2 = arith.cmpi ne, %1, %c0_i32_0 : i32
    scf.if %2 {
      %cst_106 = arith.constant 0.000000e+00 : f32
      %224 = vector.broadcast %cst_106 : f32 to vector<16x64xf32>
      %c0_107 = arith.constant 0 : index
      %c0_108 = arith.constant 0 : index
      %225 = vector.load %arg19[%c0_107, %c0_108] : memref<16x64xf32, #tpu.memory_space<vmem>>, vector<16x64xf32>
      tpu.vector_store %arg19[%c0_107, %c0_108], %224 {strides = array<i32>} : memref<16x64xf32, #tpu.memory_space<vmem>>, vector<16x64xf32>,
      %cst_109 = arith.constant 0.000000e+00 : f32
      %226 = vector.broadcast %cst_109 : f32 to vector<11x64xf32>
      %c0_110 = arith.constant 0 : index
      %c0_111 = arith.constant 0 : index
      %227 = vector.load %arg20[%c0_110, %c0_111] : memref<11x64xf32, #tpu.memory_space<vmem>>, vector<11x64xf32>
      tpu.vector_store %arg20[%c0_110, %c0_111], %226 {strides = array<i32>} : memref<11x64xf32, #tpu.memory_space<vmem>>, vector<11x64xf32>,
    } else {
    }
    %c0 = arith.constant 0 : index
    %c0_1 = arith.constant 0 : index
    %c0_2 = arith.constant 0 : index
    %3 = vector.load %arg2[%c0, %c0_1, %c0_2] : memref<1x8x32xf32, #tpu.memory_space<vmem>>, vector<1x8x32xf32>
    %4 = vector.shape_cast %3 : vector<1x8x32xf32> to vector<8x32xf32>
    %5 = arith.truncf %4 : vector<8x32xf32> to vector<8x32xbf16>
    %c0_3 = arith.constant 0 : index
    %c0_4 = arith.constant 0 : index
    %6 = vector.load %arg3[%c0_3, %c0_4] : memref<32x128xbf16, #tpu.memory_space<vmem>>, vector<32x128xbf16>
    %cst = arith.constant dense<0.000000e+00> : vector<8x128xf32>
    %7 = tpu.matmul %5, %6, %cst {dimension_numbers = #tpu.dot_dimension_numbers<[1], [0], [0], [1], [0, 0, 1, 1], [], []>} : vector<8x32xbf16>, vector<32x128xbf16>, vector<8x128xf32> -> vector<8x128xf32>
    %8 = vector.extract_strided_slice %7 {offsets = [0, 0], sizes = [8, 64], strides = [1, 1]} : vector<8x128xf32> to vector<8x64xf32>
    %9 = vector.extract_strided_slice %7 {offsets = [0, 64], sizes = [8, 64], strides = [1, 1]} : vector<8x128xf32> to vector<8x64xf32>
    %cst_5 = arith.constant 0.000000e+00 : f32
    %10 = vector.broadcast %cst_5 : f32 to vector<8x64xf32>
    %11 = arith.subf %10, %9 : vector<8x64xf32>
    %12 = math.exp %11 : vector<8x64xf32>
    %cst_6 = arith.constant 1.000000e+00 : f32
    %13 = vector.broadcast %cst_6 : f32 to vector<8x64xf32>
    %14 = arith.addf %13, %12 : vector<8x64xf32>
    %cst_7 = arith.constant 1.000000e+00 : f32
    %15 = vector.broadcast %cst_7 : f32 to vector<8x64xf32>
    %16 = arith.divf %15, %14 : vector<8x64xf32>
    %17 = arith.mulf %9, %16 : vector<8x64xf32>
    %c0_8 = arith.constant 0 : index
    %c0_9 = arith.constant 0 : index
    %18 = vector.load %arg16[%c0_8, %c0_9] : memref<8x64xf32, #tpu.memory_space<vmem>>, vector<8x64xf32>
    tpu.vector_store %arg16[%c0_8, %c0_9], %17 {strides = array<i32>} : memref<8x64xf32, #tpu.memory_space<vmem>>, vector<8x64xf32>,
    %c3 = arith.constant 3 : index
    %c0_10 = arith.constant 0 : index
    %19 = vector.load %arg20[%c3, %c0_10] : memref<11x64xf32, #tpu.memory_space<vmem>>, vector<8x64xf32>
    tpu.vector_store %arg20[%c3, %c0_10], %8 {strides = array<i32>} : memref<11x64xf32, #tpu.memory_space<vmem>>, vector<8x64xf32>,
    %c3_11 = arith.constant 3 : index
    %c0_12 = arith.constant 0 : index
    %20 = vector.load %arg4[%c3_11, %c0_12] : memref<4x64xf32, #tpu.memory_space<vmem>>, vector<1x64xf32>
    %21 = vector.broadcast %20 : vector<1x64xf32> to vector<8x64xf32>
    %22 = arith.mulf %8, %21 : vector<8x64xf32>
    %c0_13 = arith.constant 0 : index
    %c0_14 = arith.constant 0 : index
    %23 = vector.load %arg5[%c0_13, %c0_14] : memref<1x64xf32, #tpu.memory_space<vmem>>, vector<1x64xf32>
    %24 = vector.broadcast %23 : vector<1x64xf32> to vector<8x64xf32>
    %25 = arith.addf %22, %24 : vector<8x64xf32>
    %c0_15 = arith.constant 0 : index
    %c0_16 = arith.constant 0 : index
    %26 = vector.load %arg20[%c0_15, %c0_16] : memref<11x64xf32, #tpu.memory_space<vmem>>, vector<8x64xf32>
    %c0_17 = arith.constant 0 : index
    %c0_18 = arith.constant 0 : index
    %27 = vector.load %arg4[%c0_17, %c0_18] : memref<4x64xf32, #tpu.memory_space<vmem>>, vector<1x64xf32>
    %28 = vector.broadcast %27 : vector<1x64xf32> to vector<8x64xf32>
    %29 = arith.mulf %26, %28 : vector<8x64xf32>
    %30 = arith.addf %25, %29 : vector<8x64xf32>
    %c1 = arith.constant 1 : index
    %c0_19 = arith.constant 0 : index
    %31 = vector.load %arg20[%c1, %c0_19] : memref<11x64xf32, #tpu.memory_space<vmem>>, vector<8x64xf32>
    %c1_20 = arith.constant 1 : index
    %c0_21 = arith.constant 0 : index
    %32 = vector.load %arg4[%c1_20, %c0_21] : memref<4x64xf32, #tpu.memory_space<vmem>>, vector<1x64xf32>
    %33 = vector.broadcast %32 : vector<1x64xf32> to vector<8x64xf32>
    %34 = arith.mulf %31, %33 : vector<8x64xf32>
    %35 = arith.addf %30, %34 : vector<8x64xf32>
    %c2 = arith.constant 2 : index
    %c0_22 = arith.constant 0 : index
    %36 = vector.load %arg20[%c2, %c0_22] : memref<11x64xf32, #tpu.memory_space<vmem>>, vector<8x64xf32>
    %c2_23 = arith.constant 2 : index
    %c0_24 = arith.constant 0 : index
    %37 = vector.load %arg4[%c2_23, %c0_24] : memref<4x64xf32, #tpu.memory_space<vmem>>, vector<1x64xf32>
    %38 = vector.broadcast %37 : vector<1x64xf32> to vector<8x64xf32>
    %39 = arith.mulf %36, %38 : vector<8x64xf32>
    %40 = arith.addf %35, %39 : vector<8x64xf32>
    %cst_25 = arith.constant 0.000000e+00 : f32
    %41 = vector.broadcast %cst_25 : f32 to vector<8x64xf32>
    %42 = arith.subf %41, %40 : vector<8x64xf32>
    %43 = math.exp %42 : vector<8x64xf32>
    %cst_26 = arith.constant 1.000000e+00 : f32
    %44 = vector.broadcast %cst_26 : f32 to vector<8x64xf32>
    %45 = arith.addf %44, %43 : vector<8x64xf32>
    %cst_27 = arith.constant 1.000000e+00 : f32
    %46 = vector.broadcast %cst_27 : f32 to vector<8x64xf32>
    %47 = arith.divf %46, %45 : vector<8x64xf32>
    %48 = arith.mulf %40, %47 : vector<8x64xf32>
    %c0_28 = arith.constant 0 : index
    %c0_29 = arith.constant 0 : index
    %49 = vector.load %arg13[%c0_28, %c0_29] : memref<8x64xf32, #tpu.memory_space<vmem>>, vector<8x64xf32>
    tpu.vector_store %arg13[%c0_28, %c0_29], %48 {strides = array<i32>} : memref<8x64xf32, #tpu.memory_space<vmem>>, vector<8x64xf32>,
    %c8 = arith.constant 8 : index
    %c0_30 = arith.constant 0 : index
    %50 = vector.load %arg20[%c8, %c0_30] : memref<11x64xf32, #tpu.memory_space<vmem>>, vector<3x64xf32>
    %c0_31 = arith.constant 0 : index
    %c0_32 = arith.constant 0 : index
    %51 = vector.load %arg20[%c0_31, %c0_32] : memref<11x64xf32, #tpu.memory_space<vmem>>, vector<3x64xf32>
    tpu.vector_store %arg20[%c0_31, %c0_32], %50 {strides = array<i32>} : memref<11x64xf32, #tpu.memory_space<vmem>>, vector<3x64xf32>,
    %c0_33 = arith.constant 0 : index
    %c0_34 = arith.constant 0 : index
    %52 = vector.load %arg13[%c0_33, %c0_34] : memref<8x64xf32, #tpu.memory_space<vmem>>, vector<8x64xf32>
    %53 = arith.truncf %52 : vector<8x64xf32> to vector<8x64xbf16>
    %c0_35 = arith.constant 0 : index
    %c0_36 = arith.constant 0 : index
    %54 = vector.load %arg6[%c0_35, %c0_36] : memref<64x36xbf16, #tpu.memory_space<vmem>>, vector<64x36xbf16>
    %cst_37 = arith.constant dense<0.000000e+00> : vector<8x36xf32>
    %55 = tpu.matmul %53, %54, %cst_37 {dimension_numbers = #tpu.dot_dimension_numbers<[1], [0], [0], [1], [0, 0, 1, 1], [], []>} : vector<8x64xbf16>, vector<64x36xbf16>, vector<8x36xf32> -> vector<8x36xf32>
    %56 = vector.extract_strided_slice %55 {offsets = [0, 0], sizes = [8, 4], strides = [1, 1]} : vector<8x36xf32> to vector<8x4xf32>
    %57 = arith.truncf %56 : vector<8x4xf32> to vector<8x4xbf16>
    %c0_38 = arith.constant 0 : index
    %c0_39 = arith.constant 0 : index
    %58 = vector.load %arg7[%c0_38, %c0_39] : memref<4x64xbf16, #tpu.memory_space<vmem>>, vector<4x64xbf16>
    %cst_40 = arith.constant dense<0.000000e+00> : vector<8x64xf32>
    %59 = tpu.matmul %57, %58, %cst_40 {dimension_numbers = #tpu.dot_dimension_numbers<[1], [0], [0], [1], [0, 0, 1, 1], [], []>} : vector<8x4xbf16>, vector<4x64xbf16>, vector<8x64xf32> -> vector<8x64xf32>
    %c0_41 = arith.constant 0 : index
    %c0_42 = arith.constant 0 : index
    %60 = vector.load %arg8[%c0_41, %c0_42] : memref<1x64xf32, #tpu.memory_space<vmem>>, vector<1x64xf32>
    %61 = vector.broadcast %60 : vector<1x64xf32> to vector<8x64xf32>
    %62 = arith.addf %59, %61 : vector<8x64xf32>
    %cst_43 = arith.constant 2.000000e+01 : f32
    %63 = vector.broadcast %cst_43 : f32 to vector<8x64xf32>
    %64 = arith.cmpf ogt, %62, %63 : vector<8x64xf32>
    %cst_44 = arith.constant 2.000000e+01 : f32
    %65 = vector.broadcast %cst_44 : f32 to vector<8x64xf32>
    %66 = arith.minimumf %62, %65 : vector<8x64xf32>
    %67 = math.exp %66 : vector<8x64xf32>
    %68 = math.log1p %67 : vector<8x64xf32>
    %69 = arith.select %64, %62, %68 : vector<8x64xi1>, vector<8x64xf32>
    %c0_45 = arith.constant 0 : index
    %c0_46 = arith.constant 0 : index
    %70 = vector.load %arg14[%c0_45, %c0_46] : memref<8x64xf32, #tpu.memory_space<vmem>>, vector<8x64xf32>
    tpu.vector_store %arg14[%c0_45, %c0_46], %69 {strides = array<i32>} : memref<8x64xf32, #tpu.memory_space<vmem>>, vector<8x64xf32>,
    %71 = vector.extract_strided_slice %55 {offsets = [0, 4], sizes = [8, 32], strides = [1, 1]} : vector<8x36xf32> to vector<8x32xf32>
    %c0_47 = arith.constant 0 : index
    %c0_48 = arith.constant 0 : index
    %72 = vector.load %arg17[%c0_47, %c0_48] : memref<8x32xf32, #tpu.memory_space<vmem>>, vector<8x32xf32>
    tpu.vector_store %arg17[%c0_47, %c0_48], %71 {strides = array<i32>} : memref<8x32xf32, #tpu.memory_space<vmem>>, vector<8x32xf32>,
    %c0_49 = arith.constant 0 : index
    %c0_50 = arith.constant 0 : index
    %73 = vector.load %arg9[%c0_49, %c0_50] : memref<16x64xf32, #tpu.memory_space<vmem>>, vector<16x64xf32>
    %c0_51 = arith.constant 0 : index
    %c0_52 = arith.constant 0 : index
    %74 = vector.load %arg19[%c0_51, %c0_52] : memref<16x64xf32, #tpu.memory_space<vmem>>, vector<16x64xf32>
    %c0_i32_53 = arith.constant 0 : i32
    %c8_i32 = arith.constant 8 : i32
    %75 = arith.muli %c0_i32_53, %c8_i32 : i32
    %76 = tpu.assume_multiple %75, 8 : i32
    %77 = arith.index_cast %76 : i32 to index
    %c0_54 = arith.constant 0 : index
    %78 = vector.load %arg14[%77, %c0_54] : memref<8x64xf32, #tpu.memory_space<vmem>>, vector<8x64xf32>
    %79 = arith.index_cast %76 : i32 to index
    %c0_55 = arith.constant 0 : index
    %80 = vector.load %arg13[%79, %c0_55] : memref<8x64xf32, #tpu.memory_space<vmem>>, vector<8x64xf32>
    %81 = arith.mulf %78, %80 : vector<8x64xf32>
    %82 = vector.shape_cast %78 : vector<8x64xf32> to vector<8x1x64xf32>
    %83 = vector.shape_cast %73 : vector<16x64xf32> to vector<1x16x64xf32>
    %84 = vector.broadcast %82 : vector<8x1x64xf32> to vector<8x16x64xf32>
    %85 = vector.broadcast %83 : vector<1x16x64xf32> to vector<8x16x64xf32>
    %86 = arith.mulf %84, %85 : vector<8x16x64xf32>
    %87 = math.exp %86 : vector<8x16x64xf32>
    %c0_56 = arith.constant 0 : index
    %c0_57 = arith.constant 0 : index
    %c0_58 = arith.constant 0 : index
    %88 = vector.load %arg18[%c0_56, %c0_57, %c0_58] : memref<8x16x64xf32, #tpu.memory_space<vmem>>, vector<8x16x64xf32>
    tpu.vector_store %arg18[%c0_56, %c0_57, %c0_58], %87 {strides = array<i32>} : memref<8x16x64xf32, #tpu.memory_space<vmem>>, vector<8x16x64xf32>,
    %89 = arith.index_cast %76 : i32 to index
    %c0_59 = arith.constant 0 : index
    %90 = vector.load %arg17[%89, %c0_59] : memref<8x32xf32, #tpu.memory_space<vmem>>, vector<8x32xf32>
    %91 = tpu.transpose %90, [1, 0] : vector<8x32xf32> -> vector<32x8xf32>
    %92 = vector.extract_strided_slice %91 {offsets = [0, 0], sizes = [16, 1], strides = [1, 1]} : vector<32x8xf32> to vector<16x1xf32>
    %93 = vector.extract_strided_slice %91 {offsets = [16, 0], sizes = [16, 1], strides = [1, 1]} : vector<32x8xf32> to vector<16x1xf32>
    %c0_60 = arith.constant 0 : index
    %c0_61 = arith.constant 0 : index
    %c0_62 = arith.constant 0 : index
    %94 = vector.load %arg18[%c0_60, %c0_61, %c0_62] : memref<8x16x64xf32, #tpu.memory_space<vmem>>, vector<1x16x64xf32>
    %95 = vector.shape_cast %94 : vector<1x16x64xf32> to vector<16x64xf32>
    %96 = arith.mulf %95, %74 : vector<16x64xf32>
    %97 = vector.extract_strided_slice %81 {offsets = [0, 0], sizes = [1, 64], strides = [1, 1]} : vector<8x64xf32> to vector<1x64xf32>
    %98 = vector.broadcast %92 : vector<16x1xf32> to vector<16x64xf32>
    %99 = vector.broadcast %97 : vector<1x64xf32> to vector<16x64xf32>
    %100 = arith.mulf %98, %99 : vector<16x64xf32>
    %101 = arith.addf %96, %100 : vector<16x64xf32>
    %102 = vector.broadcast %93 : vector<16x1xf32> to vector<16x64xf32>
    %103 = arith.mulf %101, %102 : vector<16x64xf32>
    %cst_63 = arith.constant dense<0.000000e+00> : vector<64xf32>
    %104 = vector.multi_reduction <add>, %103, %cst_63 [0] : vector<16x64xf32> to vector<64xf32>
    %105 = vector.shape_cast %104 : vector<64xf32> to vector<1x64xf32>
    %106 = vector.extract_strided_slice %91 {offsets = [0, 1], sizes = [16, 1], strides = [1, 1]} : vector<32x8xf32> to vector<16x1xf32>
    %107 = vector.extract_strided_slice %91 {offsets = [16, 1], sizes = [16, 1], strides = [1, 1]} : vector<32x8xf32> to vector<16x1xf32>
    %c1_64 = arith.constant 1 : index
    %c0_65 = arith.constant 0 : index
    %c0_66 = arith.constant 0 : index
    %108 = vector.load %arg18[%c1_64, %c0_65, %c0_66] : memref<8x16x64xf32, #tpu.memory_space<vmem>>, vector<1x16x64xf32>
    %109 = vector.shape_cast %108 : vector<1x16x64xf32> to vector<16x64xf32>
    %110 = arith.mulf %109, %101 : vector<16x64xf32>
    %111 = vector.extract_strided_slice %81 {offsets = [1, 0], sizes = [1, 64], strides = [1, 1]} : vector<8x64xf32> to vector<1x64xf32>
    %112 = vector.broadcast %106 : vector<16x1xf32> to vector<16x64xf32>
    %113 = vector.broadcast %111 : vector<1x64xf32> to vector<16x64xf32>
    %114 = arith.mulf %112, %113 : vector<16x64xf32>
    %115 = arith.addf %110, %114 : vector<16x64xf32>
    %116 = vector.broadcast %107 : vector<16x1xf32> to vector<16x64xf32>
    %117 = arith.mulf %115, %116 : vector<16x64xf32>
    %cst_67 = arith.constant dense<0.000000e+00> : vector<64xf32>
    %118 = vector.multi_reduction <add>, %117, %cst_67 [0] : vector<16x64xf32> to vector<64xf32>
    %119 = vector.shape_cast %118 : vector<64xf32> to vector<1x64xf32>
    %120 = vector.extract_strided_slice %91 {offsets = [0, 2], sizes = [16, 1], strides = [1, 1]} : vector<32x8xf32> to vector<16x1xf32>
    %121 = vector.extract_strided_slice %91 {offsets = [16, 2], sizes = [16, 1], strides = [1, 1]} : vector<32x8xf32> to vector<16x1xf32>
    %c2_68 = arith.constant 2 : index
    %c0_69 = arith.constant 0 : index
    %c0_70 = arith.constant 0 : index
    %122 = vector.load %arg18[%c2_68, %c0_69, %c0_70] : memref<8x16x64xf32, #tpu.memory_space<vmem>>, vector<1x16x64xf32>
    %123 = vector.shape_cast %122 : vector<1x16x64xf32> to vector<16x64xf32>
    %124 = arith.mulf %123, %115 : vector<16x64xf32>
    %125 = vector.extract_strided_slice %81 {offsets = [2, 0], sizes = [1, 64], strides = [1, 1]} : vector<8x64xf32> to vector<1x64xf32>
    %126 = vector.broadcast %120 : vector<16x1xf32> to vector<16x64xf32>
    %127 = vector.broadcast %125 : vector<1x64xf32> to vector<16x64xf32>
    %128 = arith.mulf %126, %127 : vector<16x64xf32>
    %129 = arith.addf %124, %128 : vector<16x64xf32>
    %130 = vector.broadcast %121 : vector<16x1xf32> to vector<16x64xf32>
    %131 = arith.mulf %129, %130 : vector<16x64xf32>
    %cst_71 = arith.constant dense<0.000000e+00> : vector<64xf32>
    %132 = vector.multi_reduction <add>, %131, %cst_71 [0] : vector<16x64xf32> to vector<64xf32>
    %133 = vector.shape_cast %132 : vector<64xf32> to vector<1x64xf32>
    %134 = vector.extract_strided_slice %91 {offsets = [0, 3], sizes = [16, 1], strides = [1, 1]} : vector<32x8xf32> to vector<16x1xf32>
    %135 = vector.extract_strided_slice %91 {offsets = [16, 3], sizes = [16, 1], strides = [1, 1]} : vector<32x8xf32> to vector<16x1xf32>
    %c3_72 = arith.constant 3 : index
    %c0_73 = arith.constant 0 : index
    %c0_74 = arith.constant 0 : index
    %136 = vector.load %arg18[%c3_72, %c0_73, %c0_74] : memref<8x16x64xf32, #tpu.memory_space<vmem>>, vector<1x16x64xf32>
    %137 = vector.shape_cast %136 : vector<1x16x64xf32> to vector<16x64xf32>
    %138 = arith.mulf %137, %129 : vector<16x64xf32>
    %139 = vector.extract_strided_slice %81 {offsets = [3, 0], sizes = [1, 64], strides = [1, 1]} : vector<8x64xf32> to vector<1x64xf32>
    %140 = vector.broadcast %134 : vector<16x1xf32> to vector<16x64xf32>
    %141 = vector.broadcast %139 : vector<1x64xf32> to vector<16x64xf32>
    %142 = arith.mulf %140, %141 : vector<16x64xf32>
    %143 = arith.addf %138, %142 : vector<16x64xf32>
    %144 = vector.broadcast %135 : vector<16x1xf32> to vector<16x64xf32>
    %145 = arith.mulf %143, %144 : vector<16x64xf32>
    %cst_75 = arith.constant dense<0.000000e+00> : vector<64xf32>
    %146 = vector.multi_reduction <add>, %145, %cst_75 [0] : vector<16x64xf32> to vector<64xf32>
    %147 = vector.shape_cast %146 : vector<64xf32> to vector<1x64xf32>
    %148 = vector.extract_strided_slice %91 {offsets = [0, 4], sizes = [16, 1], strides = [1, 1]} : vector<32x8xf32> to vector<16x1xf32>
    %149 = vector.extract_strided_slice %91 {offsets = [16, 4], sizes = [16, 1], strides = [1, 1]} : vector<32x8xf32> to vector<16x1xf32>
    %c4 = arith.constant 4 : index
    %c0_76 = arith.constant 0 : index
    %c0_77 = arith.constant 0 : index
    %150 = vector.load %arg18[%c4, %c0_76, %c0_77] : memref<8x16x64xf32, #tpu.memory_space<vmem>>, vector<1x16x64xf32>
    %151 = vector.shape_cast %150 : vector<1x16x64xf32> to vector<16x64xf32>
    %152 = arith.mulf %151, %143 : vector<16x64xf32>
    %153 = vector.extract_strided_slice %81 {offsets = [4, 0], sizes = [1, 64], strides = [1, 1]} : vector<8x64xf32> to vector<1x64xf32>
    %154 = vector.broadcast %148 : vector<16x1xf32> to vector<16x64xf32>
    %155 = vector.broadcast %153 : vector<1x64xf32> to vector<16x64xf32>
    %156 = arith.mulf %154, %155 : vector<16x64xf32>
    %157 = arith.addf %152, %156 : vector<16x64xf32>
    %158 = vector.broadcast %149 : vector<16x1xf32> to vector<16x64xf32>
    %159 = arith.mulf %157, %158 : vector<16x64xf32>
    %cst_78 = arith.constant dense<0.000000e+00> : vector<64xf32>
    %160 = vector.multi_reduction <add>, %159, %cst_78 [0] : vector<16x64xf32> to vector<64xf32>
    %161 = vector.shape_cast %160 : vector<64xf32> to vector<1x64xf32>
    %162 = vector.extract_strided_slice %91 {offsets = [0, 5], sizes = [16, 1], strides = [1, 1]} : vector<32x8xf32> to vector<16x1xf32>
    %163 = vector.extract_strided_slice %91 {offsets = [16, 5], sizes = [16, 1], strides = [1, 1]} : vector<32x8xf32> to vector<16x1xf32>
    %c5 = arith.constant 5 : index
    %c0_79 = arith.constant 0 : index
    %c0_80 = arith.constant 0 : index
    %164 = vector.load %arg18[%c5, %c0_79, %c0_80] : memref<8x16x64xf32, #tpu.memory_space<vmem>>, vector<1x16x64xf32>
    %165 = vector.shape_cast %164 : vector<1x16x64xf32> to vector<16x64xf32>
    %166 = arith.mulf %165, %157 : vector<16x64xf32>
    %167 = vector.extract_strided_slice %81 {offsets = [5, 0], sizes = [1, 64], strides = [1, 1]} : vector<8x64xf32> to vector<1x64xf32>
    %168 = vector.broadcast %162 : vector<16x1xf32> to vector<16x64xf32>
    %169 = vector.broadcast %167 : vector<1x64xf32> to vector<16x64xf32>
    %170 = arith.mulf %168, %169 : vector<16x64xf32>
    %171 = arith.addf %166, %170 : vector<16x64xf32>
    %172 = vector.broadcast %163 : vector<16x1xf32> to vector<16x64xf32>
    %173 = arith.mulf %171, %172 : vector<16x64xf32>
    %cst_81 = arith.constant dense<0.000000e+00> : vector<64xf32>
    %174 = vector.multi_reduction <add>, %173, %cst_81 [0] : vector<16x64xf32> to vector<64xf32>
    %175 = vector.shape_cast %174 : vector<64xf32> to vector<1x64xf32>
    %176 = vector.extract_strided_slice %91 {offsets = [0, 6], sizes = [16, 1], strides = [1, 1]} : vector<32x8xf32> to vector<16x1xf32>
    %177 = vector.extract_strided_slice %91 {offsets = [16, 6], sizes = [16, 1], strides = [1, 1]} : vector<32x8xf32> to vector<16x1xf32>
    %c6 = arith.constant 6 : index
    %c0_82 = arith.constant 0 : index
    %c0_83 = arith.constant 0 : index
    %178 = vector.load %arg18[%c6, %c0_82, %c0_83] : memref<8x16x64xf32, #tpu.memory_space<vmem>>, vector<1x16x64xf32>
    %179 = vector.shape_cast %178 : vector<1x16x64xf32> to vector<16x64xf32>
    %180 = arith.mulf %179, %171 : vector<16x64xf32>
    %181 = vector.extract_strided_slice %81 {offsets = [6, 0], sizes = [1, 64], strides = [1, 1]} : vector<8x64xf32> to vector<1x64xf32>
    %182 = vector.broadcast %176 : vector<16x1xf32> to vector<16x64xf32>
    %183 = vector.broadcast %181 : vector<1x64xf32> to vector<16x64xf32>
    %184 = arith.mulf %182, %183 : vector<16x64xf32>
    %185 = arith.addf %180, %184 : vector<16x64xf32>
    %186 = vector.broadcast %177 : vector<16x1xf32> to vector<16x64xf32>
    %187 = arith.mulf %185, %186 : vector<16x64xf32>
    %cst_84 = arith.constant dense<0.000000e+00> : vector<64xf32>
    %188 = vector.multi_reduction <add>, %187, %cst_84 [0] : vector<16x64xf32> to vector<64xf32>
    %189 = vector.shape_cast %188 : vector<64xf32> to vector<1x64xf32>
    %190 = vector.extract_strided_slice %91 {offsets = [0, 7], sizes = [16, 1], strides = [1, 1]} : vector<32x8xf32> to vector<16x1xf32>
    %191 = vector.extract_strided_slice %91 {offsets = [16, 7], sizes = [16, 1], strides = [1, 1]} : vector<32x8xf32> to vector<16x1xf32>
    %c7 = arith.constant 7 : index
    %c0_85 = arith.constant 0 : index
    %c0_86 = arith.constant 0 : index
    %192 = vector.load %arg18[%c7, %c0_85, %c0_86] : memref<8x16x64xf32, #tpu.memory_space<vmem>>, vector<1x16x64xf32>
    %193 = vector.shape_cast %192 : vector<1x16x64xf32> to vector<16x64xf32>
    %194 = arith.mulf %193, %185 : vector<16x64xf32>
    %195 = vector.extract_strided_slice %81 {offsets = [7, 0], sizes = [1, 64], strides = [1, 1]} : vector<8x64xf32> to vector<1x64xf32>
    %196 = vector.broadcast %190 : vector<16x1xf32> to vector<16x64xf32>
    %197 = vector.broadcast %195 : vector<1x64xf32> to vector<16x64xf32>
    %198 = arith.mulf %196, %197 : vector<16x64xf32>
    %199 = arith.addf %194, %198 : vector<16x64xf32>
    %200 = vector.broadcast %191 : vector<16x1xf32> to vector<16x64xf32>
    %201 = arith.mulf %199, %200 : vector<16x64xf32>
    %cst_87 = arith.constant dense<0.000000e+00> : vector<64xf32>
    %202 = vector.multi_reduction <add>, %201, %cst_87 [0] : vector<16x64xf32> to vector<64xf32>
    %203 = vector.shape_cast %202 : vector<64xf32> to vector<1x64xf32>
    %c0_i32_88 = arith.constant 0 : i32
    %204 = arith.addi %76, %c0_i32_88 : i32
    %205 = tpu.assume_multiple %204, 8 : i32
    %206 = tpu.concatenate %105, %119, %133, %147, %161, %175, %189, %203 in 0 : vector<1x64xf32>, vector<1x64xf32>, vector<1x64xf32>, vector<1x64xf32>, vector<1x64xf32>, vector<1x64xf32>, vector<1x64xf32>, vector<1x64xf32> -> vector<8x64xf32>
    %207 = arith.index_cast %205 : i32 to index
    %c0_89 = arith.constant 0 : index
    %208 = vector.load %arg15[%207, %c0_89] : memref<8x64xf32, #tpu.memory_space<vmem>>, vector<8x64xf32>
    tpu.vector_store %arg15[%207, %c0_89], %206 {strides = array<i32>} : memref<8x64xf32, #tpu.memory_space<vmem>>, vector<8x64xf32>,
    %c1_i32 = arith.constant 1 : i32
    %c0_90 = arith.constant 0 : index
    %c0_91 = arith.constant 0 : index
    %209 = vector.load %arg19[%c0_90, %c0_91] : memref<16x64xf32, #tpu.memory_space<vmem>>, vector<16x64xf32>
    tpu.vector_store %arg19[%c0_90, %c0_91], %199 {strides = array<i32>} : memref<16x64xf32, #tpu.memory_space<vmem>>, vector<16x64xf32>,
    %c0_92 = arith.constant 0 : index
    %c0_93 = arith.constant 0 : index
    %210 = vector.load %arg15[%c0_92, %c0_93] : memref<8x64xf32, #tpu.memory_space<vmem>>, vector<8x64xf32>
    %c0_94 = arith.constant 0 : index
    %c0_95 = arith.constant 0 : index
    %211 = vector.load %arg13[%c0_94, %c0_95] : memref<8x64xf32, #tpu.memory_space<vmem>>, vector<8x64xf32>
    %c0_96 = arith.constant 0 : index
    %c0_97 = arith.constant 0 : index
    %212 = vector.load %arg10[%c0_96, %c0_97] : memref<1x64xf32, #tpu.memory_space<vmem>>, vector<1x64xf32>
    %213 = vector.broadcast %212 : vector<1x64xf32> to vector<8x64xf32>
    %214 = arith.mulf %211, %213 : vector<8x64xf32>
    %215 = arith.addf %210, %214 : vector<8x64xf32>
    %c0_98 = arith.constant 0 : index
    %c0_99 = arith.constant 0 : index
    %216 = vector.load %arg16[%c0_98, %c0_99] : memref<8x64xf32, #tpu.memory_space<vmem>>, vector<8x64xf32>
    %217 = arith.mulf %215, %216 : vector<8x64xf32>
    %218 = arith.truncf %217 : vector<8x64xf32> to vector<8x64xbf16>
    %c0_100 = arith.constant 0 : index
    %c0_101 = arith.constant 0 : index
    %219 = vector.load %arg11[%c0_100, %c0_101] : memref<64x32xbf16, #tpu.memory_space<vmem>>, vector<64x32xbf16>
    %cst_102 = arith.constant dense<0.000000e+00> : vector<8x32xf32>
    %220 = tpu.matmul %218, %219, %cst_102 {dimension_numbers = #tpu.dot_dimension_numbers<[1], [0], [0], [1], [0, 0, 1, 1], [], []>} : vector<8x64xbf16>, vector<64x32xbf16>, vector<8x32xf32> -> vector<8x32xf32>
    %c0_103 = arith.constant 0 : index
    %c0_104 = arith.constant 0 : index
    %c0_105 = arith.constant 0 : index
    %221 = vector.load %arg12[%c0_103, %c0_104, %c0_105] : memref<1x8x32xf32, #tpu.memory_space<vmem>>, vector<1x8x32xf32>
    %222 = vector.shape_cast %221 : vector<1x8x32xf32> to vector<8x32xf32>
    %223 = vector.shape_cast %220 : vector<8x32xf32> to vector<1x8x32xf32>
    tpu.vector_store %arg12[%c0_103, %c0_104, %c0_105], %223 {strides = array<i32>} : memref<1x8x32xf32, #tpu.memory_space<vmem>>, vector<1x8x32xf32>,
    return
  }
  func.func @transform_0(%arg0: i32, %arg1: i32) -> (i32, i32, i32) {
    %c0_i32 = arith.constant 0 : i32
    %c0_i32_0 = arith.constant 0 : i32
    return %arg0, %arg1, %c0_i32 : i32, i32, i32
  }
  func.func @transform_1(%arg0: i32, %arg1: i32) -> (i32, i32) {
    %c0_i32 = arith.constant 0 : i32
    %c0_i32_0 = arith.constant 0 : i32
    %c0_i32_1 = arith.constant 0 : i32
    return %c0_i32, %c0_i32_0 : i32, i32
  }
  func.func @transform_2(%arg0: i32, %arg1: i32) -> (i32, i32) {
    %c0_i32 = arith.constant 0 : i32
    %c0_i32_0 = arith.constant 0 : i32
    %c0_i32_1 = arith.constant 0 : i32
    return %c0_i32, %c0_i32_0 : i32, i32
  }
  func.func @transform_3(%arg0: i32, %arg1: i32) -> (i32, i32) {
    %c0_i32 = arith.constant 0 : i32
    %c0_i32_0 = arith.constant 0 : i32
    %c0_i32_1 = arith.constant 0 : i32
    return %c0_i32, %c0_i32_0 : i32, i32
  }
  func.func @transform_4(%arg0: i32, %arg1: i32) -> (i32, i32) {
    %c0_i32 = arith.constant 0 : i32
    %c0_i32_0 = arith.constant 0 : i32
    %c0_i32_1 = arith.constant 0 : i32
    return %c0_i32, %c0_i32_0 : i32, i32
  }
  func.func @transform_5(%arg0: i32, %arg1: i32) -> (i32, i32) {
    %c0_i32 = arith.constant 0 : i32
    %c0_i32_0 = arith.constant 0 : i32
    %c0_i32_1 = arith.constant 0 : i32
    return %c0_i32, %c0_i32_0 : i32, i32
  }
  func.func @transform_6(%arg0: i32, %arg1: i32) -> (i32, i32) {
    %c0_i32 = arith.constant 0 : i32
    %c0_i32_0 = arith.constant 0 : i32
    %c0_i32_1 = arith.constant 0 : i32
    return %c0_i32, %c0_i32_0 : i32, i32
  }
  func.func @transform_7(%arg0: i32, %arg1: i32) -> (i32, i32) {
    %c0_i32 = arith.constant 0 : i32
    %c0_i32_0 = arith.constant 0 : i32
    %c0_i32_1 = arith.constant 0 : i32
    return %c0_i32, %c0_i32_0 : i32, i32
  }
  func.func @transform_8(%arg0: i32, %arg1: i32) -> (i32, i32) {
    %c0_i32 = arith.constant 0 : i32
    %c0_i32_0 = arith.constant 0 : i32
    %c0_i32_1 = arith.constant 0 : i32
    return %c0_i32, %c0_i32_0 : i32, i32
  }
  func.func @transform_9(%arg0: i32, %arg1: i32) -> (i32, i32) {
    %c0_i32 = arith.constant 0 : i32
    %c0_i32_0 = arith.constant 0 : i32
    %c0_i32_1 = arith.constant 0 : i32
    return %c0_i32, %c0_i32_0 : i32, i32
  }
  func.func @transform_10(%arg0: i32, %arg1: i32) -> (i32, i32, i32) {
    %c0_i32 = arith.constant 0 : i32
    %c0_i32_0 = arith.constant 0 : i32
    return %arg0, %arg1, %c0_i32 : i32, i32, i32
  }
}

</mosaic_0001>

<llo_original>
// kernel: tpu_custom_call.1
$region0: #{tpu_custom_call.1}
  #allocation0 [shape = 'u32[]', space=smem, size = 0x4, offset = 0x4, fixed_abs, tag = 'smem constant byte address 0x4 - core index']
  #allocation1 [shape = 'u32[144,128]{1,0:T(1,128)}', space=vmem, size = 0x12000, scoped, tag = 'internal scratch']
  #allocation2 [shape = 'f32[8,64]{1,0:T(8,128)}', space=vmem, size = 0x1000, scoped, tag = 'scratch operand']
  #allocation3 [shape = 'f32[8,64]{1,0:T(8,128)}', space=vmem, size = 0x1000, scoped, tag = 'scratch operand']
  #allocation4 [shape = 'f32[8,64]{1,0:T(8,128)}', space=vmem, size = 0x1000, scoped, tag = 'scratch operand']
  #allocation5 [shape = 'f32[8,64]{1,0:T(8,128)}', space=vmem, size = 0x1000, scoped, tag = 'scratch operand']
  #allocation6 [shape = 'f32[8,32]{1,0:T(8,128)}', space=vmem, size = 0x1000, scoped, tag = 'scratch operand']
  #allocation7 [shape = 'f32[8,16,64]{2,1,0:T(8,128)}', space=vmem, size = 0x10000, scoped, tag = 'scratch operand']
  #allocation8 [shape = 'f32[16,64]{1,0:T(8,128)}', space=vmem, size = 0x2000, scoped, tag = 'scratch operand']
  #allocation9 [shape = 'f32[11,64]{1,0:T(8,128)}', space=vmem, size = 0x2000, scoped, tag = 'scratch operand']
  %s0 = inlined_call_operand.vmem [shape: f32[2,8,32], index: 0, kind: input, shape index: {}]
  %s1 = inlined_call_operand.vmem [shape: bf16[32,128], index: 1, kind: input, shape index: {}]
  %s2 = inlined_call_operand.vmem [shape: f32[4,64], index: 2, kind: input, shape index: {}]
  %s3 = inlined_call_operand.vmem [shape: f32[1,64], index: 3, kind: input, shape index: {}]
  %s4 = inlined_call_operand.vmem [shape: bf16[64,36], index: 4, kind: input, shape index: {}]
  %s5 = inlined_call_operand.vmem [shape: bf16[4,64], index: 5, kind: input, shape index: {}]
  %s6 = inlined_call_operand.vmem [shape: f32[1,64], index: 6, kind: input, shape index: {}]
  %s7 = inlined_call_operand.vmem [shape: f32[16,64], index: 7, kind: input, shape index: {}]
  %s8 = inlined_call_operand.vmem [shape: f32[1,64], index: 8, kind: input, shape index: {}]
  %s9 = inlined_call_operand.vmem [shape: bf16[64,32], index: 9, kind: input, shape index: {}]
  %s10 = inlined_call_operand.hbm [shape: f32[2,8,32], index: 10, kind: output, shape index: {}]
  %s11 = sld [smem:[#allocation0]]
  $region77: #{tpu_custom_call.1} parent=0
    _
  %s13 = ssub.s32 1, %s11
  %s14 = scalar_select 0, %s13, %s11
  $region1: #{tpu_custom_call.1} parent=0
    #allocation10 [shape = 'u8[8192]{0}', space=vmem, size = 0x2000, scoped, tag = 'output window, operand 0']
    #allocation11 [shape = 's32[2]{0}', space=sflag, size = 0x8, scoped, tag = 'scoped memory for tpu_custom_call.1']
    %15 = vsyncpa [#allocation11], 0
    %s16 = scalar_lea.sflag [#allocation11], 1
    %17 = vsyncpa %s16, 0
    loop: start=0, step=1, limit=4
    $region2: #{tpu_custom_call.1} parent=1 // loop_pre_header
      _
    $region3: #{tpu_custom_call.1} parent=1 // loop_header
      %s19 = sphi 0, %s23
      %p20 = scmp.ge.s32.totalorder %s19, 4
      %s26 = sphi 0, %s38
      %s27 = sphi 0, %s34
      %s28 = sphi 0, %s26
      %s29 = sphi 0, %s27
      %s30 = sphi 0, %s28
      %s31 = sphi 0, %s29
      %s43 = sphi 0, %s45
      %s46 = sphi 0, %s43
      %s47 = sphi 0, %s46
      %s63 = sphi 0, %s47
      %s67 = sphi 0, %s67
      %s69 = sphi 0, %s67
      %s70 = sphi 0, %s69
      %s84 = sphi 0, %s70
      %s88 = sphi 0, %s88
      %s90 = sphi 0, %s88
      %s91 = sphi 0, %s90
      %s105 = sphi 0, %s91
      %s109 = sphi 0, %s109
      %s111 = sphi 0, %s109
      %s112 = sphi 0, %s111
      %s126 = sphi 0, %s112
      %s130 = sphi 0, %s130
      %s132 = sphi 0, %s130
      %s133 = sphi 0, %s132
      %s147 = sphi 0, %s133
      %s151 = sphi 0, %s151
      %s153 = sphi 0, %s151
      %s154 = sphi 0, %s153
      %s168 = sphi 0, %s154
      %s172 = sphi 0, %s172
      %s174 = sphi 0, %s172
      %s175 = sphi 0, %s174
      %s189 = sphi 0, %s175
      %s193 = sphi 0, %s193
      %s195 = sphi 0, %s193
      %s196 = sphi 0, %s195
      %s210 = sphi 0, %s196
      %s214 = sphi 0, %s214
      %s216 = sphi 0, %s214
      %s217 = sphi 0, %s216
      %s231 = sphi 0, %s217
      %s235 = sphi 0, %s235
      %s237 = sphi 0, %s235
      %s238 = sphi 0, %s237
      %s252 = sphi 0, %s238
      %s260 = sphi 0, %s262
      %s263 = sphi 0, %s260
      %s264 = sphi 0, %s263
      %s280 = sphi 0, %s264
    $region4: #{tpu_custom_call.1} parent=1 // loop_header_branch
      %22 = sbr.rel (%p20) target = $region8
    $region5: #{tpu_custom_call.1} parent=1 // loop_body
      %s24 = ssub.s32 %s19, 1
      %s25 = ssub.s32 %s19, 2
      %s32 = sadd.s32 1, %s27
      %p33 = scmp.ge.s32.totalorder %s32, 1
      %s34 = scalar_select %p33, 0, %s32
      %s35 = sadd.s32 1, %s26
      %s36 = scalar_select %p33, %s35, %s26
      %p37 = scmp.ge.s32.totalorder %s36, 2
      %s38 = scalar_select %p37, 0, %s36
      %s39 = ssub.s32 %s26, %s38
      %s40 = ssub.s32 %s27, %s34
      %s41 = sor.u32 %s39, %s40
      %p42 = scmp.eq.s32.totalorder %s41, 0
      %s44 = sadd.s32 %s43, 1
      %s45 = scalar_select %p42, %s43, %s44
      %p48 = pneg %p42
      %p49 = scmp.eq.s32.totalorder %s19, 1
      %p50 = por %p48, %p49
      %p51 = scmp.ne.s32.totalorder %s43, %s46
      %p52 = scmp.eq.s32.totalorder %s19, 0
      %p53 = por %p51, %p52
      %p54 = scmp.ne.s32.totalorder %s43, %s46
      %p55 = scmp.eq.s32.totalorder %s24, 1
      %p56 = por %p54, %p55
      %p57 = scmp.ne.s32.totalorder %s46, %s47
      %p58 = scmp.eq.s32.totalorder %s24, 0
      %p59 = por %p57, %p58
      %p60 = scmp.ne.s32.totalorder %s46, %s47
      %p61 = scmp.eq.s32.totalorder %s25, 1
      %p62 = por %p60, %p61
      %p64 = scmp.ne.s32.totalorder %s47, %s63
      %p65 = scmp.eq.s32.totalorder %s25, 0
      %p66 = por %p64, %p65
      %s68 = sadd.s32 %s67, 1
      %p71 = scmp.eq.s32.totalorder %s19, 1
      %p72 = scmp.ne.s32.totalorder %s67, %s69
      %p73 = scmp.eq.s32.totalorder %s19, 0
      %p74 = por %p72, %p73
      %p75 = scmp.ne.s32.totalorder %s67, %s69
      %p76 = scmp.eq.s32.totalorder %s24, 1
      %p77 = por %p75, %p76
      %p78 = scmp.ne.s32.totalorder %s69, %s70
      %p79 = scmp.eq.s32.totalorder %s24, 0
      %p80 = por %p78, %p79
      %p81 = scmp.ne.s32.totalorder %s69, %s70
      %p82 = scmp.eq.s32.totalorder %s25, 1
      %p83 = por %p81, %p82
      %p85 = scmp.ne.s32.totalorder %s70, %s84
      %p86 = scmp.eq.s32.totalorder %s25, 0
      %p87 = por %p85, %p86
      %s89 = sadd.s32 %s88, 1
      %p92 = scmp.eq.s32.totalorder %s19, 1
      %p93 = scmp.ne.s32.totalorder %s88, %s90
      %p94 = scmp.eq.s32.totalorder %s19, 0
      %p95 = por %p93, %p94
      %p96 = scmp.ne.s32.totalorder %s88, %s90
      %p97 = scmp.eq.s32.totalorder %s24, 1
      %p98 = por %p96, %p97
      %p99 = scmp.ne.s32.totalorder %s90, %s91
      %p100 = scmp.eq.s32.totalorder %s24, 0
      %p101 = por %p99, %p100
      %p102 = scmp.ne.s32.totalorder %s90, %s91
      %p103 = scmp.eq.s32.totalorder %s25, 1
      %p104 = por %p102, %p103
      %p106 = scmp.ne.s32.totalorder %s91, %s105
      %p107 = scmp.eq.s32.totalorder %s25, 0
      %p108 = por %p106, %p107
      %s110 = sadd.s32 %s109, 1
      %p113 = scmp.eq.s32.totalorder %s19, 1
      %p114 = scmp.ne.s32.totalorder %s109, %s111
      %p115 = scmp.eq.s32.totalorder %s19, 0
      %p116 = por %p114, %p115
      %p117 = scmp.ne.s32.totalorder %s109, %s111
      %p118 = scmp.eq.s32.totalorder %s24, 1
      %p119 = por %p117, %p118
      %p120 = scmp.ne.s32.totalorder %s111, %s112
      %p121 = scmp.eq.s32.totalorder %s24, 0
      %p122 = por %p120, %p121
      %p123 = scmp.ne.s32.totalorder %s111, %s112
      %p124 = scmp.eq.s32.totalorder %s25, 1
      %p125 = por %p123, %p124
      %p127 = scmp.ne.s32.totalorder %s112, %s126
      %p128 = scmp.eq.s32.totalorder %s25, 0
      %p129 = por %p127, %p128
      %s131 = sadd.s32 %s130, 1
      %p134 = scmp.eq.s32.totalorder %s19, 1
      %p135 = scmp.ne.s32.totalorder %s130, %s132
      %p136 = scmp.eq.s32.totalorder %s19, 0
      %p137 = por %p135, %p136
      %p138 = scmp.ne.s32.totalorder %s130, %s132
      %p139 = scmp.eq.s32.totalorder %s24, 1
      %p140 = por %p138, %p139
      %p141 = scmp.ne.s32.totalorder %s132, %s133
      %p142 = scmp.eq.s32.totalorder %s24, 0
      %p143 = por %p141, %p142
      %p144 = scmp.ne.s32.totalorder %s132, %s133
      %p145 = scmp.eq.s32.totalorder %s25, 1
      %p146 = por %p144, %p145
      %p148 = scmp.ne.s32.totalorder %s133, %s147
      %p149 = scmp.eq.s32.totalorder %s25, 0
      %p150 = por %p148, %p149
      %s152 = sadd.s32 %s151, 1
      %p155 = scmp.eq.s32.totalorder %s19, 1
      %p156 = scmp.ne.s32.totalorder %s151, %s153
      %p157 = scmp.eq.s32.totalorder %s19, 0
      %p158 = por %p156, %p157
      %p159 = scmp.ne.s32.totalorder %s151, %s153
      %p160 = scmp.eq.s32.totalorder %s24, 1
      %p161 = por %p159, %p160
      %p162 = scmp.ne.s32.totalorder %s153, %s154
      %p163 = scmp.eq.s32.totalorder %s24, 0
      %p164 = por %p162, %p163
      %p165 = scmp.ne.s32.totalorder %s153, %s154
      %p166 = scmp.eq.s32.totalorder %s25, 1
      %p167 = por %p165, %p166
      %p169 = scmp.ne.s32.totalorder %s154, %s168
      %p170 = scmp.eq.s32.totalorder %s25, 0
      %p171 = por %p169, %p170
      %s173 = sadd.s32 %s172, 1
      %p176 = scmp.eq.s32.totalorder %s19, 1
      %p177 = scmp.ne.s32.totalorder %s172, %s174
      %p178 = scmp.eq.s32.totalorder %s19, 0
      %p179 = por %p177, %p178
      %p180 = scmp.ne.s32.totalorder %s172, %s174
      %p181 = scmp.eq.s32.totalorder %s24, 1
      %p182 = por %p180, %p181
      %p183 = scmp.ne.s32.totalorder %s174, %s175
      %p184 = scmp.eq.s32.totalorder %s24, 0
      %p185 = por %p183, %p184
      %p186 = scmp.ne.s32.totalorder %s174, %s175
      %p187 = scmp.eq.s32.totalorder %s25, 1
      %p188 = por %p186, %p187
      %p190 = scmp.ne.s32.totalorder %s175, %s189
      %p191 = scmp.eq.s32.totalorder %s25, 0
      %p192 = por %p190, %p191
      %s194 = sadd.s32 %s193, 1
      %p197 = scmp.eq.s32.totalorder %s19, 1
      %p198 = scmp.ne.s32.totalorder %s193, %s195
      %p199 = scmp.eq.s32.totalorder %s19, 0
      %p200 = por %p198, %p199
      %p201 = scmp.ne.s32.totalorder %s193, %s195
      %p202 = scmp.eq.s32.totalorder %s24, 1
      %p203 = por %p201, %p202
      %p204 = scmp.ne.s32.totalorder %s195, %s196
      %p205 = scmp.eq.s32.totalorder %s24, 0
      %p206 = por %p204, %p205
      %p207 = scmp.ne.s32.totalorder %s195, %s196
      %p208 = scmp.eq.s32.totalorder %s25, 1
      %p209 = por %p207, %p208
      %p211 = scmp.ne.s32.totalorder %s196, %s210
      %p212 = scmp.eq.s32.totalorder %s25, 0
      %p213 = por %p211, %p212
      %s215 = sadd.s32 %s214, 1
      %p218 = scmp.eq.s32.totalorder %s19, 1
      %p219 = scmp.ne.s32.totalorder %s214, %s216
      %p220 = scmp.eq.s32.totalorder %s19, 0
      %p221 = por %p219, %p220
      %p222 = scmp.ne.s32.totalorder %s214, %s216
      %p223 = scmp.eq.s32.totalorder %s24, 1
      %p224 = por %p222, %p223
      %p225 = scmp.ne.s32.totalorder %s216, %s217
      %p226 = scmp.eq.s32.totalorder %s24, 0
      %p227 = por %p225, %p226
      %p228 = scmp.ne.s32.totalorder %s216, %s217
      %p229 = scmp.eq.s32.totalorder %s25, 1
      %p230 = por %p228, %p229
      %p232 = scmp.ne.s32.totalorder %s217, %s231
      %p233 = scmp.eq.s32.totalorder %s25, 0
      %p234 = por %p232, %p233
      %s236 = sadd.s32 %s235, 1
      %p239 = scmp.eq.s32.totalorder %s19, 1
      %p240 = scmp.ne.s32.totalorder %s235, %s237
      %p241 = scmp.eq.s32.totalorder %s19, 0
      %p242 = por %p240, %p241
      %p243 = scmp.ne.s32.totalorder %s235, %s237
      %p244 = scmp.eq.s32.totalorder %s24, 1
      %p245 = por %p243, %p244
      %p246 = scmp.ne.s32.totalorder %s237, %s238
      %p247 = scmp.eq.s32.totalorder %s24, 0
      %p248 = por %p246, %p247
      %p249 = scmp.ne.s32.totalorder %s237, %s238
      %p250 = scmp.eq.s32.totalorder %s25, 1
      %p251 = por %p249, %p250
      %p253 = scmp.ne.s32.totalorder %s238, %s252
      %p254 = scmp.eq.s32.totalorder %s25, 0
      %p255 = por %p253, %p254
      %s256 = ssub.s32 %s26, %s38
      %s257 = ssub.s32 %s27, %s34
      %s258 = sor.u32 %s256, %s257
      %p259 = scmp.eq.s32.totalorder %s258, 0
      %s261 = sadd.s32 %s260, 1
      %s262 = scalar_select %p259, %s260, %s261
      %p265 = pneg %p259
      %p266 = scmp.eq.s32.totalorder %s19, 1
      %p267 = por %p265, %p266
      %p268 = scmp.ne.s32.totalorder %s260, %s263
      %p269 = scmp.eq.s32.totalorder %s19, 0
      %p270 = por %p268, %p269
      %p271 = scmp.ne.s32.totalorder %s260, %s263
      %p272 = scmp.eq.s32.totalorder %s24, 1
      %p273 = por %p271, %p272
      %p274 = scmp.ne.s32.totalorder %s263, %s264
      %p275 = scmp.eq.s32.totalorder %s24, 0
      %p276 = por %p274, %p275
      %p277 = scmp.ne.s32.totalorder %s263, %s264
      %p278 = scmp.eq.s32.totalorder %s25, 1
      %p279 = por %p277, %p278
      %p281 = scmp.ne.s32.totalorder %s264, %s280
      %p282 = scmp.eq.s32.totalorder %s25, 0
      %p283 = por %p281, %p282
      %p284 = scmp.le.s32.totalorder 1, %s19
      %p285 = scmp.lt.s32.totalorder %s19, 3
      %p286 = pnand %p284, %p285
      %p287 = pneg %p286
      // Predicated region
      $region9: #{tpu_custom_call.1} parent=5 // pred_check
        _
      $region10: #{tpu_custom_call.1} parent=5 // pred_check_branch
        %289 = sbr.rel (%p286) target = $region12
      $region11: #{tpu_custom_call.1} parent=5 // pred_region
        %s290 = ssub.s32 %s19, 1
        // Predicated region
        $region13: #{tpu_custom_call.1} parent=11 // pred_check
          %p291 = pneg %p80
        $region14: #{tpu_custom_call.1} parent=11 // pred_check_branch
          %293 = sbr.rel (%p291) target = $region16
        $region15: #{tpu_custom_call.1} parent=11 // pred_region
          _
        $region16: #{tpu_custom_call.1} parent=11 // pred_fallthru
          _
        // Predicated region
        $region17: #{tpu_custom_call.1} parent=11 // pred_check
          %p294 = pneg %p101
        $region18: #{tpu_custom_call.1} parent=11 // pred_check_branch
          %296 = sbr.rel (%p294) target = $region20
        $region19: #{tpu_custom_call.1} parent=11 // pred_region
          _
        $region20: #{tpu_custom_call.1} parent=11 // pred_fallthru
          _
        // Predicated region
        $region21: #{tpu_custom_call.1} parent=11 // pred_check
          %p297 = pneg %p122
        $region22: #{tpu_custom_call.1} parent=11 // pred_check_branch
          %299 = sbr.rel (%p297) target = $region24
        $region23: #{tpu_custom_call.1} parent=11 // pred_region
          _
        $region24: #{tpu_custom_call.1} parent=11 // pred_fallthru
          _
        // Predicated region
        $region25: #{tpu_custom_call.1} parent=11 // pred_check
          %p300 = pneg %p143
        $region26: #{tpu_custom_call.1} parent=11 // pred_check_branch
          %302 = sbr.rel (%p300) target = $region28
        $region27: #{tpu_custom_call.1} parent=11 // pred_region
          _
        $region28: #{tpu_custom_call.1} parent=11 // pred_fallthru
          _
        // Predicated region
        $region29: #{tpu_custom_call.1} parent=11 // pred_check
          %p303 = pneg %p164
        $region30: #{tpu_custom_call.1} parent=11 // pred_check_branch
          %305 = sbr.rel (%p303) target = $region32
        $region31: #{tpu_custom_call.1} parent=11 // pred_region
          _
        $region32: #{tpu_custom_call.1} parent=11 // pred_fallthru
          _
        // Predicated region
        $region33: #{tpu_custom_call.1} parent=11 // pred_check
          %p306 = pneg %p185
        $region34: #{tpu_custom_call.1} parent=11 // pred_check_branch
          %308 = sbr.rel (%p306) target = $region36
        $region35: #{tpu_custom_call.1} parent=11 // pred_region
          _
        $region36: #{tpu_custom_call.1} parent=11 // pred_fallthru
          _
        // Predicated region
        $region37: #{tpu_custom_call.1} parent=11 // pred_check
          %p309 = pneg %p206
        $region38: #{tpu_custom_call.1} parent=11 // pred_check_branch
          %311 = sbr.rel (%p309) target = $region40
        $region39: #{tpu_custom_call.1} parent=11 // pred_region
          _
        $region40: #{tpu_custom_call.1} parent=11 // pred_fallthru
          _
        // Predicated region
        $region41: #{tpu_custom_call.1} parent=11 // pred_check
          %p312 = pneg %p227
        $region42: #{tpu_custom_call.1} parent=11 // pred_check_branch
          %314 = sbr.rel (%p312) target = $region44
        $region43: #{tpu_custom_call.1} parent=11 // pred_region
          _
        $region44: #{tpu_custom_call.1} parent=11 // pred_fallthru
          _
        // Predicated region
        $region45: #{tpu_custom_call.1} parent=11 // pred_check
          %p315 = pneg %p248
        $region46: #{tpu_custom_call.1} parent=11 // pred_check_branch
          %317 = sbr.rel (%p315) target = $region48
        $region47: #{tpu_custom_call.1} parent=11 // pred_region
          _
        $region48: #{tpu_custom_call.1} parent=11 // pred_fallthru
          _
      $region12: #{tpu_custom_call.1} parent=5 // pred_fallthru
        _
      %p318 = scmp.lt.s32.totalorder %s19, 2
      // Predicated region
      $region49: #{tpu_custom_call.1} parent=5 // pred_check
        %p319 = pneg %p318
      $region50: #{tpu_custom_call.1} parent=5 // pred_check_branch
        %321 = sbr.rel (%p319) target = $region52
      $region51: #{tpu_custom_call.1} parent=5 // pred_region
        // Predicated region
        $region53: #{tpu_custom_call.1} parent=51 // pred_check
          %p322 = pneg %p53
        $region54: #{tpu_custom_call.1} parent=51 // pred_check_branch
          %324 = sbr.rel (%p322) target = $region56
        $region55: #{tpu_custom_call.1} parent=51 // pred_region
          %p325 = scmp.lt.s32.totalorder %s26, 1
          %s326 = scalar_select %p325, %s26, 1
          %p327 = scmp.lt.s32.totalorder %s27, 0
          %s328 = scalar_select %p327, %s27, 0
          %s329 = sadd.s32 %s328, %s326
          %s330 = smul.addr %s329, 8
          %s331 = scalar_lea.vmem %s0, %s330
        $region56: #{tpu_custom_call.1} parent=51 // pred_fallthru
          _
      $region52: #{tpu_custom_call.1} parent=5 // pred_fallthru
        _
      %p332 = scmp.le.s32.totalorder 1, %s19
      %p333 = scmp.lt.s32.totalorder %s19, 3
      %p334 = pnand %p332, %p333
      %p335 = pneg %p334
      // Predicated region
      $region57: #{tpu_custom_call.1} parent=5 // pred_check
        _
      $region58: #{tpu_custom_call.1} parent=5 // pred_check_branch
        %337 = sbr.rel (%p334) target = $region60
      $region59: #{tpu_custom_call.1} parent=5 // pred_region
        %s338 = ssub.s32 %s19, 1
        %p339 = scmp.lt.s32.totalorder %s28, 1
        %s340 = scalar_select %p339, %s28, 1
        %p341 = scmp.lt.s32.totalorder %s29, 0
        %s342 = scalar_select %p341, %s29, 0
        %s343 = sadd.s32 %s342, %s340
        %s344 = smul.addr %s343, 8
        %s345 = scalar_lea.vmem %s0, %s344
        %p346 = pneg %p59
        %p347 = pneg %p56
        %p348 = pneg %p80
        %p349 = pneg %p77
        %p350 = pneg %p101
        %p351 = pneg %p98
        %p352 = pneg %p122
        %p353 = pneg %p119
        %p354 = pneg %p143
        %p355 = pneg %p140
        %p356 = pneg %p164
        %p357 = pneg %p161
        %p358 = pneg %p185
        %p359 = pneg %p182
        %p360 = pneg %p206
        %p361 = pneg %p203
        %p362 = pneg %p227
        %p363 = pneg %p224
        %p364 = pneg %p248
        %p365 = pneg %p245
        %p366 = pneg %p276
        %p367 = pneg %p273
        %s368 = sand.u32 %s263, 1
        %s369 = scalar_lea.sflag [#allocation11], %s368
        %s370 = sand.u32 %s263, 1
        %s371 = smul.addr %s370, 8
        %s372 = scalar_lea.vmem [#allocation10], %s371
        %p373 = scmp.lt.s32.totalorder %s28, 1
        %s374 = scalar_select %p373, %s28, 1
        %p375 = scmp.lt.s32.totalorder %s29, 0
        %s376 = scalar_select %p375, %s29, 0
        %s377 = sadd.s32 %s376, %s374
        %s378 = smul.addr %s377, 8
        %s379 = scalar_lea.vmem %s0, %s378
        %p381 = scmp.eq.s32.totalorder %s29, 0
        // Predicated region
        $region61: #{tpu_custom_call.1} parent=59 // pred_check
          %p382 = pneg %p381
        $region62: #{tpu_custom_call.1} parent=59 // pred_check_branch
          %384 = sbr.rel (%p382) target = $region64
        $region63: #{tpu_custom_call.1} parent=59 // pred_region
          %vm385 = vcmask 523264
          %386 = vst.msk [vmem:[#allocation8] sm:$0xff] %vm385, 0.0
          %387 = vst.msk [vmem:[#allocation8 + $0x8] sm:$0xff] %vm385, 0.0
          %388 = vst.msk [vmem:[#allocation9] sm:$0xff] %vm385, 0.0
          %vm389 = vcmask 518144
          %390 = vst.msk [vmem:[#allocation9 + $0x8] sm:$0x7] %vm389, 0.0
        $region64: #{tpu_custom_call.1} parent=59 // pred_fallthru
          _
        %v391 = vld [vmem:[%s379] sm:$0xff]
        %v392 = vpack.c.bf16 %v391, %v391
        %v393 = vld [vmem:[%s1] sm:$0xf]
        %v394 = vld [vmem:[%s1 + $0x4] sm:$0xf]
        %v395 = vld [vmem:[%s1 + $0x8] sm:$0xf]
        %v396 = vld [vmem:[%s1 + $0xc] sm:$0xf]
        %v401 = vunpack.c.l.b16 %v393
        %v402 = vunpack.c.l.b16 %v394
        %v403 = vunpack.c.l.b16 %v395
        %v404 = vunpack.c.l.b16 %v396
        %v405 = vpack.c.b16 %v402, %v401
        %v406 = vpack.c.b16 %v404, %v403
        %vm409 = vcmask 261120
        %v411 = vsel %vm409, %v392, 0
        %413 = vmatprep.subr.bf16.mxu0 0
        %414 = vmatpush1.bf16.msra.mxu0 0
        %415 = vmatprep.subr.bf16.mxu0 0
        %416 = vmatpush1.bf16.msra.mxu0 0
        %417 = vmatprep.subr.bf16.mxu0 0
        %418 = vmatpush1.bf16.msra.mxu0 0
        %419 = vmatprep.subr.bf16.mxu0 0
        %420 = vmatpush1.bf16.msra.mxu0 0
        %421 = vmatprep.subr.bf16.mxu0 0
        %422 = vmatpush1.bf16.msra.mxu0 0
        %423 = vmatprep.subr.bf16.mxu0 0
        %424 = vmatpush1.bf16.msra.mxu0 0
        %425 = vmatprep.subr.bf16.mxu0 0
        %426 = vmatpush1.bf16.msra.mxu0 %v406
        %427 = vmatprep.subr.bf16.mxu0 0
        %428 = vmatpush1.bf16.msra.mxu0 %v405
        %429 = vmatprep.subr.bf16.mxu0 0
        %430 = vmatpush2.bf16.msra.mxu0 0
        %431 = vmatprep.subr.bf16.mxu0 0
        %432 = vmatpush2.bf16.msra.mxu0 0
        %433 = vmatprep.subr.bf16.mxu0 0
        %434 = vmatpush2.bf16.msra.mxu0 0
        %435 = vmatprep.subr.bf16.mxu0 0
        %436 = vmatpush2.bf16.msra.mxu0 0
        %437 = vmatprep.subr.bf16.mxu0 0
        %438 = vmatpush2.bf16.msra.mxu0 0
        %439 = vmatprep.subr.bf16.mxu0 0
        %440 = vmatpush2.bf16.msra.mxu0 0
        %441 = vmatprep.subr.bf16.mxu0 0
        %442 = vmatpush2.bf16.msra.mxu0 0
        %443 = vmatprep.subr.bf16.mxu0 0
        %444 = vmatpush2.bf16.msra.mxu0 0
        %445 = vmatprep.mubr.bf16.mxu0 0
        %446 = vmatmul.mubr.bf16.gmra.mxu0 %v411
        %v447 = vpop.f32.mrf.mxu0
        %v448 = vadd.f32 0.0, %v447
        %v449 = vpop.f32.mrf.mxu0
        %v450 = vpop.f32.mrf.mxu0
        %v451 = vpop.f32.mrf.mxu0
        %452 = vdwg.mxu0
        %v453 = vsub.f32 0.0, %v448
        %v454 = vmul.f32 %v453, 1.442695
        %v455 = vpow.pop %v454
        %v456 = vadd.f32 %v455, 1.0
        %v457 = vrcp.pop %v456
        %v458 = vmul.f32 1.0, %v457
        %v459 = vmul.f32 %v448, %v458
        %461 = vrot.lane.b32.xlu0 %v459, 64
        %v462 = vpop.permute.xlu0 %461
        %vm464 = vcmask 523264
        %465 = vst.msk [vmem:[#allocation5] sm:$0xff] %vm464, %v462
        %466 = vst.msk [vmem:[#allocation9 + $0x3] sm:$0xff] %vm464, %v448
        %v467 = vld [vmem:[%s2 + $0x3] sm:$0x1]
        %v468 = vlaneseq
        %v469 = vshrl.u32 %v468, 7
        %v470 = vsub.s32 0, %v469
        %v471 = vrot.slane %v467, %v470
        %v472 = vmul.f32 %v448, %v471
        %v473 = vld [vmem:[%s3] sm:$0x1]
        %v475 = vlaneseq
        %v476 = vshrl.u32 %v475, 7
        %v477 = vsub.s32 0, %v476
        %v478 = vrot.slane %v473, %v477
        %v480 = vadd.f32 %v472, %v478
        %v481 = vld [vmem:[#allocation9] sm:$0xff]
        %v482 = vld [vmem:[%s2] sm:$0x1]
        %v483 = vlaneseq
        %v484 = vshrl.u32 %v483, 7
        %v485 = vsub.s32 0, %v484
        %v486 = vrot.slane %v482, %v485
        %v487 = vmul.f32 %v481, %v486
        %v488 = vadd.f32 %v480, %v487
        %v489 = vld [vmem:[#allocation9 + $0x1] sm:$0xff]
        %v490 = vld [vmem:[%s2 + $0x1] sm:$0x1]
        %v491 = vlaneseq
        %v492 = vshrl.u32 %v491, 7
        %v493 = vsub.s32 0, %v492
        %v494 = vrot.slane %v490, %v493
        %v495 = vmul.f32 %v489, %v494
        %v496 = vadd.f32 %v488, %v495
        %v497 = vld [vmem:[#allocation9 + $0x2] sm:$0xff]
        %v498 = vld [vmem:[%s2 + $0x2] sm:$0x1]
        %v499 = vlaneseq
        %v500 = vshrl.u32 %v499, 7
        %v501 = vsub.s32 0, %v500
        %v502 = vrot.slane %v498, %v501
        %v503 = vmul.f32 %v497, %v502
        %v504 = vadd.f32 %v496, %v503
        %v505 = vsub.f32 0.0, %v504
        %v506 = vmul.f32 %v505, 1.442695
        %v507 = vpow.pop %v506
        %v508 = vadd.f32 %v507, 1.0
        %v509 = vrcp.pop %v508
        %v510 = vmul.f32 1.0, %v509
        %v511 = vmul.f32 %v504, %v510
        %512 = vst.msk [vmem:[#allocation2] sm:$0xff] %vm464, %v511
        %v513 = vld [vmem:[#allocation9 + $0x8] sm:$0x7]
        %vm514 = vcmask 518144
        %515 = vst.msk [vmem:[#allocation9] sm:$0x7] %vm514, %v513
        %v516 = vld [vmem:[#allocation2] sm:$0xff]
        %v517 = vpack.c.bf16 %v516, %v516
        %v518 = vld [vmem:[%s4] sm:$0xf]
        %v519 = vld [vmem:[%s4 + $0x4] sm:$0xf]
        %v520 = vld [vmem:[%s4 + $0x8] sm:$0xf]
        %v521 = vld [vmem:[%s4 + $0xc] sm:$0xf]
        %v522 = vld [vmem:[%s4 + $0x10] sm:$0xf]
        %v523 = vld [vmem:[%s4 + $0x14] sm:$0xf]
        %v524 = vld [vmem:[%s4 + $0x18] sm:$0xf]
        %v525 = vld [vmem:[%s4 + $0x1c] sm:$0xf]
        %v534 = vunpack.c.l.b16 %v518
        %v535 = vunpack.c.l.b16 %v519
        %v536 = vunpack.c.l.b16 %v520
        %v537 = vunpack.c.l.b16 %v521
        %v538 = vunpack.c.l.b16 %v522
        %v539 = vunpack.c.l.b16 %v523
        %v540 = vunpack.c.l.b16 %v524
        %v541 = vunpack.c.l.b16 %v525
        %v542 = vpack.c.b16 %v535, %v534
        %v543 = vpack.c.b16 %v537, %v536
        %v544 = vpack.c.b16 %v539, %v538
        %v545 = vpack.c.b16 %v541, %v540
        %v551 = vsel %vm464, %v517, 0
        %553 = vmatprep.subr.bf16.mxu0 0
        %554 = vmatpush1.bf16.msra.mxu0 0
        %555 = vmatprep.subr.bf16.mxu0 0
        %556 = vmatpush1.bf16.msra.mxu0 0
        %557 = vmatprep.subr.bf16.mxu0 0
        %558 = vmatpush1.bf16.msra.mxu0 0
        %559 = vmatprep.subr.bf16.mxu0 0
        %560 = vmatpush1.bf16.msra.mxu0 0
        %561 = vmatprep.subr.bf16.mxu0 0
        %562 = vmatpush1.bf16.msra.mxu0 %v545
        %563 = vmatprep.subr.bf16.mxu0 0
        %564 = vmatpush1.bf16.msra.mxu0 %v544
        %565 = vmatprep.subr.bf16.mxu0 0
        %566 = vmatpush1.bf16.msra.mxu0 %v543
        %567 = vmatprep.subr.bf16.mxu0 0
        %568 = vmatpush1.bf16.msra.mxu0 %v542
        %569 = vmatprep.subr.bf16.mxu0 0
        %570 = vmatpush2.bf16.msra.mxu0 0
        %571 = vmatprep.subr.bf16.mxu0 0
        %572 = vmatpush2.bf16.msra.mxu0 0
        %573 = vmatprep.subr.bf16.mxu0 0
        %574 = vmatpush2.bf16.msra.mxu0 0
        %575 = vmatprep.subr.bf16.mxu0 0
        %576 = vmatpush2.bf16.msra.mxu0 0
        %577 = vmatprep.subr.bf16.mxu0 0
        %578 = vmatpush2.bf16.msra.mxu0 0
        %579 = vmatprep.subr.bf16.mxu0 0
        %580 = vmatpush2.bf16.msra.mxu0 0
        %581 = vmatprep.subr.bf16.mxu0 0
        %582 = vmatpush2.bf16.msra.mxu0 0
        %583 = vmatprep.subr.bf16.mxu0 0
        %584 = vmatpush2.bf16.msra.mxu0 0
        %585 = vmatprep.mubr.bf16.mxu0 0
        %586 = vmatmul.mubr.bf16.gmra.mxu0 %v551
        %v587 = vpop.f32.mrf.mxu0
        %v588 = vadd.f32 0.0, %v587
        %v589 = vpop.f32.mrf.mxu0
        %v590 = vpop.f32.mrf.mxu0
        %v591 = vpop.f32.mrf.mxu0
        %592 = vdwg.mxu0
        %v593 = vpack.c.bf16 %v588, %v588
        %v594 = vld [vmem:[%s5] sm:$0x3]
        %v595 = vld [vmem:[%s6] sm:$0x1]
        %v597 = vlaneseq
        %v598 = vshrl.u32 %v597, 7
        %v599 = vsub.s32 0, %v598
        %v600 = vrot.slane %v595, %v599
        %vm602 = vcmask 31744
        %v604 = vsel %vm602, %v593, 0
        %vm606 = vcmask 1041408
        %v608 = vsel %vm606, %v594, 0
        %610 = vmatprep.subr.bf16.mxu0 0
        %611 = vmatpush1.bf16.msra.mxu0 0
        %612 = vmatprep.subr.bf16.mxu0 0
        %613 = vmatpush1.bf16.msra.mxu0 0
        %614 = vmatprep.subr.bf16.mxu0 0
        %615 = vmatpush1.bf16.msra.mxu0 0
        %616 = vmatprep.subr.bf16.mxu0 0
        %617 = vmatpush1.bf16.msra.mxu0 0
        %618 = vmatprep.subr.bf16.mxu0 0
        %619 = vmatpush1.bf16.msra.mxu0 0
        %620 = vmatprep.subr.bf16.mxu0 0
        %621 = vmatpush1.bf16.msra.mxu0 0
        %622 = vmatprep.subr.bf16.mxu0 0
        %623 = vmatpush1.bf16.msra.mxu0 0
        %624 = vmatprep.subr.bf16.mxu0 0
        %625 = vmatpush1.bf16.msra.mxu0 %v608
        %626 = vmatprep.subr.bf16.mxu0 0
        %627 = vmatpush2.bf16.msra.mxu0 0
        %628 = vmatprep.subr.bf16.mxu0 0
        %629 = vmatpush2.bf16.msra.mxu0 0
        %630 = vmatprep.subr.bf16.mxu0 0
        %631 = vmatpush2.bf16.msra.mxu0 0
        %632 = vmatprep.subr.bf16.mxu0 0
        %633 = vmatpush2.bf16.msra.mxu0 0
        %634 = vmatprep.subr.bf16.mxu0 0
        %635 = vmatpush2.bf16.msra.mxu0 0
        %636 = vmatprep.subr.bf16.mxu0 0
        %637 = vmatpush2.bf16.msra.mxu0 0
        %638 = vmatprep.subr.bf16.mxu0 0
        %639 = vmatpush2.bf16.msra.mxu0 0
        %640 = vmatprep.subr.bf16.mxu0 0
        %641 = vmatpush2.bf16.msra.mxu0 0
        %642 = vmatprep.mubr.bf16.mxu0 0
        %643 = vmatmul.mubr.bf16.gmra.mxu0 %v604
        %v644 = vpop.f32.mrf.mxu0
        %v645 = vadd.f32 %v600, %v644
        %v646 = vpop.f32.mrf.mxu0
        %v647 = vpop.f32.mrf.mxu0
        %v648 = vpop.f32.mrf.mxu0
        %649 = vdwg.mxu0
        %vm650 = vcmp.gt.f32.partialorder %v645, 20.0
        %v651 = vmin.f32 %v645, 20.0
        %v652 = vmul.f32 %v651, 1.442695
        %v653 = vpow.pop %v652
        %v654 = vadd.f32 %v653, 1.0
        %v655 = vlog2.pop %v654
        %v656 = vmul.f32 %v655, 0.6931472
        %v657 = vmul.f32 -0.5, %v653
        %v658 = vadd.f32 %v657, 1.0
        %v659 = vmul.f32 %v658, %v653
        %v660 = vand.u32 2147483647, %v653
        %vm661 = vcmp.lt.f32.partialorder %v660, 0.0004427343
        %v662 = vsel %vm661, %v659, %v656
        %v663 = vsel %vm650, %v645, %v662
        %664 = vst.msk [vmem:[#allocation3] sm:$0xff] %vm464, %v663
        %666 = vrot.lane.b32.xlu0 %v588, 124
        %v667 = vpop.permute.xlu0 %666
        %669 = vst.msk [vmem:[#allocation6] sm:$0xff] %vm409, %v667
        %v670 = vld [vmem:[%s7] sm:$0xff]
        %v671 = vld [vmem:[%s7 + $0x8] sm:$0xff]
        %v672 = vld [vmem:[#allocation8] sm:$0xff]
        %v673 = vld [vmem:[#allocation8 + $0x8] sm:$0xff]
        %v674 = vld [vmem:[#allocation3] sm:$0xff]
        %v675 = vld [vmem:[#allocation2] sm:$0xff]
        %v676 = vmul.f32 %v674, %v675
        %v678 = vcombine.high %v674, %v674
        %v680 = vunpack.c.l.s4 1966171168
        %v681 = vunpack.c.0.s8 %v680
        %v682 = vlaneseq
        %v683 = vshrl.u32 %v682, 7
        %v684 = vsub.s32 %v681, %v683
        %v685 = vrot.slane %v674, %v684
        %v687 = vunpack.c.l.s4 1966171168
        %v688 = vunpack.c.0.s8 %v687
        %v689 = vlaneseq
        %v690 = vshrl.u32 %v689, 7
        %v691 = vsub.s32 %v688, %v690
        %v692 = vrot.slane %v678, %v691
        %v693 = vcombine.high %v685, %v685
        %v694 = vcombine.high %v692, %v692
        %v696 = vunpack.c.l.s4 1966171168
        %v697 = vunpack.c.0.s8 %v696
        %v698 = vlaneseq
        %v699 = vshrl.u32 %v698, 7
        %v700 = vsub.s32 %v697, %v699
        %v701 = vrot.slane %v685, %v700
        %v703 = vunpack.c.l.s4 1966171168
        %v704 = vunpack.c.0.s8 %v703
        %v705 = vlaneseq
        %v706 = vshrl.u32 %v705, 7
        %v707 = vsub.s32 %v704, %v706
        %v708 = vrot.slane %v692, %v707
        %v710 = vunpack.c.l.s4 1966171168
        %v711 = vunpack.c.0.s8 %v710
        %v712 = vlaneseq
        %v713 = vshrl.u32 %v712, 7
        %v714 = vsub.s32 %v711, %v713
        %v715 = vrot.slane %v693, %v714
        %v717 = vunpack.c.l.s4 1966171168
        %v718 = vunpack.c.0.s8 %v717
        %v719 = vlaneseq
        %v720 = vshrl.u32 %v719, 7
        %v721 = vsub.s32 %v718, %v720
        %v722 = vrot.slane %v694, %v721
        %v723 = vcombine.high %v701, %v701
        %v724 = vcombine.high %v708, %v708
        %v725 = vcombine.high %v715, %v715
        %v726 = vcombine.high %v722, %v722
        %v727 = vlaneseq
        %v728 = vshrl.u32 %v727, 7
        %v729 = vsub.s32 0, %v728
        %v730 = vrot.slane %v701, %v729
        %v731 = vlaneseq
        %v732 = vshrl.u32 %v731, 7
        %v733 = vsub.s32 0, %v732
        %v734 = vrot.slane %v715, %v733
        %v735 = vlaneseq
        %v736 = vshrl.u32 %v735, 7
        %v737 = vsub.s32 0, %v736
        %v738 = vrot.slane %v723, %v737
        %v739 = vlaneseq
        %v740 = vshrl.u32 %v739, 7
        %v741 = vsub.s32 0, %v740
        %v742 = vrot.slane %v725, %v741
        %v743 = vlaneseq
        %v744 = vshrl.u32 %v743, 7
        %v745 = vsub.s32 0, %v744
        %v746 = vrot.slane %v708, %v745
        %v747 = vlaneseq
        %v748 = vshrl.u32 %v747, 7
        %v749 = vsub.s32 0, %v748
        %v750 = vrot.slane %v722, %v749
        %v751 = vlaneseq
        %v752 = vshrl.u32 %v751, 7
        %v753 = vsub.s32 0, %v752
        %v754 = vrot.slane %v724, %v753
        %v755 = vlaneseq
        %v756 = vshrl.u32 %v755, 7
        %v757 = vsub.s32 0, %v756
        %v758 = vrot.slane %v726, %v757
        %v767 = vmul.f32 %v730, %v670
        %v768 = vmul.f32 %v730, %v671
        %v769 = vmul.f32 %v734, %v670
        %v770 = vmul.f32 %v734, %v671
        %v771 = vmul.f32 %v738, %v670
        %v772 = vmul.f32 %v738, %v671
        %v773 = vmul.f32 %v742, %v670
        %v774 = vmul.f32 %v742, %v671
        %v775 = vmul.f32 %v746, %v670
        %v776 = vmul.f32 %v746, %v671
        %v777 = vmul.f32 %v750, %v670
        %v778 = vmul.f32 %v750, %v671
        %v779 = vmul.f32 %v754, %v670
        %v780 = vmul.f32 %v754, %v671
        %v781 = vmul.f32 %v758, %v670
        %v782 = vmul.f32 %v758, %v671
        %v783 = vmul.f32 %v767, 1.442695
        %v784 = vpow.pop %v783
        %v785 = vmul.f32 %v768, 1.442695
        %v786 = vpow.pop %v785
        %v787 = vmul.f32 %v769, 1.442695
        %v788 = vpow.pop %v787
        %v789 = vmul.f32 %v770, 1.442695
        %v790 = vpow.pop %v789
        %v791 = vmul.f32 %v771, 1.442695
        %v792 = vpow.pop %v791
        %v793 = vmul.f32 %v772, 1.442695
        %v794 = vpow.pop %v793
        %v795 = vmul.f32 %v773, 1.442695
        %v796 = vpow.pop %v795
        %v797 = vmul.f32 %v774, 1.442695
        %v798 = vpow.pop %v797
        %v799 = vmul.f32 %v775, 1.442695
        %v800 = vpow.pop %v799
        %v801 = vmul.f32 %v776, 1.442695
        %v802 = vpow.pop %v801
        %v803 = vmul.f32 %v777, 1.442695
        %v804 = vpow.pop %v803
        %v805 = vmul.f32 %v778, 1.442695
        %v806 = vpow.pop %v805
        %v807 = vmul.f32 %v779, 1.442695
        %v808 = vpow.pop %v807
        %v809 = vmul.f32 %v780, 1.442695
        %v810 = vpow.pop %v809
        %v811 = vmul.f32 %v781, 1.442695
        %v812 = vpow.pop %v811
        %v813 = vmul.f32 %v782, 1.442695
        %v814 = vpow.pop %v813
        %815 = vst.msk [vmem:[#allocation7] sm:$0xff] %vm464, %v784
        %816 = vst.msk [vmem:[#allocation7 + $0x8] sm:$0xff] %vm464, %v786
        %817 = vst.msk [vmem:[#allocation7 + $0x10] sm:$0xff] %vm464, %v788
        %818 = vst.msk [vmem:[#allocation7 + $0x18] sm:$0xff] %vm464, %v790
        %819 = vst.msk [vmem:[#allocation7 + $0x20] sm:$0xff] %vm464, %v792
        %820 = vst.msk [vmem:[#allocation7 + $0x28] sm:$0xff] %vm464, %v794
        %821 = vst.msk [vmem:[#allocation7 + $0x30] sm:$0xff] %vm464, %v796
        %822 = vst.msk [vmem:[#allocation7 + $0x38] sm:$0xff] %vm464, %v798
        %823 = vst.msk [vmem:[#allocation7 + $0x40] sm:$0xff] %vm464, %v800
        %824 = vst.msk [vmem:[#allocation7 + $0x48] sm:$0xff] %vm464, %v802
        %825 = vst.msk [vmem:[#allocation7 + $0x50] sm:$0xff] %vm464, %v804
        %826 = vst.msk [vmem:[#allocation7 + $0x58] sm:$0xff] %vm464, %v806
        %827 = vst.msk [vmem:[#allocation7 + $0x60] sm:$0xff] %vm464, %v808
        %828 = vst.msk [vmem:[#allocation7 + $0x68] sm:$0xff] %vm464, %v810
        %829 = vst.msk [vmem:[#allocation7 + $0x70] sm:$0xff] %vm464, %v812
        %830 = vst.msk [vmem:[#allocation7 + $0x78] sm:$0xff] %vm464, %v814
        %v831 = vld [vmem:[#allocation6] sm:$0xff]
        %832 = vxpose.xlu0.b32.start [1/16] %v831, 128
        %833 = vxpose.xlu0.b32.cont [2/16] 0.0, 128
        %834 = vxpose.xlu0.b32.cont [3/16] 0.0, 128
        %835 = vxpose.xlu0.b32.cont [4/16] 0.0, 128
        %836 = vxpose.xlu0.b32.cont [5/16] 0.0, 128
        %837 = vxpose.xlu0.b32.cont [6/16] 0.0, 128
        %838 = vxpose.xlu0.b32.cont [7/16] 0.0, 128
        %839 = vxpose.xlu0.b32.cont [8/16] 0.0, 128
        %840 = vxpose.xlu0.b32.cont [9/16] 0.0, 128
        %841 = vxpose.xlu0.b32.cont [10/16] 0.0, 128
        %842 = vxpose.xlu0.b32.cont [11/16] 0.0, 128
        %843 = vxpose.xlu0.b32.cont [12/16] 0.0, 128
        %844 = vxpose.xlu0.b32.cont [13/16] 0.0, 128
        %845 = vxpose.xlu0.b32.cont [14/16] 0.0, 128
        %846 = vxpose.xlu0.b32.cont [15/16] 0.0, 128
        %847 = vxpose.xlu0.b32.end [16/16] 0.0, 128
        %v848 = vpop.trf.xlu0
        %v849 = vpop.trf.xlu0
        %v850 = vpop.trf.xlu0
        %v851 = vpop.trf.xlu0
        %v852 = vpop.trf.xlu0
        %v853 = vpop.trf.xlu0
        %v854 = vpop.trf.xlu0
        %v855 = vpop.trf.xlu0
        %v856 = vpop.trf.xlu0
        %v857 = vpop.trf.xlu0
        %v858 = vpop.trf.xlu0
        %v859 = vpop.trf.xlu0
        %v860 = vpop.trf.xlu0
        %v861 = vpop.trf.xlu0
        %v862 = vpop.trf.xlu0
        %v863 = vpop.trf.xlu0
        %v864 = vld [vmem:[#allocation7] sm:$0xff]
        %v865 = vld [vmem:[#allocation7 + $0x8] sm:$0xff]
        %v866 = vmul.f32 %v864, %v672
        %v867 = vmul.f32 %v865, %v673
        %869 = vset.pattern.permute.xlu0 0
        %870 = vperm.xlu0 %869, %v848
        %v871 = vpop.permute.xlu0 %870
        %874 = vset.pattern.permute.xlu0 0
        %875 = vperm.xlu0 %874, %v849
        %v876 = vpop.permute.xlu0 %875
        %v878 = vlaneseq
        %v879 = vshrl.u32 %v878, 7
        %v880 = vsub.s32 0, %v879
        %v881 = vrot.slane %v676, %v880
        %v882 = vmul.f32 %v871, %v881
        %v883 = vmul.f32 %v876, %v881
        %v884 = vadd.f32 %v866, %v882
        %v885 = vadd.f32 %v867, %v883
        %887 = vset.pattern.permute.xlu0 0
        %888 = vperm.xlu0 %887, %v850
        %v889 = vpop.permute.xlu0 %888
        %892 = vset.pattern.permute.xlu0 0
        %893 = vperm.xlu0 %892, %v851
        %v894 = vpop.permute.xlu0 %893
        %v896 = vmul.f32 %v884, %v889
        %v897 = vmul.f32 %v885, %v894
        %v898 = vsel %vm464, %v896, 0.0
        %v899 = vsel %vm464, %v897, 0.0
        %v900 = vadd.f32 %v898, %v899
        %v901 = vrot.slane %v900, 4
        %v902 = vadd.f32 %v900, %v901
        %v903 = vrot.slane %v902, 2
        %v904 = vadd.f32 %v902, %v903
        %v905 = vrot.slane %v904, 1
        %v906 = vadd.f32 %v904, %v905
        %s907 = scalar_lea.vmem [#allocation7], 16
        %v908 = vld [vmem:[%s907] sm:$0xff]
        %v909 = vld [vmem:[%s907 + $0x8] sm:$0xff]
        %v910 = vmul.f32 %v908, %v884
        %v911 = vmul.f32 %v909, %v885
        %912 = vset.pattern.permute.xlu0 1
        %913 = vperm.xlu0 %912, %v848
        %v914 = vpop.permute.xlu0 %913
        %916 = vset.pattern.permute.xlu0 1
        %917 = vperm.xlu0 %916, %v849
        %v918 = vpop.permute.xlu0 %917
        %v920 = vlaneseq
        %v921 = vshrl.u32 %v920, 7
        %v922 = vsub.s32 1, %v921
        %v923 = vrot.slane %v676, %v922
        %v924 = vmul.f32 %v914, %v923
        %v925 = vmul.f32 %v918, %v923
        %v926 = vadd.f32 %v910, %v924
        %v927 = vadd.f32 %v911, %v925
        %928 = vset.pattern.permute.xlu0 1
        %929 = vperm.xlu0 %928, %v850
        %v930 = vpop.permute.xlu0 %929
        %932 = vset.pattern.permute.xlu0 1
        %933 = vperm.xlu0 %932, %v851
        %v934 = vpop.permute.xlu0 %933
        %v936 = vmul.f32 %v926, %v930
        %v937 = vmul.f32 %v927, %v934
        %v938 = vsel %vm464, %v936, 0.0
        %v939 = vsel %vm464, %v937, 0.0
        %v940 = vadd.f32 %v938, %v939
        %v941 = vrot.slane %v940, 4
        %v942 = vadd.f32 %v940, %v941
        %v943 = vrot.slane %v942, 2
        %v944 = vadd.f32 %v942, %v943
        %v945 = vrot.slane %v944, 1
        %v946 = vadd.f32 %v944, %v945
        %s947 = scalar_lea.vmem [#allocation7], 32
        %v948 = vld [vmem:[%s947] sm:$0xff]
        %v949 = vld [vmem:[%s947 + $0x8] sm:$0xff]
        %v950 = vmul.f32 %v948, %v926
        %v951 = vmul.f32 %v949, %v927
        %952 = vset.pattern.permute.xlu0 2
        %953 = vperm.xlu0 %952, %v848
        %v954 = vpop.permute.xlu0 %953
        %956 = vset.pattern.permute.xlu0 2
        %957 = vperm.xlu0 %956, %v849
        %v958 = vpop.permute.xlu0 %957
        %v960 = vlaneseq
        %v961 = vshrl.u32 %v960, 7
        %v962 = vsub.s32 2, %v961
        %v963 = vrot.slane %v676, %v962
        %v964 = vmul.f32 %v954, %v963
        %v965 = vmul.f32 %v958, %v963
        %v966 = vadd.f32 %v950, %v964
        %v967 = vadd.f32 %v951, %v965
        %968 = vset.pattern.permute.xlu0 2
        %969 = vperm.xlu0 %968, %v850
        %v970 = vpop.permute.xlu0 %969
        %972 = vset.pattern.permute.xlu0 2
        %973 = vperm.xlu0 %972, %v851
        %v974 = vpop.permute.xlu0 %973
        %v976 = vmul.f32 %v966, %v970
        %v977 = vmul.f32 %v967, %v974
        %v978 = vsel %vm464, %v976, 0.0
        %v979 = vsel %vm464, %v977, 0.0
        %v980 = vadd.f32 %v978, %v979
        %v981 = vrot.slane %v980, 4
        %v982 = vadd.f32 %v980, %v981
        %v983 = vrot.slane %v982, 2
        %v984 = vadd.f32 %v982, %v983
        %v985 = vrot.slane %v984, 1
        %v986 = vadd.f32 %v984, %v985
        %s987 = scalar_lea.vmem [#allocation7], 48
        %v988 = vld [vmem:[%s987] sm:$0xff]
        %v989 = vld [vmem:[%s987 + $0x8] sm:$0xff]
        %v990 = vmul.f32 %v988, %v966
        %v991 = vmul.f32 %v989, %v967
        %992 = vset.pattern.permute.xlu0 3
        %993 = vperm.xlu0 %992, %v848
        %v994 = vpop.permute.xlu0 %993
        %996 = vset.pattern.permute.xlu0 3
        %997 = vperm.xlu0 %996, %v849
        %v998 = vpop.permute.xlu0 %997
        %v1000 = vlaneseq
        %v1001 = vshrl.u32 %v1000, 7
        %v1002 = vsub.s32 3, %v1001
        %v1003 = vrot.slane %v676, %v1002
        %v1004 = vmul.f32 %v994, %v1003
        %v1005 = vmul.f32 %v998, %v1003
        %v1006 = vadd.f32 %v990, %v1004
        %v1007 = vadd.f32 %v991, %v1005
        %1008 = vset.pattern.permute.xlu0 3
        %1009 = vperm.xlu0 %1008, %v850
        %v1010 = vpop.permute.xlu0 %1009
        %1012 = vset.pattern.permute.xlu0 3
        %1013 = vperm.xlu0 %1012, %v851
        %v1014 = vpop.permute.xlu0 %1013
        %v1016 = vmul.f32 %v1006, %v1010
        %v1017 = vmul.f32 %v1007, %v1014
        %v1018 = vsel %vm464, %v1016, 0.0
        %v1019 = vsel %vm464, %v1017, 0.0
        %v1020 = vadd.f32 %v1018, %v1019
        %v1021 = vrot.slane %v1020, 4
        %v1022 = vadd.f32 %v1020, %v1021
        %v1023 = vrot.slane %v1022, 2
        %v1024 = vadd.f32 %v1022, %v1023
        %v1025 = vrot.slane %v1024, 1
        %v1026 = vadd.f32 %v1024, %v1025
        %s1027 = scalar_lea.vmem [#allocation7], 64
        %v1028 = vld [vmem:[%s1027] sm:$0xff]
        %v1029 = vld [vmem:[%s1027 + $0x8] sm:$0xff]
        %v1030 = vmul.f32 %v1028, %v1006
        %v1031 = vmul.f32 %v1029, %v1007
        %1032 = vset.pattern.permute.xlu0 4
        %1033 = vperm.xlu0 %1032, %v848
        %v1034 = vpop.permute.xlu0 %1033
        %1036 = vset.pattern.permute.xlu0 4
        %1037 = vperm.xlu0 %1036, %v849
        %v1038 = vpop.permute.xlu0 %1037
        %v1040 = vlaneseq
        %v1041 = vshrl.u32 %v1040, 7
        %v1042 = vsub.s32 4, %v1041
        %v1043 = vrot.slane %v676, %v1042
        %v1044 = vmul.f32 %v1034, %v1043
        %v1045 = vmul.f32 %v1038, %v1043
        %v1046 = vadd.f32 %v1030, %v1044
        %v1047 = vadd.f32 %v1031, %v1045
        %1048 = vset.pattern.permute.xlu0 4
        %1049 = vperm.xlu0 %1048, %v850
        %v1050 = vpop.permute.xlu0 %1049
        %1052 = vset.pattern.permute.xlu0 4
        %1053 = vperm.xlu0 %1052, %v851
        %v1054 = vpop.permute.xlu0 %1053
        %v1056 = vmul.f32 %v1046, %v1050
        %v1057 = vmul.f32 %v1047, %v1054
        %v1058 = vsel %vm464, %v1056, 0.0
        %v1059 = vsel %vm464, %v1057, 0.0
        %v1060 = vadd.f32 %v1058, %v1059
        %v1061 = vrot.slane %v1060, 4
        %v1062 = vadd.f32 %v1060, %v1061
        %v1063 = vrot.slane %v1062, 2
        %v1064 = vadd.f32 %v1062, %v1063
        %v1065 = vrot.slane %v1064, 1
        %v1066 = vadd.f32 %v1064, %v1065
        %s1067 = scalar_lea.vmem [#allocation7], 80
        %v1068 = vld [vmem:[%s1067] sm:$0xff]
        %v1069 = vld [vmem:[%s1067 + $0x8] sm:$0xff]
        %v1070 = vmul.f32 %v1068, %v1046
        %v1071 = vmul.f32 %v1069, %v1047
        %1072 = vset.pattern.permute.xlu0 5
        %1073 = vperm.xlu0 %1072, %v848
        %v1074 = vpop.permute.xlu0 %1073
        %1076 = vset.pattern.permute.xlu0 5
        %1077 = vperm.xlu0 %1076, %v849
        %v1078 = vpop.permute.xlu0 %1077
        %v1080 = vlaneseq
        %v1081 = vshrl.u32 %v1080, 7
        %v1082 = vsub.s32 5, %v1081
        %v1083 = vrot.slane %v676, %v1082
        %v1084 = vmul.f32 %v1074, %v1083
        %v1085 = vmul.f32 %v1078, %v1083
        %v1086 = vadd.f32 %v1070, %v1084
        %v1087 = vadd.f32 %v1071, %v1085
        %1088 = vset.pattern.permute.xlu0 5
        %1089 = vperm.xlu0 %1088, %v850
        %v1090 = vpop.permute.xlu0 %1089
        %1092 = vset.pattern.permute.xlu0 5
        %1093 = vperm.xlu0 %1092, %v851
        %v1094 = vpop.permute.xlu0 %1093
        %v1096 = vmul.f32 %v1086, %v1090
        %v1097 = vmul.f32 %v1087, %v1094
        %v1098 = vsel %vm464, %v1096, 0.0
        %v1099 = vsel %vm464, %v1097, 0.0
        %v1100 = vadd.f32 %v1098, %v1099
        %v1101 = vrot.slane %v1100, 4
        %v1102 = vadd.f32 %v1100, %v1101
        %v1103 = vrot.slane %v1102, 2
        %v1104 = vadd.f32 %v1102, %v1103
        %v1105 = vrot.slane %v1104, 1
        %v1106 = vadd.f32 %v1104, %v1105
        %s1107 = scalar_lea.vmem [#allocation7], 96
        %v1108 = vld [vmem:[%s1107] sm:$0xff]
        %v1109 = vld [vmem:[%s1107 + $0x8] sm:$0xff]
        %v1110 = vmul.f32 %v1108, %v1086
        %v1111 = vmul.f32 %v1109, %v1087
        %1112 = vset.pattern.permute.xlu0 6
        %1113 = vperm.xlu0 %1112, %v848
        %v1114 = vpop.permute.xlu0 %1113
        %1116 = vset.pattern.permute.xlu0 6
        %1117 = vperm.xlu0 %1116, %v849
        %v1118 = vpop.permute.xlu0 %1117
        %v1120 = vlaneseq
        %v1121 = vshrl.u32 %v1120, 7
        %v1122 = vsub.s32 6, %v1121
        %v1123 = vrot.slane %v676, %v1122
        %v1124 = vmul.f32 %v1114, %v1123
        %v1125 = vmul.f32 %v1118, %v1123
        %v1126 = vadd.f32 %v1110, %v1124
        %v1127 = vadd.f32 %v1111, %v1125
        %1128 = vset.pattern.permute.xlu0 6
        %1129 = vperm.xlu0 %1128, %v850
        %v1130 = vpop.permute.xlu0 %1129
        %1132 = vset.pattern.permute.xlu0 6
        %1133 = vperm.xlu0 %1132, %v851
        %v1134 = vpop.permute.xlu0 %1133
        %v1136 = vmul.f32 %v1126, %v1130
        %v1137 = vmul.f32 %v1127, %v1134
        %v1138 = vsel %vm464, %v1136, 0.0
        %v1139 = vsel %vm464, %v1137, 0.0
        %v1140 = vadd.f32 %v1138, %v1139
        %v1141 = vrot.slane %v1140, 4
        %v1142 = vadd.f32 %v1140, %v1141
        %v1143 = vrot.slane %v1142, 2
        %v1144 = vadd.f32 %v1142, %v1143
        %v1145 = vrot.slane %v1144, 1
        %v1146 = vadd.f32 %v1144, %v1145
        %s1147 = scalar_lea.vmem [#allocation7], 112
        %v1148 = vld [vmem:[%s1147] sm:$0xff]
        %v1149 = vld [vmem:[%s1147 + $0x8] sm:$0xff]
        %v1150 = vmul.f32 %v1148, %v1126
        %v1151 = vmul.f32 %v1149, %v1127
        %1152 = vset.pattern.permute.xlu0 7
        %1153 = vperm.xlu0 %1152, %v848
        %v1154 = vpop.permute.xlu0 %1153
        %1156 = vset.pattern.permute.xlu0 7
        %1157 = vperm.xlu0 %1156, %v849
        %v1158 = vpop.permute.xlu0 %1157
        %v1160 = vlaneseq
        %v1161 = vshrl.u32 %v1160, 7
        %v1162 = vsub.s32 7, %v1161
        %v1163 = vrot.slane %v676, %v1162
        %v1164 = vmul.f32 %v1154, %v1163
        %v1165 = vmul.f32 %v1158, %v1163
        %v1166 = vadd.f32 %v1150, %v1164
        %v1167 = vadd.f32 %v1151, %v1165
        %1168 = vset.pattern.permute.xlu0 7
        %1169 = vperm.xlu0 %1168, %v850
        %v1170 = vpop.permute.xlu0 %1169
        %1172 = vset.pattern.permute.xlu0 7
        %1173 = vperm.xlu0 %1172, %v851
        %v1174 = vpop.permute.xlu0 %1173
        %v1176 = vmul.f32 %v1166, %v1170
        %v1177 = vmul.f32 %v1167, %v1174
        %v1178 = vsel %vm464, %v1176, 0.0
        %v1179 = vsel %vm464, %v1177, 0.0
        %v1180 = vadd.f32 %v1178, %v1179
        %v1181 = vrot.slane %v1180, 4
        %v1182 = vadd.f32 %v1180, %v1181
        %v1183 = vrot.slane %v1182, 2
        %v1184 = vadd.f32 %v1182, %v1183
        %v1185 = vrot.slane %v1184, 1
        %v1186 = vadd.f32 %v1184, %v1185
        %vm1187 = vcmask 1040384
        %v1188 = vsel %vm1187, %v906, %v946
        %v1189 = vsel %vm606, %v1188, %v986
        %vm1190 = vcmask 1042432
        %v1191 = vsel %vm1190, %v1189, %v1026
        %vm1192 = vcmask 1043456
        %v1193 = vsel %vm1192, %v1191, %v1066
        %vm1194 = vcmask 1044480
        %v1195 = vsel %vm1194, %v1193, %v1106
        %vm1196 = vcmask 1045504
        %v1197 = vsel %vm1196, %v1195, %v1146
        %vm1198 = vcmask 1046528
        %v1199 = vsel %vm1198, %v1197, %v1186
        %1200 = vst.msk [vmem:[#allocation4] sm:$0xff] %vm464, %v1199
        %1201 = vst.msk [vmem:[#allocation8] sm:$0xff] %vm464, %v1166
        %1202 = vst.msk [vmem:[#allocation8 + $0x8] sm:$0xff] %vm464, %v1167
        %v1203 = vld [vmem:[#allocation4] sm:$0xff]
        %v1204 = vld [vmem:[#allocation2] sm:$0xff]
        %v1205 = vld [vmem:[%s8] sm:$0x1]
        %v1207 = vlaneseq
        %v1208 = vshrl.u32 %v1207, 7
        %v1209 = vsub.s32 0, %v1208
        %v1210 = vrot.slane %v1205, %v1209
        %v1212 = vmul.f32 %v1204, %v1210
        %v1213 = vadd.f32 %v1203, %v1212
        %v1214 = vld [vmem:[#allocation5] sm:$0xff]
        %v1215 = vmul.f32 %v1213, %v1214
        %v1216 = vpack.c.bf16 %v1215, %v1215
        %v1217 = vld [vmem:[%s9] sm:$0xf]
        %v1218 = vld [vmem:[%s9 + $0x4] sm:$0xf]
        %v1219 = vld [vmem:[%s9 + $0x8] sm:$0xf]
        %v1220 = vld [vmem:[%s9 + $0xc] sm:$0xf]
        %v1221 = vld [vmem:[%s9 + $0x10] sm:$0xf]
        %v1222 = vld [vmem:[%s9 + $0x14] sm:$0xf]
        %v1223 = vld [vmem:[%s9 + $0x18] sm:$0xf]
        %v1224 = vld [vmem:[%s9 + $0x1c] sm:$0xf]
        %v1233 = vunpack.c.l.b16 %v1217
        %v1234 = vunpack.c.l.b16 %v1218
        %v1235 = vunpack.c.l.b16 %v1219
        %v1236 = vunpack.c.l.b16 %v1220
        %v1237 = vunpack.c.l.b16 %v1221
        %v1238 = vunpack.c.l.b16 %v1222
        %v1239 = vunpack.c.l.b16 %v1223
        %v1240 = vunpack.c.l.b16 %v1224
        %v1241 = vpack.c.b16 %v1234, %v1233
        %v1242 = vpack.c.b16 %v1236, %v1235
        %v1243 = vpack.c.b16 %v1238, %v1237
        %v1244 = vpack.c.b16 %v1240, %v1239
        %v1250 = vsel %vm464, %v1216, 0
        %1252 = vmatprep.subr.bf16.mxu0 0
        %1253 = vmatpush1.bf16.msra.mxu0 0
        %1254 = vmatprep.subr.bf16.mxu0 0
        %1255 = vmatpush1.bf16.msra.mxu0 0
        %1256 = vmatprep.subr.bf16.mxu0 0
        %1257 = vmatpush1.bf16.msra.mxu0 0
        %1258 = vmatprep.subr.bf16.mxu0 0
        %1259 = vmatpush1.bf16.msra.mxu0 0
        %1260 = vmatprep.subr.bf16.mxu0 0
        %1261 = vmatpush1.bf16.msra.mxu0 %v1244
        %1262 = vmatprep.subr.bf16.mxu0 0
        %1263 = vmatpush1.bf16.msra.mxu0 %v1243
        %1264 = vmatprep.subr.bf16.mxu0 0
        %1265 = vmatpush1.bf16.msra.mxu0 %v1242
        %1266 = vmatprep.subr.bf16.mxu0 0
        %1267 = vmatpush1.bf16.msra.mxu0 %v1241
        %1268 = vmatprep.subr.bf16.mxu0 0
        %1269 = vmatpush2.bf16.msra.mxu0 0
        %1270 = vmatprep.subr.bf16.mxu0 0
        %1271 = vmatpush2.bf16.msra.mxu0 0
        %1272 = vmatprep.subr.bf16.mxu0 0
        %1273 = vmatpush2.bf16.msra.mxu0 0
        %1274 = vmatprep.subr.bf16.mxu0 0
        %1275 = vmatpush2.bf16.msra.mxu0 0
        %1276 = vmatprep.subr.bf16.mxu0 0
        %1277 = vmatpush2.bf16.msra.mxu0 0
        %1278 = vmatprep.subr.bf16.mxu0 0
        %1279 = vmatpush2.bf16.msra.mxu0 0
        %1280 = vmatprep.subr.bf16.mxu0 0
        %1281 = vmatpush2.bf16.msra.mxu0 0
        %1282 = vmatprep.subr.bf16.mxu0 0
        %1283 = vmatpush2.bf16.msra.mxu0 0
        %1284 = vmatprep.mubr.bf16.mxu0 0
        %1285 = vmatmul.mubr.bf16.gmra.mxu0 %v1250
        %v1286 = vpop.f32.mrf.mxu0
        %v1287 = vadd.f32 0.0, %v1286
        %v1288 = vpop.f32.mrf.mxu0
        %v1289 = vpop.f32.mrf.mxu0
        %v1290 = vpop.f32.mrf.mxu0
        %1291 = vdwg.mxu0
        %1292 = vst.msk [vmem:[%s372] sm:$0xff] %vm409, %v1287
        %s1293 = sand.u32 %s263, 1
        %s1294 = scalar_lea.sflag [#allocation11], %s1293
        %s1295 = sand.u32 %s263, 1
        %s1296 = smul.addr %s1295, 8
        %s1297 = scalar_lea.vmem [#allocation10], %s1296
        // Predicated region
        $region65: #{tpu_custom_call.1} parent=59 // pred_check
          %p1298 = pneg %p273
        $region66: #{tpu_custom_call.1} parent=59 // pred_check_branch
          %1300 = sbr.rel (%p1298) target = $region68
        $region67: #{tpu_custom_call.1} parent=59 // pred_region
          %s1302 = ssub.s32 128, 128
          %1303 = vsyncadd %s1294, %s1302
          %s1304 = sadd.s32 %s29, %s28
          %s1305 = smul.addr %s1304, 128
          %s1306 = scalar_lea.hbm %s10, %s1305
          %s1308 = sshll.u32 %s1297, 4
          %s1309 = int_to_ptr.vmem [resolvable:$true] %s1308
          %1311 = dma.vmem_to_hbm [thread:$0]  %s1309, 128, %s1306, %s1294
        $region68: #{tpu_custom_call.1} parent=59 // pred_fallthru
          _
      $region60: #{tpu_custom_call.1} parent=5 // pred_fallthru
        _
      %p1312 = scmp.le.s32.totalorder 2, %s19
      // Predicated region
      $region69: #{tpu_custom_call.1} parent=5 // pred_check
        %p1313 = pneg %p1312
      $region70: #{tpu_custom_call.1} parent=5 // pred_check_branch
        %1315 = sbr.rel (%p1313) target = $region72
      $region71: #{tpu_custom_call.1} parent=5 // pred_region
        %s1316 = ssub.s32 %s19, 2
        // Predicated region
        $region73: #{tpu_custom_call.1} parent=71 // pred_check
          %p1317 = pneg %p279
        $region74: #{tpu_custom_call.1} parent=71 // pred_check_branch
          %1319 = sbr.rel (%p1317) target = $region76
        $region75: #{tpu_custom_call.1} parent=71 // pred_region
          %s1320 = sand.u32 %s264, 1
          %s1321 = scalar_lea.sflag [#allocation11], %s1320
          %s1322 = sand.u32 %s264, 1
          %s1323 = smul.addr %s1322, 8
          %s1324 = scalar_lea.vmem [#allocation10], %s1323
          %1325 = dma.done %s1321, 128
        $region76: #{tpu_custom_call.1} parent=71 // pred_fallthru
          _
      $region72: #{tpu_custom_call.1} parent=5 // pred_fallthru
        _
    $region6: #{tpu_custom_call.1} parent=1 // loop_footer
      %s23 = sadd.s32 1, %s19
    $region7: #{tpu_custom_call.1} parent=1 // loop_footer_branch
      %18 = sbr.rel target = $region3
    $region8: #{tpu_custom_call.1} parent=1 // loop_exit
      _
    %1326 = vsyncpa [#allocation11], 1
    %s1327 = scalar_lea.sflag [#allocation11], 1
    %1328 = vsyncpa %s1327, 1

// kernel: tpu_custom_call.1
$region0: #{tpu_custom_call.1}
  #allocation0 [shape = 'u32[]', space=smem, size = 0x4, offset = 0x4, fixed_abs, tag = 'smem constant byte address 0x4 - core index']
  #allocation1 [shape = 'u32[144,128]{1,0:T(1,128)}', space=vmem, size = 0x12000, scoped, tag = 'internal scratch']
  #allocation2 [shape = 'f32[8,64]{1,0:T(8,128)}', space=vmem, size = 0x1000, scoped, tag = 'scratch operand']
  #allocation3 [shape = 'f32[8,64]{1,0:T(8,128)}', space=vmem, size = 0x1000, scoped, tag = 'scratch operand']
  #allocation4 [shape = 'f32[8,64]{1,0:T(8,128)}', space=vmem, size = 0x1000, scoped, tag = 'scratch operand']
  #allocation5 [shape = 'f32[8,64]{1,0:T(8,128)}', space=vmem, size = 0x1000, scoped, tag = 'scratch operand']
  #allocation6 [shape = 'f32[8,32]{1,0:T(8,128)}', space=vmem, size = 0x1000, scoped, tag = 'scratch operand']
  #allocation7 [shape = 'f32[8,16,64]{2,1,0:T(8,128)}', space=vmem, size = 0x10000, scoped, tag = 'scratch operand']
  #allocation8 [shape = 'f32[16,64]{1,0:T(8,128)}', space=vmem, size = 0x2000, scoped, tag = 'scratch operand']
  #allocation9 [shape = 'f32[11,64]{1,0:T(8,128)}', space=vmem, size = 0x2000, scoped, tag = 'scratch operand']
  %s0 = inlined_call_operand.vmem [shape: f32[2,8,32], index: 0, kind: input, shape index: {}]
  %s1 = inlined_call_operand.vmem [shape: bf16[32,128], index: 1, kind: input, shape index: {}]
  %s2 = inlined_call_operand.vmem [shape: f32[4,64], index: 2, kind: input, shape index: {}]
  %s3 = inlined_call_operand.vmem [shape: f32[1,64], index: 3, kind: input, shape index: {}]
  %s4 = inlined_call_operand.vmem [shape: bf16[64,36], index: 4, kind: input, shape index: {}]
  %s5 = inlined_call_operand.vmem [shape: bf16[4,64], index: 5, kind: input, shape index: {}]
  %s6 = inlined_call_operand.vmem [shape: f32[1,64], index: 6, kind: input, shape index: {}]
  %s7 = inlined_call_operand.vmem [shape: f32[16,64], index: 7, kind: input, shape index: {}]
  %s8 = inlined_call_operand.vmem [shape: f32[1,64], index: 8, kind: input, shape index: {}]
  %s9 = inlined_call_operand.vmem [shape: bf16[64,32], index: 9, kind: input, shape index: {}]
  %s10 = inlined_call_operand.hbm [shape: f32[2,8,32], index: 10, kind: output, shape index: {}]
  %s11 = sld [smem:[#allocation0]]
  $region77: #{tpu_custom_call.1} parent=0
    _
  %s13 = ssub.s32 1, %s11
  %s14 = scalar_select 0, %s13, %s11
  $region1: #{tpu_custom_call.1} parent=0
    #allocation10 [shape = 'u8[8192]{0}', space=vmem, size = 0x2000, scoped, tag = 'output window, operand 0']
    #allocation11 [shape = 's32[2]{0}', space=sflag, size = 0x8, scoped, tag = 'scoped memory for tpu_custom_call.1']
    %15 = vsyncpa [#allocation11], 0
    %s16 = scalar_lea.sflag [#allocation11], 1
    %17 = vsyncpa %s16, 0
    loop: start=0, step=1, limit=4
    $region2: #{tpu_custom_call.1} parent=1 // loop_pre_header
      _
    $region3: #{tpu_custom_call.1} parent=1 // loop_header
      %s19 = sphi 0, %s23
      %p20 = scmp.ge.s32.totalorder %s19, 4
      %s26 = sphi 0, %s38
      %s27 = sphi 0, %s34
      %s28 = sphi 0, %s26
      %s29 = sphi 0, %s27
      %s30 = sphi 0, %s28
      %s31 = sphi 0, %s29
      %s43 = sphi 0, %s45
      %s46 = sphi 0, %s43
      %s47 = sphi 0, %s46
      %s63 = sphi 0, %s47
      %s67 = sphi 0, %s67
      %s69 = sphi 0, %s67
      %s70 = sphi 0, %s69
      %s84 = sphi 0, %s70
      %s88 = sphi 0, %s88
      %s90 = sphi 0, %s88
      %s91 = sphi 0, %s90
      %s105 = sphi 0, %s91
      %s109 = sphi 0, %s109
      %s111 = sphi 0, %s109
      %s112 = sphi 0, %s111
      %s126 = sphi 0, %s112
      %s130 = sphi 0, %s130
      %s132 = sphi 0, %s130
      %s133 = sphi 0, %s132
      %s147 = sphi 0, %s133
      %s151 = sphi 0, %s151
      %s153 = sphi 0, %s151
      %s154 = sphi 0, %s153
      %s168 = sphi 0, %s154
      %s172 = sphi 0, %s172
      %s174 = sphi 0, %s172
      %s175 = sphi 0, %s174
      %s189 = sphi 0, %s175
      %s193 = sphi 0, %s193
      %s195 = sphi 0, %s193
      %s196 = sphi 0, %s195
      %s210 = sphi 0, %s196
      %s214 = sphi 0, %s214
      %s216 = sphi 0, %s214
      %s217 = sphi 0, %s216
      %s231 = sphi 0, %s217
      %s235 = sphi 0, %s235
      %s237 = sphi 0, %s235
      %s238 = sphi 0, %s237
      %s252 = sphi 0, %s238
      %s260 = sphi 0, %s262
      %s263 = sphi 0, %s260
      %s264 = sphi 0, %s263
      %s280 = sphi 0, %s264
    $region4: #{tpu_custom_call.1} parent=1 // loop_header_branch
      %22 = sbr.rel (%p20) target = $region8
    $region5: #{tpu_custom_call.1} parent=1 // loop_body
      %s24 = ssub.s32 %s19, 1
      %s25 = ssub.s32 %s19, 2
      %s32 = sadd.s32 1, %s27
      %p33 = scmp.ge.s32.totalorder %s32, 1
      %s34 = scalar_select %p33, 0, %s32
      %s35 = sadd.s32 1, %s26
      %s36 = scalar_select %p33, %s35, %s26
      %p37 = scmp.ge.s32.totalorder %s36, 2
      %s38 = scalar_select %p37, 0, %s36
      %s39 = ssub.s32 %s26, %s38
      %s40 = ssub.s32 %s27, %s34
      %s41 = sor.u32 %s39, %s40
      %p42 = scmp.eq.s32.totalorder %s41, 0
      %s44 = sadd.s32 %s43, 1
      %s45 = scalar_select %p42, %s43, %s44
      %p48 = pneg %p42
      %p49 = scmp.eq.s32.totalorder %s19, 1
      %p50 = por %p48, %p49
      %p51 = scmp.ne.s32.totalorder %s43, %s46
      %p52 = scmp.eq.s32.totalorder %s19, 0
      %p53 = por %p51, %p52
      %p54 = scmp.ne.s32.totalorder %s43, %s46
      %p55 = scmp.eq.s32.totalorder %s24, 1
      %p56 = por %p54, %p55
      %p57 = scmp.ne.s32.totalorder %s46, %s47
      %p58 = scmp.eq.s32.totalorder %s24, 0
      %p59 = por %p57, %p58
      %p60 = scmp.ne.s32.totalorder %s46, %s47
      %p61 = scmp.eq.s32.totalorder %s25, 1
      %p62 = por %p60, %p61
      %p64 = scmp.ne.s32.totalorder %s47, %s63
      %p65 = scmp.eq.s32.totalorder %s25, 0
      %p66 = por %p64, %p65
      %s68 = sadd.s32 %s67, 1
      %p71 = scmp.eq.s32.totalorder %s19, 1
      %p72 = scmp.ne.s32.totalorder %s67, %s69
      %p73 = scmp.eq.s32.totalorder %s19, 0
      %p74 = por %p72, %p73
      %p75 = scmp.ne.s32.totalorder %s67, %s69
      %p76 = scmp.eq.s32.totalorder %s24, 1
      %p77 = por %p75, %p76
      %p78 = scmp.ne.s32.totalorder %s69, %s70
      %p79 = scmp.eq.s32.totalorder %s24, 0
      %p80 = por %p78, %p79
      %p81 = scmp.ne.s32.totalorder %s69, %s70
      %p82 = scmp.eq.s32.totalorder %s25, 1
      %p83 = por %p81, %p82
      %p85 = scmp.ne.s32.totalorder %s70, %s84
      %p86 = scmp.eq.s32.totalorder %s25, 0
      %p87 = por %p85, %p86
      %s89 = sadd.s32 %s88, 1
      %p92 = scmp.eq.s32.totalorder %s19, 1
      %p93 = scmp.ne.s32.totalorder %s88, %s90
      %p94 = scmp.eq.s32.totalorder %s19, 0
      %p95 = por %p93, %p94
      %p96 = scmp.ne.s32.totalorder %s88, %s90
      %p97 = scmp.eq.s32.totalorder %s24, 1
      %p98 = por %p96, %p97
      %p99 = scmp.ne.s32.totalorder %s90, %s91
      %p100 = scmp.eq.s32.totalorder %s24, 0
      %p101 = por %p99, %p100
      %p102 = scmp.ne.s32.totalorder %s90, %s91
      %p103 = scmp.eq.s32.totalorder %s25, 1
      %p104 = por %p102, %p103
      %p106 = scmp.ne.s32.totalorder %s91, %s105
      %p107 = scmp.eq.s32.totalorder %s25, 0
      %p108 = por %p106, %p107
      %s110 = sadd.s32 %s109, 1
      %p113 = scmp.eq.s32.totalorder %s19, 1
      %p114 = scmp.ne.s32.totalorder %s109, %s111
      %p115 = scmp.eq.s32.totalorder %s19, 0
      %p116 = por %p114, %p115
      %p117 = scmp.ne.s32.totalorder %s109, %s111
      %p118 = scmp.eq.s32.totalorder %s24, 1
      %p119 = por %p117, %p118
      %p120 = scmp.ne.s32.totalorder %s111, %s112
      %p121 = scmp.eq.s32.totalorder %s24, 0
      %p122 = por %p120, %p121
      %p123 = scmp.ne.s32.totalorder %s111, %s112
      %p124 = scmp.eq.s32.totalorder %s25, 1
      %p125 = por %p123, %p124
      %p127 = scmp.ne.s32.totalorder %s112, %s126
      %p128 = scmp.eq.s32.totalorder %s25, 0
      %p129 = por %p127, %p128
      %s131 = sadd.s32 %s130, 1
      %p134 = scmp.eq.s32.totalorder %s19, 1
      %p135 = scmp.ne.s32.totalorder %s130, %s132
      %p136 = scmp.eq.s32.totalorder %s19, 0
      %p137 = por %p135, %p136
      %p138 = scmp.ne.s32.totalorder %s130, %s132
      %p139 = scmp.eq.s32.totalorder %s24, 1
      %p140 = por %p138, %p139
      %p141 = scmp.ne.s32.totalorder %s132, %s133
      %p142 = scmp.eq.s32.totalorder %s24, 0
      %p143 = por %p141, %p142
      %p144 = scmp.ne.s32.totalorder %s132, %s133
      %p145 = scmp.eq.s32.totalorder %s25, 1
      %p146 = por %p144, %p145
      %p148 = scmp.ne.s32.totalorder %s133, %s147
      %p149 = scmp.eq.s32.totalorder %s25, 0
      %p150 = por %p148, %p149
      %s152 = sadd.s32 %s151, 1
      %p155 = scmp.eq.s32.totalorder %s19, 1
      %p156 = scmp.ne.s32.totalorder %s151, %s153
      %p157 = scmp.eq.s32.totalorder %s19, 0
      %p158 = por %p156, %p157
      %p159 = scmp.ne.s32.totalorder %s151, %s153
      %p160 = scmp.eq.s32.totalorder %s24, 1
      %p161 = por %p159, %p160
      %p162 = scmp.ne.s32.totalorder %s153, %s154
      %p163 = scmp.eq.s32.totalorder %s24, 0
      %p164 = por %p162, %p163
      %p165 = scmp.ne.s32.totalorder %s153, %s154
      %p166 = scmp.eq.s32.totalorder %s25, 1
      %p167 = por %p165, %p166
      %p169 = scmp.ne.s32.totalorder %s154, %s168
      %p170 = scmp.eq.s32.totalorder %s25, 0
      %p171 = por %p169, %p170
      %s173 = sadd.s32 %s172, 1
      %p176 = scmp.eq.s32.totalorder %s19, 1
      %p177 = scmp.ne.s32.totalorder %s172, %s174
      %p178 = scmp.eq.s32.totalorder %s19, 0
      %p179 = por %p177, %p178
      %p180 = scmp.ne.s32.totalorder %s172, %s174
      %p181 = scmp.eq.s32.totalorder %s24, 1
      %p182 = por %p180, %p181
      %p183 = scmp.ne.s32.totalorder %s174, %s175
      %p184 = scmp.eq.s32.totalorder %s24, 0
      %p185 = por %p183, %p184
      %p186 = scmp.ne.s32.totalorder %s174, %s175
      %p187 = scmp.eq.s32.totalorder %s25, 1
      %p188 = por %p186, %p187
      %p190 = scmp.ne.s32.totalorder %s175, %s189
      %p191 = scmp.eq.s32.totalorder %s25, 0
      %p192 = por %p190, %p191
      %s194 = sadd.s32 %s193, 1
      %p197 = scmp.eq.s32.totalorder %s19, 1
      %p198 = scmp.ne.s32.totalorder %s193, %s195
      %p199 = scmp.eq.s32.totalorder %s19, 0
      %p200 = por %p198, %p199
      %p201 = scmp.ne.s32.totalorder %s193, %s195
      %p202 = scmp.eq.s32.totalorder %s24, 1
      %p203 = por %p201, %p202
      %p204 = scmp.ne.s32.totalorder %s195, %s196
      %p205 = scmp.eq.s32.totalorder %s24, 0
      %p206 = por %p204, %p205
      %p207 = scmp.ne.s32.totalorder %s195, %s196
      %p208 = scmp.eq.s32.totalorder %s25, 1
      %p209 = por %p207, %p208
      %p211 = scmp.ne.s32.totalorder %s196, %s210
      %p212 = scmp.eq.s32.totalorder %s25, 0
      %p213 = por %p211, %p212
      %s215 = sadd.s32 %s214, 1
      %p218 = scmp.eq.s32.totalorder %s19, 1
      %p219 = scmp.ne.s32.totalorder %s214, %s216
      %p220 = scmp.eq.s32.totalorder %s19, 0
      %p221 = por %p219, %p220
      %p222 = scmp.ne.s32.totalorder %s214, %s216
      %p223 = scmp.eq.s32.totalorder %s24, 1
      %p224 = por %p222, %p223
      %p225 = scmp.ne.s32.totalorder %s216, %s217
      %p226 = scmp.eq.s32.totalorder %s24, 0
      %p227 = por %p225, %p226
      %p228 = scmp.ne.s32.totalorder %s216, %s217
      %p229 = scmp.eq.s32.totalorder %s25, 1
      %p230 = por %p228, %p229
      %p232 = scmp.ne.s32.totalorder %s217, %s231
      %p233 = scmp.eq.s32.totalorder %s25, 0
      %p234 = por %p232, %p233
      %s236 = sadd.s32 %s235, 1
      %p239 = scmp.eq.s32.totalorder %s19, 1
      %p240 = scmp.ne.s32.totalorder %s235, %s237
      %p241 = scmp.eq.s32.totalorder %s19, 0
      %p242 = por %p240, %p241
      %p243 = scmp.ne.s32.totalorder %s235, %s237
      %p244 = scmp.eq.s32.totalorder %s24, 1
      %p245 = por %p243, %p244
      %p246 = scmp.ne.s32.totalorder %s237, %s238
      %p247 = scmp.eq.s32.totalorder %s24, 0
      %p248 = por %p246, %p247
      %p249 = scmp.ne.s32.totalorder %s237, %s238
      %p250 = scmp.eq.s32.totalorder %s25, 1
      %p251 = por %p249, %p250
      %p253 = scmp.ne.s32.totalorder %s238, %s252
      %p254 = scmp.eq.s32.totalorder %s25, 0
      %p255 = por %p253, %p254
      %s256 = ssub.s32 %s26, %s38
      %s257 = ssub.s32 %s27, %s34
      %s258 = sor.u32 %s256, %s257
      %p259 = scmp.eq.s32.totalorder %s258, 0
      %s261 = sadd.s32 %s260, 1
      %s262 = scalar_select %p259, %s260, %s261
      %p265 = pneg %p259
      %p266 = scmp.eq.s32.totalorder %s19, 1
      %p267 = por %p265, %p266
      %p268 = scmp.ne.s32.totalorder %s260, %s263
      %p269 = scmp.eq.s32.totalorder %s19, 0
      %p270 = por %p268, %p269
      %p271 = scmp.ne.s32.totalorder %s260, %s263
      %p272 = scmp.eq.s32.totalorder %s24, 1
      %p273 = por %p271, %p272
      %p274 = scmp.ne.s32.totalorder %s263, %s264
      %p275 = scmp.eq.s32.totalorder %s24, 0
      %p276 = por %p274, %p275
      %p277 = scmp.ne.s32.totalorder %s263, %s264
      %p278 = scmp.eq.s32.totalorder %s25, 1
      %p279 = por %p277, %p278
      %p281 = scmp.ne.s32.totalorder %s264, %s280
      %p282 = scmp.eq.s32.totalorder %s25, 0
      %p283 = por %p281, %p282
      %p284 = scmp.le.s32.totalorder 1, %s19
      %p285 = scmp.lt.s32.totalorder %s19, 3
      %p286 = pnand %p284, %p285
      %p287 = pneg %p286
      // Predicated region
      $region9: #{tpu_custom_call.1} parent=5 // pred_check
        _
      $region10: #{tpu_custom_call.1} parent=5 // pred_check_branch
        %289 = sbr.rel (%p286) target = $region12
      $region11: #{tpu_custom_call.1} parent=5 // pred_region
        %s290 = ssub.s32 %s19, 1
        // Predicated region
        $region13: #{tpu_custom_call.1} parent=11 // pred_check
          %p291 = pneg %p80
        $region14: #{tpu_custom_call.1} parent=11 // pred_check_branch
          %293 = sbr.rel (%p291) target = $region16
        $region15: #{tpu_custom_call.1} parent=11 // pred_region
          _
        $region16: #{tpu_custom_call.1} parent=11 // pred_fallthru
          _
        // Predicated region
        $region17: #{tpu_custom_call.1} parent=11 // pred_check
          %p294 = pneg %p101
        $region18: #{tpu_custom_call.1} parent=11 // pred_check_branch
          %296 = sbr.rel (%p294) target = $region20
        $region19: #{tpu_custom_call.1} parent=11 // pred_region
          _
        $region20: #{tpu_custom_call.1} parent=11 // pred_fallthru
          _
        // Predicated region
        $region21: #{tpu_custom_call.1} parent=11 // pred_check
          %p297 = pneg %p122
        $region22: #{tpu_custom_call.1} parent=11 // pred_check_branch
          %299 = sbr.rel (%p297) target = $region24
        $region23: #{tpu_custom_call.1} parent=11 // pred_region
          _
        $region24: #{tpu_custom_call.1} parent=11 // pred_fallthru
          _
        // Predicated region
        $region25: #{tpu_custom_call.1} parent=11 // pred_check
          %p300 = pneg %p143
        $region26: #{tpu_custom_call.1} parent=11 // pred_check_branch
          %302 = sbr.rel (%p300) target = $region28
        $region27: #{tpu_custom_call.1} parent=11 // pred_region
          _
        $region28: #{tpu_custom_call.1} parent=11 // pred_fallthru
          _
        // Predicated region
        $region29: #{tpu_custom_call.1} parent=11 // pred_check
          %p303 = pneg %p164
        $region30: #{tpu_custom_call.1} parent=11 // pred_check_branch
          %305 = sbr.rel (%p303) target = $region32
        $region31: #{tpu_custom_call.1} parent=11 // pred_region
          _
        $region32: #{tpu_custom_call.1} parent=11 // pred_fallthru
          _
        // Predicated region
        $region33: #{tpu_custom_call.1} parent=11 // pred_check
          %p306 = pneg %p185
        $region34: #{tpu_custom_call.1} parent=11 // pred_check_branch
          %308 = sbr.rel (%p306) target = $region36
        $region35: #{tpu_custom_call.1} parent=11 // pred_region
          _
        $region36: #{tpu_custom_call.1} parent=11 // pred_fallthru
          _
        // Predicated region
        $region37: #{tpu_custom_call.1} parent=11 // pred_check
          %p309 = pneg %p206
        $region38: #{tpu_custom_call.1} parent=11 // pred_check_branch
          %311 = sbr.rel (%p309) target = $region40
        $region39: #{tpu_custom_call.1} parent=11 // pred_region
          _
        $region40: #{tpu_custom_call.1} parent=11 // pred_fallthru
          _
        // Predicated region
        $region41: #{tpu_custom_call.1} parent=11 // pred_check
          %p312 = pneg %p227
        $region42: #{tpu_custom_call.1} parent=11 // pred_check_branch
          %314 = sbr.rel (%p312) target = $region44
        $region43: #{tpu_custom_call.1} parent=11 // pred_region
          _
        $region44: #{tpu_custom_call.1} parent=11 // pred_fallthru
          _
        // Predicated region
        $region45: #{tpu_custom_call.1} parent=11 // pred_check
          %p315 = pneg %p248
        $region46: #{tpu_custom_call.1} parent=11 // pred_check_branch
          %317 = sbr.rel (%p315) target = $region48
        $region47: #{tpu_custom_call.1} parent=11 // pred_region
          _
        $region48: #{tpu_custom_call.1} parent=11 // pred_fallthru
          _
      $region12: #{tpu_custom_call.1} parent=5 // pred_fallthru
        _
      %p318 = scmp.lt.s32.totalorder %s19, 2
      // Predicated region
      $region49: #{tpu_custom_call.1} parent=5 // pred_check
        %p319 = pneg %p318
      $region50: #{tpu_custom_call.1} parent=5 // pred_check_branch
        %321 = sbr.rel (%p319) target = $region52
      $region51: #{tpu_custom_call.1} parent=5 // pred_region
        // Predicated region
        $region53: #{tpu_custom_call.1} parent=51 // pred_check
          %p322 = pneg %p53
        $region54: #{tpu_custom_call.1} parent=51 // pred_check_branch
          %324 = sbr.rel (%p322) target = $region56
        $region55: #{tpu_custom_call.1} parent=51 // pred_region
          %p325 = scmp.lt.s32.totalorder %s26, 1
          %s326 = scalar_select %p325, %s26, 1
          %p327 = scmp.lt.s32.totalorder %s27, 0
          %s328 = scalar_select %p327, %s27, 0
          %s329 = sadd.s32 %s328, %s326
          %s330 = smul.addr %s329, 8
          %s331 = scalar_lea.vmem %s0, %s330
        $region56: #{tpu_custom_call.1} parent=51 // pred_fallthru
          _
      $region52: #{tpu_custom_call.1} parent=5 // pred_fallthru
        _
      %p332 = scmp.le.s32.totalorder 1, %s19
      %p333 = scmp.lt.s32.totalorder %s19, 3
      %p334 = pnand %p332, %p333
      %p335 = pneg %p334
      // Predicated region
      $region57: #{tpu_custom_call.1} parent=5 // pred_check
        _
      $region58: #{tpu_custom_call.1} parent=5 // pred_check_branch
        %337 = sbr.rel (%p334) target = $region60
      $region59: #{tpu_custom_call.1} parent=5 // pred_region
        %s338 = ssub.s32 %s19, 1
        %p339 = scmp.lt.s32.totalorder %s28, 1
        %s340 = scalar_select %p339, %s28, 1
        %p341 = scmp.lt.s32.totalorder %s29, 0
        %s342 = scalar_select %p341, %s29, 0
        %s343 = sadd.s32 %s342, %s340
        %s344 = smul.addr %s343, 8
        %s345 = scalar_lea.vmem %s0, %s344
        %p346 = pneg %p59
        %p347 = pneg %p56
        %p348 = pneg %p80
        %p349 = pneg %p77
        %p350 = pneg %p101
        %p351 = pneg %p98
        %p352 = pneg %p122
        %p353 = pneg %p119
        %p354 = pneg %p143
        %p355 = pneg %p140
        %p356 = pneg %p164
        %p357 = pneg %p161
        %p358 = pneg %p185
        %p359 = pneg %p182
        %p360 = pneg %p206
        %p361 = pneg %p203
        %p362 = pneg %p227
        %p363 = pneg %p224
        %p364 = pneg %p248
        %p365 = pneg %p245
        %p366 = pneg %p276
        %p367 = pneg %p273
        %s368 = sand.u32 %s263, 1
        %s369 = scalar_lea.sflag [#allocation11], %s368
        %s370 = sand.u32 %s263, 1
        %s371 = smul.addr %s370, 8
        %s372 = scalar_lea.vmem [#allocation10], %s371
        %p373 = scmp.lt.s32.totalorder %s28, 1
        %s374 = scalar_select %p373, %s28, 1
        %p375 = scmp.lt.s32.totalorder %s29, 0
        %s376 = scalar_select %p375, %s29, 0
        %s377 = sadd.s32 %s376, %s374
        %s378 = smul.addr %s377, 8
        %s379 = scalar_lea.vmem %s0, %s378
        %p381 = scmp.eq.s32.totalorder %s29, 0
        // Predicated region
        $region61: #{tpu_custom_call.1} parent=59 // pred_check
          %p382 = pneg %p381
        $region62: #{tpu_custom_call.1} parent=59 // pred_check_branch
          %384 = sbr.rel (%p382) target = $region64
        $region63: #{tpu_custom_call.1} parent=59 // pred_region
          %vm385 = vcmask 523264
          %386 = vst.msk [vmem:[#allocation8] sm:$0xff] %vm385, 0.0
          %387 = vst.msk [vmem:[#allocation8 + $0x8] sm:$0xff] %vm385, 0.0
          %388 = vst.msk [vmem:[#allocation9] sm:$0xff] %vm385, 0.0
          %vm389 = vcmask 518144
          %390 = vst.msk [vmem:[#allocation9 + $0x8] sm:$0x7] %vm389, 0.0
        $region64: #{tpu_custom_call.1} parent=59 // pred_fallthru
          _
        %v391 = vld [vmem:[%s379] sm:$0xff]
        %v392 = vpack.c.bf16 %v391, %v391
        %v393 = vld [vmem:[%s1] sm:$0xf]
        %v394 = vld [vmem:[%s1 + $0x4] sm:$0xf]
        %v395 = vld [vmem:[%s1 + $0x8] sm:$0xf]
        %v396 = vld [vmem:[%s1 + $0xc] sm:$0xf]
        %v401 = vunpack.c.l.b16 %v393
        %v402 = vunpack.c.l.b16 %v394
        %v403 = vunpack.c.l.b16 %v395
        %v404 = vunpack.c.l.b16 %v396
        %v405 = vpack.c.b16 %v402, %v401
        %v406 = vpack.c.b16 %v404, %v403
        %vm409 = vcmask 261120
        %v411 = vsel %vm409, %v392, 0
        %413 = vmatprep.subr.bf16.mxu0 0
        %414 = vmatpush1.bf16.msra.mxu0 0
        %415 = vmatprep.subr.bf16.mxu0 0
        %416 = vmatpush1.bf16.msra.mxu0 0
        %417 = vmatprep.subr.bf16.mxu0 0
        %418 = vmatpush1.bf16.msra.mxu0 0
        %419 = vmatprep.subr.bf16.mxu0 0
        %420 = vmatpush1.bf16.msra.mxu0 0
        %421 = vmatprep.subr.bf16.mxu0 0
        %422 = vmatpush1.bf16.msra.mxu0 0
        %423 = vmatprep.subr.bf16.mxu0 0
        %424 = vmatpush1.bf16.msra.mxu0 0
        %425 = vmatprep.subr.bf16.mxu0 0
        %426 = vmatpush1.bf16.msra.mxu0 %v406
        %427 = vmatprep.subr.bf16.mxu0 0
        %428 = vmatpush1.bf16.msra.mxu0 %v405
        %429 = vmatprep.subr.bf16.mxu0 0
        %430 = vmatpush2.bf16.msra.mxu0 0
        %431 = vmatprep.subr.bf16.mxu0 0
        %432 = vmatpush2.bf16.msra.mxu0 0
        %433 = vmatprep.subr.bf16.mxu0 0
        %434 = vmatpush2.bf16.msra.mxu0 0
        %435 = vmatprep.subr.bf16.mxu0 0
        %436 = vmatpush2.bf16.msra.mxu0 0
        %437 = vmatprep.subr.bf16.mxu0 0
        %438 = vmatpush2.bf16.msra.mxu0 0
        %439 = vmatprep.subr.bf16.mxu0 0
        %440 = vmatpush2.bf16.msra.mxu0 0
        %441 = vmatprep.subr.bf16.mxu0 0
        %442 = vmatpush2.bf16.msra.mxu0 0
        %443 = vmatprep.subr.bf16.mxu0 0
        %444 = vmatpush2.bf16.msra.mxu0 0
        %445 = vmatprep.mubr.bf16.mxu0 0
        %446 = vmatmul.mubr.bf16.gmra.mxu0 %v411
        %v447 = vpop.f32.mrf.mxu0
        %v448 = vadd.f32 0.0, %v447
        %v449 = vpop.f32.mrf.mxu0
        %v450 = vpop.f32.mrf.mxu0
        %v451 = vpop.f32.mrf.mxu0
        %452 = vdwg.mxu0
        %v453 = vsub.f32 0.0, %v448
        %v454 = vmul.f32 %v453, 1.442695
        %v455 = vpow.pop %v454
        %v456 = vadd.f32 %v455, 1.0
        %v457 = vrcp.pop %v456
        %v458 = vmul.f32 1.0, %v457
        %v459 = vmul.f32 %v448, %v458
        %461 = vrot.lane.b32.xlu0 %v459, 64
        %v462 = vpop.permute.xlu0 %461
        %vm464 = vcmask 523264
        %465 = vst.msk [vmem:[#allocation5] sm:$0xff] %vm464, %v462
        %466 = vst.msk [vmem:[#allocation9 + $0x3] sm:$0xff] %vm464, %v448
        %v467 = vld [vmem:[%s2 + $0x3] sm:$0x1]
        %v468 = vlaneseq
        %v469 = vshrl.u32 %v468, 7
        %v470 = vsub.s32 0, %v469
        %v471 = vrot.slane %v467, %v470
        %v472 = vmul.f32 %v448, %v471
        %v473 = vld [vmem:[%s3] sm:$0x1]
        %v475 = vlaneseq
        %v476 = vshrl.u32 %v475, 7
        %v477 = vsub.s32 0, %v476
        %v478 = vrot.slane %v473, %v477
        %v480 = vadd.f32 %v472, %v478
        %v481 = vld [vmem:[#allocation9] sm:$0xff]
        %v482 = vld [vmem:[%s2] sm:$0x1]
        %v483 = vlaneseq
        %v484 = vshrl.u32 %v483, 7
        %v485 = vsub.s32 0, %v484
        %v486 = vrot.slane %v482, %v485
        %v487 = vmul.f32 %v481, %v486
        %v488 = vadd.f32 %v480, %v487
        %v489 = vld [vmem:[#allocation9 + $0x1] sm:$0xff]
        %v490 = vld [vmem:[%s2 + $0x1] sm:$0x1]
        %v491 = vlaneseq
        %v492 = vshrl.u32 %v491, 7
        %v493 = vsub.s32 0, %v492
        %v494 = vrot.slane %v490, %v493
        %v495 = vmul.f32 %v489, %v494
        %v496 = vadd.f32 %v488, %v495
        %v497 = vld [vmem:[#allocation9 + $0x2] sm:$0xff]
        %v498 = vld [vmem:[%s2 + $0x2] sm:$0x1]
        %v499 = vlaneseq
        %v500 = vshrl.u32 %v499, 7
        %v501 = vsub.s32 0, %v500
        %v502 = vrot.slane %v498, %v501
        %v503 = vmul.f32 %v497, %v502
        %v504 = vadd.f32 %v496, %v503
        %v505 = vsub.f32 0.0, %v504
        %v506 = vmul.f32 %v505, 1.442695
        %v507 = vpow.pop %v506
        %v508 = vadd.f32 %v507, 1.0
        %v509 = vrcp.pop %v508
        %v510 = vmul.f32 1.0, %v509
        %v511 = vmul.f32 %v504, %v510
        %512 = vst.msk [vmem:[#allocation2] sm:$0xff] %vm464, %v511
        %v513 = vld [vmem:[#allocation9 + $0x8] sm:$0x7]
        %vm514 = vcmask 518144
        %515 = vst.msk [vmem:[#allocation9] sm:$0x7] %vm514, %v513
        %v516 = vld [vmem:[#allocation2] sm:$0xff]
        %v517 = vpack.c.bf16 %v516, %v516
        %v518 = vld [vmem:[%s4] sm:$0xf]
        %v519 = vld [vmem:[%s4 + $0x4] sm:$0xf]
        %v520 = vld [vmem:[%s4 + $0x8] sm:$0xf]
        %v521 = vld [vmem:[%s4 + $0xc] sm:$0xf]
        %v522 = vld [vmem:[%s4 + $0x10] sm:$0xf]
        %v523 = vld [vmem:[%s4 + $0x14] sm:$0xf]
        %v524 = vld [vmem:[%s4 + $0x18] sm:$0xf]
        %v525 = vld [vmem:[%s4 + $0x1c] sm:$0xf]
        %v534 = vunpack.c.l.b16 %v518
        %v535 = vunpack.c.l.b16 %v519
        %v536 = vunpack.c.l.b16 %v520
        %v537 = vunpack.c.l.b16 %v521
        %v538 = vunpack.c.l.b16 %v522
        %v539 = vunpack.c.l.b16 %v523
        %v540 = vunpack.c.l.b16 %v524
        %v541 = vunpack.c.l.b16 %v525
        %v542 = vpack.c.b16 %v535, %v534
        %v543 = vpack.c.b16 %v537, %v536
        %v544 = vpack.c.b16 %v539, %v538
        %v545 = vpack.c.b16 %v541, %v540
        %v551 = vsel %vm464, %v517, 0
        %553 = vmatprep.subr.bf16.mxu0 0
        %554 = vmatpush1.bf16.msra.mxu0 0
        %555 = vmatprep.subr.bf16.mxu0 0
        %556 = vmatpush1.bf16.msra.mxu0 0
        %557 = vmatprep.subr.bf16.mxu0 0
        %558 = vmatpush1.bf16.msra.mxu0 0
        %559 = vmatprep.subr.bf16.mxu0 0
        %560 = vmatpush1.bf16.msra.mxu0 0
        %561 = vmatprep.subr.bf16.mxu0 0
        %562 = vmatpush1.bf16.msra.mxu0 %v545
        %563 = vmatprep.subr.bf16.mxu0 0
        %564 = vmatpush1.bf16.msra.mxu0 %v544
        %565 = vmatprep.subr.bf16.mxu0 0
        %566 = vmatpush1.bf16.msra.mxu0 %v543
        %567 = vmatprep.subr.bf16.mxu0 0
        %568 = vmatpush1.bf16.msra.mxu0 %v542
        %569 = vmatprep.subr.bf16.mxu0 0
        %570 = vmatpush2.bf16.msra.mxu0 0
        %571 = vmatprep.subr.bf16.mxu0 0
        %572 = vmatpush2.bf16.msra.mxu0 0
        %573 = vmatprep.subr.bf16.mxu0 0
        %574 = vmatpush2.bf16.msra.mxu0 0
        %575 = vmatprep.subr.bf16.mxu0 0
        %576 = vmatpush2.bf16.msra.mxu0 0
        %577 = vmatprep.subr.bf16.mxu0 0
        %578 = vmatpush2.bf16.msra.mxu0 0
        %579 = vmatprep.subr.bf16.mxu0 0
        %580 = vmatpush2.bf16.msra.mxu0 0
        %581 = vmatprep.subr.bf16.mxu0 0
        %582 = vmatpush2.bf16.msra.mxu0 0
        %583 = vmatprep.subr.bf16.mxu0 0
        %584 = vmatpush2.bf16.msra.mxu0 0
        %585 = vmatprep.mubr.bf16.mxu0 0
        %586 = vmatmul.mubr.bf16.gmra.mxu0 %v551
        %v587 = vpop.f32.mrf.mxu0
        %v588 = vadd.f32 0.0, %v587
        %v589 = vpop.f32.mrf.mxu0
        %v590 = vpop.f32.mrf.mxu0
        %v591 = vpop.f32.mrf.mxu0
        %592 = vdwg.mxu0
        %v593 = vpack.c.bf16 %v588, %v588
        %v594 = vld [vmem:[%s5] sm:$0x3]
        %v595 = vld [vmem:[%s6] sm:$0x1]
        %v597 = vlaneseq
        %v598 = vshrl.u32 %v597, 7
        %v599 = vsub.s32 0, %v598
        %v600 = vrot.slane %v595, %v599
        %vm602 = vcmask 31744
        %v604 = vsel %vm602, %v593, 0
        %vm606 = vcmask 1041408
        %v608 = vsel %vm606, %v594, 0
        %610 = vmatprep.subr.bf16.mxu0 0
        %611 = vmatpush1.bf16.msra.mxu0 0
        %612 = vmatprep.subr.bf16.mxu0 0
        %613 = vmatpush1.bf16.msra.mxu0 0
        %614 = vmatprep.subr.bf16.mxu0 0
        %615 = vmatpush1.bf16.msra.mxu0 0
        %616 = vmatprep.subr.bf16.mxu0 0
        %617 = vmatpush1.bf16.msra.mxu0 0
        %618 = vmatprep.subr.bf16.mxu0 0
        %619 = vmatpush1.bf16.msra.mxu0 0
        %620 = vmatprep.subr.bf16.mxu0 0
        %621 = vmatpush1.bf16.msra.mxu0 0
        %622 = vmatprep.subr.bf16.mxu0 0
        %623 = vmatpush1.bf16.msra.mxu0 0
        %624 = vmatprep.subr.bf16.mxu0 0
        %625 = vmatpush1.bf16.msra.mxu0 %v608
        %626 = vmatprep.subr.bf16.mxu0 0
        %627 = vmatpush2.bf16.msra.mxu0 0
        %628 = vmatprep.subr.bf16.mxu0 0
        %629 = vmatpush2.bf16.msra.mxu0 0
        %630 = vmatprep.subr.bf16.mxu0 0
        %631 = vmatpush2.bf16.msra.mxu0 0
        %632 = vmatprep.subr.bf16.mxu0 0
        %633 = vmatpush2.bf16.msra.mxu0 0
        %634 = vmatprep.subr.bf16.mxu0 0
        %635 = vmatpush2.bf16.msra.mxu0 0
        %636 = vmatprep.subr.bf16.mxu0 0
        %637 = vmatpush2.bf16.msra.mxu0 0
        %638 = vmatprep.subr.bf16.mxu0 0
        %639 = vmatpush2.bf16.msra.mxu0 0
        %640 = vmatprep.subr.bf16.mxu0 0
        %641 = vmatpush2.bf16.msra.mxu0 0
        %642 = vmatprep.mubr.bf16.mxu0 0
        %643 = vmatmul.mubr.bf16.gmra.mxu0 %v604
        %v644 = vpop.f32.mrf.mxu0
        %v645 = vadd.f32 %v600, %v644
        %v646 = vpop.f32.mrf.mxu0
        %v647 = vpop.f32.mrf.mxu0
        %v648 = vpop.f32.mrf.mxu0
        %649 = vdwg.mxu0
        %vm650 = vcmp.gt.f32.partialorder %v645, 20.0
        %v651 = vmin.f32 %v645, 20.0
        %v652 = vmul.f32 %v651, 1.442695
        %v653 = vpow.pop %v652
        %v654 = vadd.f32 %v653, 1.0
        %v655 = vlog2.pop %v654
        %v656 = vmul.f32 %v655, 0.6931472
        %v657 = vmul.f32 -0.5, %v653
        %v658 = vadd.f32 %v657, 1.0
        %v659 = vmul.f32 %v658, %v653
        %v660 = vand.u32 2147483647, %v653
        %vm661 = vcmp.lt.f32.partialorder %v660, 0.0004427343
        %v662 = vsel %vm661, %v659, %v656
        %v663 = vsel %vm650, %v645, %v662
        %664 = vst.msk [vmem:[#allocation3] sm:$0xff] %vm464, %v663
        %666 = vrot.lane.b32.xlu0 %v588, 124
        %v667 = vpop.permute.xlu0 %666
        %669 = vst.msk [vmem:[#allocation6] sm:$0xff] %vm409, %v667
        %v670 = vld [vmem:[%s7] sm:$0xff]
        %v671 = vld [vmem:[%s7 + $0x8] sm:$0xff]
        %v672 = vld [vmem:[#allocation8] sm:$0xff]
        %v673 = vld [vmem:[#allocation8 + $0x8] sm:$0xff]
        %v674 = vld [vmem:[#allocation3] sm:$0xff]
        %v675 = vld [vmem:[#allocation2] sm:$0xff]
        %v676 = vmul.f32 %v674, %v675
        %v678 = vcombine.high %v674, %v674
        %v680 = vunpack.c.l.s4 1966171168
        %v681 = vunpack.c.0.s8 %v680
        %v682 = vlaneseq
        %v683 = vshrl.u32 %v682, 7
        %v684 = vsub.s32 %v681, %v683
        %v685 = vrot.slane %v674, %v684
        %v687 = vunpack.c.l.s4 1966171168
        %v688 = vunpack.c.0.s8 %v687
        %v689 = vlaneseq
        %v690 = vshrl.u32 %v689, 7
        %v691 = vsub.s32 %v688, %v690
        %v692 = vrot.slane %v678, %v691
        %v693 = vcombine.high %v685, %v685
        %v694 = vcombine.high %v692, %v692
        %v696 = vunpack.c.l.s4 1966171168
        %v697 = vunpack.c.0.s8 %v696
        %v698 = vlaneseq
        %v699 = vshrl.u32 %v698, 7
        %v700 = vsub.s32 %v697, %v699
        %v701 = vrot.slane %v685, %v700
        %v703 = vunpack.c.l.s4 1966171168
        %v704 = vunpack.c.0.s8 %v703
        %v705 = vlaneseq
        %v706 = vshrl.u32 %v705, 7
        %v707 = vsub.s32 %v704, %v706
        %v708 = vrot.slane %v692, %v707
        %v710 = vunpack.c.l.s4 1966171168
        %v711 = vunpack.c.0.s8 %v710
        %v712 = vlaneseq
        %v713 = vshrl.u32 %v712, 7
        %v714 = vsub.s32 %v711, %v713
        %v715 = vrot.slane %v693, %v714
        %v717 = vunpack.c.l.s4 1966171168
        %v718 = vunpack.c.0.s8 %v717
        %v719 = vlaneseq
        %v720 = vshrl.u32 %v719, 7
        %v721 = vsub.s32 %v718, %v720
        %v722 = vrot.slane %v694, %v721
        %v723 = vcombine.high %v701, %v701
        %v724 = vcombine.high %v708, %v708
        %v725 = vcombine.high %v715, %v715
        %v726 = vcombine.high %v722, %v722
        %v727 = vlaneseq
        %v728 = vshrl.u32 %v727, 7
        %v729 = vsub.s32 0, %v728
        %v730 = vrot.slane %v701, %v729
        %v731 = vlaneseq
        %v732 = vshrl.u32 %v731, 7
        %v733 = vsub.s32 0, %v732
        %v734 = vrot.slane %v715, %v733
        %v735 = vlaneseq
        %v736 = vshrl.u32 %v735, 7
        %v737 = vsub.s32 0, %v736
        %v738 = vrot.slane %v723, %v737
        %v739 = vlaneseq
        %v740 = vshrl.u32 %v739, 7
        %v741 = vsub.s32 0, %v740
        %v742 = vrot.slane %v725, %v741
        %v743 = vlaneseq
        %v744 = vshrl.u32 %v743, 7
        %v745 = vsub.s32 0, %v744
        %v746 = vrot.slane %v708, %v745
        %v747 = vlaneseq
        %v748 = vshrl.u32 %v747, 7
        %v749 = vsub.s32 0, %v748
        %v750 = vrot.slane %v722, %v749
        %v751 = vlaneseq
        %v752 = vshrl.u32 %v751, 7
        %v753 = vsub.s32 0, %v752
        %v754 = vrot.slane %v724, %v753
        %v755 = vlaneseq
        %v756 = vshrl.u32 %v755, 7
        %v757 = vsub.s32 0, %v756
        %v758 = vrot.slane %v726, %v757
        %v767 = vmul.f32 %v730, %v670
        %v768 = vmul.f32 %v730, %v671
        %v769 = vmul.f32 %v734, %v670
        %v770 = vmul.f32 %v734, %v671
        %v771 = vmul.f32 %v738, %v670
        %v772 = vmul.f32 %v738, %v671
        %v773 = vmul.f32 %v742, %v670
        %v774 = vmul.f32 %v742, %v671
        %v775 = vmul.f32 %v746, %v670
        %v776 = vmul.f32 %v746, %v671
        %v777 = vmul.f32 %v750, %v670
        %v778 = vmul.f32 %v750, %v671
        %v779 = vmul.f32 %v754, %v670
        %v780 = vmul.f32 %v754, %v671
        %v781 = vmul.f32 %v758, %v670
        %v782 = vmul.f32 %v758, %v671
        %v783 = vmul.f32 %v767, 1.442695
        %v784 = vpow.pop %v783
        %v785 = vmul.f32 %v768, 1.442695
        %v786 = vpow.pop %v785
        %v787 = vmul.f32 %v769, 1.442695
        %v788 = vpow.pop %v787
        %v789 = vmul.f32 %v770, 1.442695
        %v790 = vpow.pop %v789
        %v791 = vmul.f32 %v771, 1.442695
        %v792 = vpow.pop %v791
        %v793 = vmul.f32 %v772, 1.442695
        %v794 = vpow.pop %v793
        %v795 = vmul.f32 %v773, 1.442695
        %v796 = vpow.pop %v795
        %v797 = vmul.f32 %v774, 1.442695
        %v798 = vpow.pop %v797
        %v799 = vmul.f32 %v775, 1.442695
        %v800 = vpow.pop %v799
        %v801 = vmul.f32 %v776, 1.442695
        %v802 = vpow.pop %v801
        %v803 = vmul.f32 %v777, 1.442695
        %v804 = vpow.pop %v803
        %v805 = vmul.f32 %v778, 1.442695
        %v806 = vpow.pop %v805
        %v807 = vmul.f32 %v779, 1.442695
        %v808 = vpow.pop %v807
        %v809 = vmul.f32 %v780, 1.442695
        %v810 = vpow.pop %v809
        %v811 = vmul.f32 %v781, 1.442695
        %v812 = vpow.pop %v811
        %v813 = vmul.f32 %v782, 1.442695
        %v814 = vpow.pop %v813
        %815 = vst.msk [vmem:[#allocation7] sm:$0xff] %vm464, %v784
        %816 = vst.msk [vmem:[#allocation7 + $0x8] sm:$0xff] %vm464, %v786
        %817 = vst.msk [vmem:[#allocation7 + $0x10] sm:$0xff] %vm464, %v788
        %818 = vst.msk [vmem:[#allocation7 + $0x18] sm:$0xff] %vm464, %v790
        %819 = vst.msk [vmem:[#allocation7 + $0x20] sm:$0xff] %vm464, %v792
        %820 = vst.msk [vmem:[#allocation7 + $0x28] sm:$0xff] %vm464, %v794
        %821 = vst.msk [vmem:[#allocation7 + $0x30] sm:$0xff] %vm464, %v796
        %822 = vst.msk [vmem:[#allocation7 + $0x38] sm:$0xff] %vm464, %v798
        %823 = vst.msk [vmem:[#allocation7 + $0x40] sm:$0xff] %vm464, %v800
        %824 = vst.msk [vmem:[#allocation7 + $0x48] sm:$0xff] %vm464, %v802
        %825 = vst.msk [vmem:[#allocation7 + $0x50] sm:$0xff] %vm464, %v804
        %826 = vst.msk [vmem:[#allocation7 + $0x58] sm:$0xff] %vm464, %v806
        %827 = vst.msk [vmem:[#allocation7 + $0x60] sm:$0xff] %vm464, %v808
        %828 = vst.msk [vmem:[#allocation7 + $0x68] sm:$0xff] %vm464, %v810
        %829 = vst.msk [vmem:[#allocation7 + $0x70] sm:$0xff] %vm464, %v812
        %830 = vst.msk [vmem:[#allocation7 + $0x78] sm:$0xff] %vm464, %v814
        %v831 = vld [vmem:[#allocation6] sm:$0xff]
        %832 = vxpose.xlu0.b32.start [1/16] %v831, 128
        %833 = vxpose.xlu0.b32.cont [2/16] 0.0, 128
        %834 = vxpose.xlu0.b32.cont [3/16] 0.0, 128
        %835 = vxpose.xlu0.b32.cont [4/16] 0.0, 128
        %836 = vxpose.xlu0.b32.cont [5/16] 0.0, 128
        %837 = vxpose.xlu0.b32.cont [6/16] 0.0, 128
        %838 = vxpose.xlu0.b32.cont [7/16] 0.0, 128
        %839 = vxpose.xlu0.b32.cont [8/16] 0.0, 128
        %840 = vxpose.xlu0.b32.cont [9/16] 0.0, 128
        %841 = vxpose.xlu0.b32.cont [10/16] 0.0, 128
        %842 = vxpose.xlu0.b32.cont [11/16] 0.0, 128
        %843 = vxpose.xlu0.b32.cont [12/16] 0.0, 128
        %844 = vxpose.xlu0.b32.cont [13/16] 0.0, 128
        %845 = vxpose.xlu0.b32.cont [14/16] 0.0, 128
        %846 = vxpose.xlu0.b32.cont [15/16] 0.0, 128
        %847 = vxpose.xlu0.b32.end [16/16] 0.0, 128
        %v848 = vpop.trf.xlu0
        %v849 = vpop.trf.xlu0
        %v850 = vpop.trf.xlu0
        %v851 = vpop.trf.xlu0
        %v852 = vpop.trf.xlu0
        %v853 = vpop.trf.xlu0
        %v854 = vpop.trf.xlu0
        %v855 = vpop.trf.xlu0
        %v856 = vpop.trf.xlu0
        %v857 = vpop.trf.xlu0
        %v858 = vpop.trf.xlu0
        %v859 = vpop.trf.xlu0
        %v860 = vpop.trf.xlu0
        %v861 = vpop.trf.xlu0
        %v862 = vpop.trf.xlu0
        %v863 = vpop.trf.xlu0
        %v864 = vld [vmem:[#allocation7] sm:$0xff]
        %v865 = vld [vmem:[#allocation7 + $0x8] sm:$0xff]
        %v866 = vmul.f32 %v864, %v672
        %v867 = vmul.f32 %v865, %v673
        %869 = vset.pattern.permute.xlu0 0
        %870 = vperm.xlu0 %869, %v848
        %v871 = vpop.permute.xlu0 %870
        %874 = vset.pattern.permute.xlu0 0
        %875 = vperm.xlu0 %874, %v849
        %v876 = vpop.permute.xlu0 %875
        %v878 = vlaneseq
        %v879 = vshrl.u32 %v878, 7
        %v880 = vsub.s32 0, %v879
        %v881 = vrot.slane %v676, %v880
        %v882 = vmul.f32 %v871, %v881
        %v883 = vmul.f32 %v876, %v881
        %v884 = vadd.f32 %v866, %v882
        %v885 = vadd.f32 %v867, %v883
        %887 = vset.pattern.permute.xlu0 0
        %888 = vperm.xlu0 %887, %v850
        %v889 = vpop.permute.xlu0 %888
        %892 = vset.pattern.permute.xlu0 0
        %893 = vperm.xlu0 %892, %v851
        %v894 = vpop.permute.xlu0 %893
        %v896 = vmul.f32 %v884, %v889
        %v897 = vmul.f32 %v885, %v894
        %v898 = vsel %vm464, %v896, 0.0
        %v899 = vsel %vm464, %v897, 0.0
        %v900 = vadd.f32 %v898, %v899
        %v901 = vrot.slane %v900, 4
        %v902 = vadd.f32 %v900, %v901
        %v903 = vrot.slane %v902, 2
        %v904 = vadd.f32 %v902, %v903
        %v905 = vrot.slane %v904, 1
        %v906 = vadd.f32 %v904, %v905
        %s907 = scalar_lea.vmem [#allocation7], 16
        %v908 = vld [vmem:[%s907] sm:$0xff]
        %v909 = vld [vmem:[%s907 + $0x8] sm:$0xff]
        %v910 = vmul.f32 %v908, %v884
        %v911 = vmul.f32 %v909, %v885
        %912 = vset.pattern.permute.xlu0 1
        %913 = vperm.xlu0 %912, %v848
        %v914 = vpop.permute.xlu0 %913
        %916 = vset.pattern.permute.xlu0 1
        %917 = vperm.xlu0 %916, %v849
        %v918 = vpop.permute.xlu0 %917
        %v920 = vlaneseq
        %v921 = vshrl.u32 %v920, 7
        %v922 = vsub.s32 1, %v921
        %v923 = vrot.slane %v676, %v922
        %v924 = vmul.f32 %v914, %v923
        %v925 = vmul.f32 %v918, %v923
        %v926 = vadd.f32 %v910, %v924
        %v927 = vadd.f32 %v911, %v925
        %928 = vset.pattern.permute.xlu0 1
        %929 = vperm.xlu0 %928, %v850
        %v930 = vpop.permute.xlu0 %929
        %932 = vset.pattern.permute.xlu0 1
        %933 = vperm.xlu0 %932, %v851
        %v934 = vpop.permute.xlu0 %933
        %v936 = vmul.f32 %v926, %v930
        %v937 = vmul.f32 %v927, %v934
        %v938 = vsel %vm464, %v936, 0.0
        %v939 = vsel %vm464, %v937, 0.0
        %v940 = vadd.f32 %v938, %v939
        %v941 = vrot.slane %v940, 4
        %v942 = vadd.f32 %v940, %v941
        %v943 = vrot.slane %v942, 2
        %v944 = vadd.f32 %v942, %v943
        %v945 = vrot.slane %v944, 1
        %v946 = vadd.f32 %v944, %v945
        %s947 = scalar_lea.vmem [#allocation7], 32
        %v948 = vld [vmem:[%s947] sm:$0xff]
        %v949 = vld [vmem:[%s947 + $0x8] sm:$0xff]
        %v950 = vmul.f32 %v948, %v926
        %v951 = vmul.f32 %v949, %v927
        %952 = vset.pattern.permute.xlu0 2
        %953 = vperm.xlu0 %952, %v848
        %v954 = vpop.permute.xlu0 %953
        %956 = vset.pattern.permute.xlu0 2
        %957 = vperm.xlu0 %956, %v849
        %v958 = vpop.permute.xlu0 %957
        %v960 = vlaneseq
        %v961 = vshrl.u32 %v960, 7
        %v962 = vsub.s32 2, %v961
        %v963 = vrot.slane %v676, %v962
        %v964 = vmul.f32 %v954, %v963
        %v965 = vmul.f32 %v958, %v963
        %v966 = vadd.f32 %v950, %v964
        %v967 = vadd.f32 %v951, %v965
        %968 = vset.pattern.permute.xlu0 2
        %969 = vperm.xlu0 %968, %v850
        %v970 = vpop.permute.xlu0 %969
        %972 = vset.pattern.permute.xlu0 2
        %973 = vperm.xlu0 %972, %v851
        %v974 = vpop.permute.xlu0 %973
        %v976 = vmul.f32 %v966, %v970
        %v977 = vmul.f32 %v967, %v974
        %v978 = vsel %vm464, %v976, 0.0
        %v979 = vsel %vm464, %v977, 0.0
        %v980 = vadd.f32 %v978, %v979
        %v981 = vrot.slane %v980, 4
        %v982 = vadd.f32 %v980, %v981
        %v983 = vrot.slane %v982, 2
        %v984 = vadd.f32 %v982, %v983
        %v985 = vrot.slane %v984, 1
        %v986 = vadd.f32 %v984, %v985
        %s987 = scalar_lea.vmem [#allocation7], 48
        %v988 = vld [vmem:[%s987] sm:$0xff]
        %v989 = vld [vmem:[%s987 + $0x8] sm:$0xff]
        %v990 = vmul.f32 %v988, %v966
        %v991 = vmul.f32 %v989, %v967
        %992 = vset.pattern.permute.xlu0 3
        %993 = vperm.xlu0 %992, %v848
        %v994 = vpop.permute.xlu0 %993
        %996 = vset.pattern.permute.xlu0 3
        %997 = vperm.xlu0 %996, %v849
        %v998 = vpop.permute.xlu0 %997
        %v1000 = vlaneseq
        %v1001 = vshrl.u32 %v1000, 7
        %v1002 = vsub.s32 3, %v1001
        %v1003 = vrot.slane %v676, %v1002
        %v1004 = vmul.f32 %v994, %v1003
        %v1005 = vmul.f32 %v998, %v1003
        %v1006 = vadd.f32 %v990, %v1004
        %v1007 = vadd.f32 %v991, %v1005
        %1008 = vset.pattern.permute.xlu0 3
        %1009 = vperm.xlu0 %1008, %v850
        %v1010 = vpop.permute.xlu0 %1009
        %1012 = vset.pattern.permute.xlu0 3
        %1013 = vperm.xlu0 %1012, %v851
        %v1014 = vpop.permute.xlu0 %1013
        %v1016 = vmul.f32 %v1006, %v1010
        %v1017 = vmul.f32 %v1007, %v1014
        %v1018 = vsel %vm464, %v1016, 0.0
        %v1019 = vsel %vm464, %v1017, 0.0
        %v1020 = vadd.f32 %v1018, %v1019
        %v1021 = vrot.slane %v1020, 4
        %v1022 = vadd.f32 %v1020, %v1021
        %v1023 = vrot.slane %v1022, 2
        %v1024 = vadd.f32 %v1022, %v1023
        %v1025 = vrot.slane %v1024, 1
        %v1026 = vadd.f32 %v1024, %v1025
        %s1027 = scalar_lea.vmem [#allocation7], 64
        %v1028 = vld [vmem:[%s1027] sm:$0xff]
        %v1029 = vld [vmem:[%s1027 + $0x8] sm:$0xff]
        %v1030 = vmul.f32 %v1028, %v1006
        %v1031 = vmul.f32 %v1029, %v1007
        %1032 = vset.pattern.permute.xlu0 4
        %1033 = vperm.xlu0 %1032, %v848
        %v1034 = vpop.permute.xlu0 %1033
        %1036 = vset.pattern.permute.xlu0 4
        %1037 = vperm.xlu0 %1036, %v849
        %v1038 = vpop.permute.xlu0 %1037
        %v1040 = vlaneseq
        %v1041 = vshrl.u32 %v1040, 7
        %v1042 = vsub.s32 4, %v1041
        %v1043 = vrot.slane %v676, %v1042
        %v1044 = vmul.f32 %v1034, %v1043
        %v1045 = vmul.f32 %v1038, %v1043
        %v1046 = vadd.f32 %v1030, %v1044
        %v1047 = vadd.f32 %v1031, %v1045
        %1048 = vset.pattern.permute.xlu0 4
        %1049 = vperm.xlu0 %1048, %v850
        %v1050 = vpop.permute.xlu0 %1049
        %1052 = vset.pattern.permute.xlu0 4
        %1053 = vperm.xlu0 %1052, %v851
        %v1054 = vpop.permute.xlu0 %1053
        %v1056 = vmul.f32 %v1046, %v1050
        %v1057 = vmul.f32 %v1047, %v1054
        %v1058 = vsel %vm464, %v1056, 0.0
        %v1059 = vsel %vm464, %v1057, 0.0
        %v1060 = vadd.f32 %v1058, %v1059
        %v1061 = vrot.slane %v1060, 4
        %v1062 = vadd.f32 %v1060, %v1061
        %v1063 = vrot.slane %v1062, 2
        %v1064 = vadd.f32 %v1062, %v1063
        %v1065 = vrot.slane %v1064, 1
        %v1066 = vadd.f32 %v1064, %v1065
        %s1067 = scalar_lea.vmem [#allocation7], 80
        %v1068 = vld [vmem:[%s1067] sm:$0xff]
        %v1069 = vld [vmem:[%s1067 + $0x8] sm:$0xff]
        %v1070 = vmul.f32 %v1068, %v1046
        %v1071 = vmul.f32 %v1069, %v1047
        %1072 = vset.pattern.permute.xlu0 5
        %1073 = vperm.xlu0 %1072, %v848
        %v1074 = vpop.permute.xlu0 %1073
        %1076 = vset.pattern.permute.xlu0 5
        %1077 = vperm.xlu0 %1076, %v849
        %v1078 = vpop.permute.xlu0 %1077
        %v1080 = vlaneseq
        %v1081 = vshrl.u32 %v1080, 7
        %v1082 = vsub.s32 5, %v1081
        %v1083 = vrot.slane %v676, %v1082
        %v1084 = vmul.f32 %v1074, %v1083
        %v1085 = vmul.f32 %v1078, %v1083
        %v1086 = vadd.f32 %v1070, %v1084
        %v1087 = vadd.f32 %v1071, %v1085
        %1088 = vset.pattern.permute.xlu0 5
        %1089 = vperm.xlu0 %1088, %v850
        %v1090 = vpop.permute.xlu0 %1089
        %1092 = vset.pattern.permute.xlu0 5
        %1093 = vperm.xlu0 %1092, %v851
        %v1094 = vpop.permute.xlu0 %1093
        %v1096 = vmul.f32 %v1086, %v1090
        %v1097 = vmul.f32 %v1087, %v1094
        %v1098 = vsel %vm464, %v1096, 0.0
        %v1099 = vsel %vm464, %v1097, 0.0
        %v1100 = vadd.f32 %v1098, %v1099
        %v1101 = vrot.slane %v1100, 4
        %v1102 = vadd.f32 %v1100, %v1101
        %v1103 = vrot.slane %v1102, 2
        %v1104 = vadd.f32 %v1102, %v1103
        %v1105 = vrot.slane %v1104, 1
        %v1106 = vadd.f32 %v1104, %v1105
        %s1107 = scalar_lea.vmem [#allocation7], 96
        %v1108 = vld [vmem:[%s1107] sm:$0xff]
        %v1109 = vld [vmem:[%s1107 + $0x8] sm:$0xff]
        %v1110 = vmul.f32 %v1108, %v1086
        %v1111 = vmul.f32 %v1109, %v1087
        %1112 = vset.pattern.permute.xlu0 6
        %1113 = vperm.xlu0 %1112, %v848
        %v1114 = vpop.permute.xlu0 %1113
        %1116 = vset.pattern.permute.xlu0 6
        %1117 = vperm.xlu0 %1116, %v849
        %v1118 = vpop.permute.xlu0 %1117
        %v1120 = vlaneseq
        %v1121 = vshrl.u32 %v1120, 7
        %v1122 = vsub.s32 6, %v1121
        %v1123 = vrot.slane %v676, %v1122
        %v1124 = vmul.f32 %v1114, %v1123
        %v1125 = vmul.f32 %v1118, %v1123
        %v1126 = vadd.f32 %v1110, %v1124
        %v1127 = vadd.f32 %v1111, %v1125
        %1128 = vset.pattern.permute.xlu0 6
        %1129 = vperm.xlu0 %1128, %v850
        %v1130 = vpop.permute.xlu0 %1129
        %1132 = vset.pattern.permute.xlu0 6
        %1133 = vperm.xlu0 %1132, %v851
        %v1134 = vpop.permute.xlu0 %1133
        %v1136 = vmul.f32 %v1126, %v1130
        %v1137 = vmul.f32 %v1127, %v1134
        %v1138 = vsel %vm464, %v1136, 0.0
        %v1139 = vsel %vm464, %v1137, 0.0
        %v1140 = vadd.f32 %v1138, %v1139
        %v1141 = vrot.slane %v1140, 4
        %v1142 = vadd.f32 %v1140, %v1141
        %v1143 = vrot.slane %v1142, 2
        %v1144 = vadd.f32 %v1142, %v1143
        %v1145 = vrot.slane %v1144, 1
        %v1146 = vadd.f32 %v1144, %v1145
        %s1147 = scalar_lea.vmem [#allocation7], 112
        %v1148 = vld [vmem:[%s1147] sm:$0xff]
        %v1149 = vld [vmem:[%s1147 + $0x8] sm:$0xff]
        %v1150 = vmul.f32 %v1148, %v1126
        %v1151 = vmul.f32 %v1149, %v1127
        %1152 = vset.pattern.permute.xlu0 7
        %1153 = vperm.xlu0 %1152, %v848
        %v1154 = vpop.permute.xlu0 %1153
        %1156 = vset.pattern.permute.xlu0 7
        %1157 = vperm.xlu0 %1156, %v849
        %v1158 = vpop.permute.xlu0 %1157
        %v1160 = vlaneseq
        %v1161 = vshrl.u32 %v1160, 7
        %v1162 = vsub.s32 7, %v1161
        %v1163 = vrot.slane %v676, %v1162
        %v1164 = vmul.f32 %v1154, %v1163
        %v1165 = vmul.f32 %v1158, %v1163
        %v1166 = vadd.f32 %v1150, %v1164
        %v1167 = vadd.f32 %v1151, %v1165
        %1168 = vset.pattern.permute.xlu0 7
        %1169 = vperm.xlu0 %1168, %v850
        %v1170 = vpop.permute.xlu0 %1169
        %1172 = vset.pattern.permute.xlu0 7
        %1173 = vperm.xlu0 %1172, %v851
        %v1174 = vpop.permute.xlu0 %1173
        %v1176 = vmul.f32 %v1166, %v1170
        %v1177 = vmul.f32 %v1167, %v1174
        %v1178 = vsel %vm464, %v1176, 0.0
        %v1179 = vsel %vm464, %v1177, 0.0
        %v1180 = vadd.f32 %v1178, %v1179
        %v1181 = vrot.slane %v1180, 4
        %v1182 = vadd.f32 %v1180, %v1181
        %v1183 = vrot.slane %v1182, 2
        %v1184 = vadd.f32 %v1182, %v1183
        %v1185 = vrot.slane %v1184, 1
        %v1186 = vadd.f32 %v1184, %v1185
        %vm1187 = vcmask 1040384
        %v1188 = vsel %vm1187, %v906, %v946
        %v1189 = vsel %vm606, %v1188, %v986
        %vm1190 = vcmask 1042432
        %v1191 = vsel %vm1190, %v1189, %v1026
        %vm1192 = vcmask 1043456
        %v1193 = vsel %vm1192, %v1191, %v1066
        %vm1194 = vcmask 1044480
        %v1195 = vsel %vm1194, %v1193, %v1106
        %vm1196 = vcmask 1045504
        %v1197 = vsel %vm1196, %v1195, %v1146
        %vm1198 = vcmask 1046528
        %v1199 = vsel %vm1198, %v1197, %v1186
        %1200 = vst.msk [vmem:[#allocation4] sm:$0xff] %vm464, %v1199
        %1201 = vst.msk [vmem:[#allocation8] sm:$0xff] %vm464, %v1166
        %1202 = vst.msk [vmem:[#allocation8 + $0x8] sm:$0xff] %vm464, %v1167
        %v1203 = vld [vmem:[#allocation4] sm:$0xff]
        %v1204 = vld [vmem:[#allocation2] sm:$0xff]
        %v1205 = vld [vmem:[%s8] sm:$0x1]
        %v1207 = vlaneseq
        %v1208 = vshrl.u32 %v1207, 7
        %v1209 = vsub.s32 0, %v1208
        %v1210 = vrot.slane %v1205, %v1209
        %v1212 = vmul.f32 %v1204, %v1210
        %v1213 = vadd.f32 %v1203, %v1212
        %v1214 = vld [vmem:[#allocation5] sm:$0xff]
        %v1215 = vmul.f32 %v1213, %v1214
        %v1216 = vpack.c.bf16 %v1215, %v1215
        %v1217 = vld [vmem:[%s9] sm:$0xf]
        %v1218 = vld [vmem:[%s9 + $0x4] sm:$0xf]
        %v1219 = vld [vmem:[%s9 + $0x8] sm:$0xf]
        %v1220 = vld [vmem:[%s9 + $0xc] sm:$0xf]
        %v1221 = vld [vmem:[%s9 + $0x10] sm:$0xf]
        %v1222 = vld [vmem:[%s9 + $0x14] sm:$0xf]
        %v1223 = vld [vmem:[%s9 + $0x18] sm:$0xf]
        %v1224 = vld [vmem:[%s9 + $0x1c] sm:$0xf]
        %v1233 = vunpack.c.l.b16 %v1217
        %v1234 = vunpack.c.l.b16 %v1218
        %v1235 = vunpack.c.l.b16 %v1219
        %v1236 = vunpack.c.l.b16 %v1220
        %v1237 = vunpack.c.l.b16 %v1221
        %v1238 = vunpack.c.l.b16 %v1222
        %v1239 = vunpack.c.l.b16 %v1223
        %v1240 = vunpack.c.l.b16 %v1224
        %v1241 = vpack.c.b16 %v1234, %v1233
        %v1242 = vpack.c.b16 %v1236, %v1235
        %v1243 = vpack.c.b16 %v1238, %v1237
        %v1244 = vpack.c.b16 %v1240, %v1239
        %v1250 = vsel %vm464, %v1216, 0
        %1252 = vmatprep.subr.bf16.mxu0 0
        %1253 = vmatpush1.bf16.msra.mxu0 0
        %1254 = vmatprep.subr.bf16.mxu0 0
        %1255 = vmatpush1.bf16.msra.mxu0 0
        %1256 = vmatprep.subr.bf16.mxu0 0
        %1257 = vmatpush1.bf16.msra.mxu0 0
        %1258 = vmatprep.subr.bf16.mxu0 0
        %1259 = vmatpush1.bf16.msra.mxu0 0
        %1260 = vmatprep.subr.bf16.mxu0 0
        %1261 = vmatpush1.bf16.msra.mxu0 %v1244
        %1262 = vmatprep.subr.bf16.mxu0 0
        %1263 = vmatpush1.bf16.msra.mxu0 %v1243
        %1264 = vmatprep.subr.bf16.mxu0 0
        %1265 = vmatpush1.bf16.msra.mxu0 %v1242
        %1266 = vmatprep.subr.bf16.mxu0 0
        %1267 = vmatpush1.bf16.msra.mxu0 %v1241
        %1268 = vmatprep.subr.bf16.mxu0 0
        %1269 = vmatpush2.bf16.msra.mxu0 0
        %1270 = vmatprep.subr.bf16.mxu0 0
        %1271 = vmatpush2.bf16.msra.mxu0 0
        %1272 = vmatprep.subr.bf16.mxu0 0
        %1273 = vmatpush2.bf16.msra.mxu0 0
        %1274 = vmatprep.subr.bf16.mxu0 0
        %1275 = vmatpush2.bf16.msra.mxu0 0
        %1276 = vmatprep.subr.bf16.mxu0 0
        %1277 = vmatpush2.bf16.msra.mxu0 0
        %1278 = vmatprep.subr.bf16.mxu0 0
        %1279 = vmatpush2.bf16.msra.mxu0 0
        %1280 = vmatprep.subr.bf16.mxu0 0
        %1281 = vmatpush2.bf16.msra.mxu0 0
        %1282 = vmatprep.subr.bf16.mxu0 0
        %1283 = vmatpush2.bf16.msra.mxu0 0
        %1284 = vmatprep.mubr.bf16.mxu0 0
        %1285 = vmatmul.mubr.bf16.gmra.mxu0 %v1250
        %v1286 = vpop.f32.mrf.mxu0
        %v1287 = vadd.f32 0.0, %v1286
        %v1288 = vpop.f32.mrf.mxu0
        %v1289 = vpop.f32.mrf.mxu0
        %v1290 = vpop.f32.mrf.mxu0
        %1291 = vdwg.mxu0
        %1292 = vst.msk [vmem:[%s372] sm:$0xff] %vm409, %v1287
        %s1293 = sand.u32 %s263, 1
        %s1294 = scalar_lea.sflag [#allocation11], %s1293
        %s1295 = sand.u32 %s263, 1
        %s1296 = smul.addr %s1295, 8
        %s1297 = scalar_lea.vmem [#allocation10], %s1296
        // Predicated region
        $region65: #{tpu_custom_call.1} parent=59 // pred_check
          %p1298 = pneg %p273
        $region66: #{tpu_custom_call.1} parent=59 // pred_check_branch
          %1300 = sbr.rel (%p1298) target = $region68
        $region67: #{tpu_custom_call.1} parent=59 // pred_region
          %s1302 = ssub.s32 128, 128
          %1303 = vsyncadd %s1294, %s1302
          %s1304 = sadd.s32 %s29, %s28
          %s1305 = smul.addr %s1304, 128
          %s1306 = scalar_lea.hbm %s10, %s1305
          %s1308 = sshll.u32 %s1297, 4
          %s1309 = int_to_ptr.vmem [resolvable:$true] %s1308
          %1311 = dma.vmem_to_hbm [thread:$0]  %s1309, 128, %s1306, %s1294
        $region68: #{tpu_custom_call.1} parent=59 // pred_fallthru
          _
      $region60: #{tpu_custom_call.1} parent=5 // pred_fallthru
        _
      %p1312 = scmp.le.s32.totalorder 2, %s19
      // Predicated region
      $region69: #{tpu_custom_call.1} parent=5 // pred_check
        %p1313 = pneg %p1312
      $region70: #{tpu_custom_call.1} parent=5 // pred_check_branch
        %1315 = sbr.rel (%p1313) target = $region72
      $region71: #{tpu_custom_call.1} parent=5 // pred_region
        %s1316 = ssub.s32 %s19, 2
        // Predicated region
        $region73: #{tpu_custom_call.1} parent=71 // pred_check
          %p1317 = pneg %p279
        $region74: #{tpu_custom_call.1} parent=71 // pred_check_branch
          %1319 = sbr.rel (%p1317) target = $region76
        $region75: #{tpu_custom_call.1} parent=71 // pred_region
          %s1320 = sand.u32 %s264, 1
          %s1321 = scalar_lea.sflag [#allocation11], %s1320
          %s1322 = sand.u32 %s264, 1
          %s1323 = smul.addr %s1322, 8
          %s1324 = scalar_lea.vmem [#allocation10], %s1323
          %1325 = dma.done %s1321, 128
        $region76: #{tpu_custom_call.1} parent=71 // pred_fallthru
          _
      $region72: #{tpu_custom_call.1} parent=5 // pred_fallthru
        _
    $region6: #{tpu_custom_call.1} parent=1 // loop_footer
      %s23 = sadd.s32 1, %s19
    $region7: #{tpu_custom_call.1} parent=1 // loop_footer_branch
      %18 = sbr.rel target = $region3
    $region8: #{tpu_custom_call.1} parent=1 // loop_exit
      _
    %1326 = vsyncpa [#allocation11], 1
    %s1327 = scalar_lea.sflag [#allocation11], 1
    %1328 = vsyncpa %s1327, 1

</llo_original>
